<compile_context>
chip_gen: v7x
topology: tpu7x:2x2x1
jax: 0.10.0
libtpu: 0.0.40
codegen_flags: <defaults>
</compile_context>

<pallas_src>
import math

import jax
import jax.numpy as jnp
from jax import lax
from jax.experimental import pallas as pl
from jax.experimental.pallas import tpu as pltpu

LN_EPS = 1e-6
NEG_INF = -1e9

# head-type ids, in `heads_distribution` order
TOKEN, STATEMENT, DATA_FLOW, CONTROL_FLOW, STANDARD = range(5)
NUM_BIAS_TYPES = 4  # STANDARD heads use a zero bias -> no slab is loaded


def _vmem_limit_bytes(S, D, H, d_ff, wbytes):
    """Explicit scoped-VMEM budget (double-buffered blocks + scratch) + headroom."""
    f32 = 4
    per_step_in = S * D * f32 + NUM_BIAS_TYPES * S * S * 2 + S * f32
    weights = (4 * D * D + 2 * D * d_ff) * wbytes + (8 * D + d_ff) * f32
    per_step_out = S * D * f32 + H * S * S * f32
    scratch = S * D * wbytes
    est = 2 * (per_step_in + per_step_out + weights) + scratch
    # floor 32 MiB (>= defaults, > v5e's 16 MiB), cap 48 MiB (< v7x physical 64 MiB)
    return int(min(48 << 20, max(32 << 20, 2 * est)))


# --------------------------- fused encoder layer -----------------------------

def encoder_layer_forward(params, x, token, statement, data_flow, control_flow,
                          zero_matrix, heads_distribution,
                          hyperparameter_data_flow, hyperparameter_control_flow,
                          mask, *, use_bf16_matmul=True):
    """One fused pallas_call per layer, grid over the batch dimension."""
    del zero_matrix  # STANDARD heads add a zero bias -> identity, never loaded

    B, S, D = x.shape
    H = int(sum(heads_distribution))
    assert D % H == 0, f"d_model={D} must be divisible by num_heads={H}"
    dk = D // H
    d_ff = params["W1"].shape[1]
    head_type = [t for t, n in enumerate(heads_distribution) for _ in range(int(n))]
    scale = 1.0 / math.sqrt(dk)

    wdt = jnp.bfloat16 if use_bf16_matmul else jnp.float32
    # TODO(synk): on v7x consider fp8 weights (~2x MXU) if accuracy tolerates it.

    # ---- hoisted once (outside the kernel) ----
    # Adjacency biases: pre-scale by the hyperparameters, stack per type, bf16
    # (entries are 0/1 scaled by small ints -> bf16 is exact).
    bias_stack = jnp.stack(
        [token,
         statement,
         hyperparameter_data_flow * data_flow,
         hyperparameter_control_flow * control_flow],
        axis=1).astype(jnp.bfloat16)                       # (B, 4, S, S)

    Wq = params["Wq"].astype(wdt); Wk = params["Wk"].astype(wdt)
    Wv = params["Wv"].astype(wdt); Wo = params["Wo"].astype(wdt)
    W1 = params["W1"].astype(wdt); W2 = params["W2"].astype(wdt)
    bq = params["bq"].reshape(1, D).astype(jnp.float32)
    bk = params["bk"].reshape(1, D).astype(jnp.float32)
    bv = params["bv"].reshape(1, D).astype(jnp.float32)
    bo = params["bo"].reshape(1, D).astype(jnp.float32)
    b1 = params["b1"].reshape(1, d_ff).astype(jnp.float32)
    b2 = params["b2"].reshape(1, D).astype(jnp.float32)
    ln1_g = params["ln1_g"].reshape(1, D).astype(jnp.float32)
    ln1_b = params["ln1_b"].reshape(1, D).astype(jnp.float32)
    ln2_g = params["ln2_g"].reshape(1, D).astype(jnp.float32)
    ln2_b = params["ln2_b"].reshape(1, D).astype(jnp.float32)
    mask2 = mask.reshape(B, 1, S).astype(jnp.float32)

    def kernel(x_ref, bias_ref, mask_ref,
               wq_ref, bq_ref, wk_ref, bk_ref, wv_ref, bv_ref,
               wo_ref, bo_ref, w1_ref, b1_ref, w2_ref, b2_ref,
               g1_ref, be1_ref, g2_ref, be2_ref,
               out_ref, probs_ref, ctx_ref):

        def mdot(a, b):
            return jnp.dot(a, b, preferred_element_type=jnp.float32)

        def mdot_nt(a, b):
            # contract last dims: (m, c) . (n, c) -> (m, n); no explicit k.T
            return lax.dot_general(a, b, (((1,), (1,)), ((), ())),
                                   preferred_element_type=jnp.float32)

        def layer_norm(v, g, be):
            mu = jnp.mean(v, axis=-1, keepdims=True)
            var = jnp.mean(jnp.square(v - mu), axis=-1, keepdims=True)
            return (v - mu) * lax.rsqrt(var + LN_EPS) * g + be

        x_b = x_ref[0]                                     # (S, D) f32

        # ---- sublayer 1: pre-norm -> structure-aware MHA -> residual ----
        h1b = layer_norm(x_b, g1_ref[...], be1_ref[...]).astype(wdt)
        # full-depth (S,D)x(D,D) projections; 1/sqrt(dk) folded into q; bf16
        # casts done ONCE here (not per head).
        q = ((mdot(h1b, wq_ref[...]) + bq_ref[...]) * scale).astype(wdt)
        k = (mdot(h1b, wk_ref[...]) + bk_ref[...]).astype(wdt)
        v = (mdot(h1b, wv_ref[...]) + bv_ref[...]).astype(wdt)

        # additive key-pad mask, computed once per grid step (no per-head select)
        mask_add = jnp.where(mask_ref[0] == 0.0, NEG_INF, 0.0)     # (1, S) f32

        # per-*type* additive attention addend (bf16->f32 cast + mask fold done
        # once per type, shared by all heads of that type)
        addend = {}
        for t in sorted(set(head_type)):
            if t == STANDARD:
                addend[t] = mask_add
            else:
                addend[t] = bias_ref[0, t].astype(jnp.float32) + mask_add

        # heads: each ctx_h lands in its column slot of the (S, D) ctx scratch;
        # the output projection is ONE full-depth matmul after the loop.
        for h in range(H):                                 # static unroll
            lo = h * dk
            qh = q[:, lo:lo + dk]
            kh = k[:, lo:lo + dk]
            vh = v[:, lo:lo + dk]

            s = mdot_nt(qh, kh) + addend[head_type[h]]     # (S, S) f32
            m = jnp.max(s, axis=-1, keepdims=True)
            e = jnp.exp(s - m)
            # exact normalization: returned probabilities sum to 1 (f32)
            p = e * (1.0 / jnp.sum(e, axis=-1, keepdims=True))
            probs_ref[0, h] = p
            ctx_ref[:, lo:lo + dk] = mdot(p.astype(wdt), vh).astype(ctx_ref.dtype)

        attn = mdot(ctx_ref[...], wo_ref[...])             # single (S,D)x(D,D)
        x1 = x_b + attn + bo_ref[...]                      # residual (dropout = id)

        # ---- sublayer 2: pre-norm -> position-wise FFN -> residual ----
        h2 = layer_norm(x1, g2_ref[...], be2_ref[...]).astype(wdt)
        hh = jnp.maximum(mdot(h2, w1_ref[...]) + b1_ref[...], 0.0)   # ReLU, f32
        ff = mdot(hh.astype(wdt), w2_ref[...]) + b2_ref[...]
        out_ref[0] = x1 + ff

    # ---- specs: one batch element per grid step; weights replicated ----
    x_spec = pl.BlockSpec((1, S, D), lambda b: (b, 0, 0))
    bias_spec = pl.BlockSpec((1, NUM_BIAS_TYPES, S, S), lambda b: (b, 0, 0, 0))
    mask_spec = pl.BlockSpec((1, 1, S), lambda b: (b, 0, 0))
    probs_spec = pl.BlockSpec((1, H, S, S), lambda b: (b, 0, 0, 0))
    # TODO(synk): probs is the largest HBM writeback at realistic S; make it
    #             optional (or bf16) if downstream allows.

    def rep2d(a):
        return pl.BlockSpec(a.shape, lambda b: (0, 0))

    in_specs = [x_spec, bias_spec, mask_spec,
                rep2d(Wq), rep2d(bq), rep2d(Wk), rep2d(bk), rep2d(Wv), rep2d(bv),
                rep2d(Wo), rep2d(bo), rep2d(W1), rep2d(b1), rep2d(W2), rep2d(b2),
                rep2d(ln1_g), rep2d(ln1_b), rep2d(ln2_g), rep2d(ln2_b)]

    out, attn_probs = pl.pallas_call(
        kernel,
        out_shape=(jax.ShapeDtypeStruct((B, S, D), jnp.float32),
                   jax.ShapeDtypeStruct((B, H, S, S), jnp.float32)),
        grid=(B,),
        in_specs=in_specs,
        out_specs=(x_spec, probs_spec),
        scratch_shapes=[pltpu.VMEM((S, D), wdt)],          # per-head ctx slots
        compiler_params=pltpu.CompilerParams(
            dimension_semantics=("parallel",),              # megacore over batch
            vmem_limit_bytes=_vmem_limit_bytes(S, D, H, d_ff,
                                               jnp.dtype(wdt).itemsize)),
    )(x, bias_stack, mask2,
      Wq, bq, Wk, bk, Wv, bv, Wo, bo, W1, b1, W2, b2,
      ln1_g, ln1_b, ln2_g, ln2_b)
    return out, attn_probs


# ------------------------------ params ---------------------------------------

def init_params(key, d_model, d_ff):
    ks = jax.random.split(key, 8)
    s = 0.02

    def w(k, shape):
        return s * jax.random.normal(k, shape, dtype=jnp.float32)

    return {
        "Wq": w(ks[0], (d_model, d_model)), "bq": jnp.zeros((d_model,), jnp.float32),
        "Wk": w(ks[1], (d_model, d_model)), "bk": jnp.zeros((d_model,), jnp.float32),
        "Wv": w(ks[2], (d_model, d_model)), "bv": jnp.zeros((d_model,), jnp.float32),
        "Wo": w(ks[3], (d_model, d_model)), "bo": jnp.zeros((d_model,), jnp.float32),
        "W1": w(ks[4], (d_model, d_ff)),    "b1": jnp.zeros((d_ff,), jnp.float32),
        "W2": w(ks[5], (d_ff, d_model)),    "b2": jnp.zeros((d_model,), jnp.float32),
        "ln1_g": jnp.ones((d_model,), jnp.float32),
        "ln1_b": jnp.zeros((d_model,), jnp.float32),
        "ln2_g": jnp.ones((d_model,), jnp.float32),
        "ln2_b": jnp.zeros((d_model,), jnp.float32),
    }


# -------------------------------- main ----------------------------------------

if __name__ == "__main__":
    B, S = 2, 8          # even B -> both v7x TensorCores busy
    d_model, d_ff = 32, 64
    heads_distribution = (2, 2, 1, 1, 2)   # TOKEN, STATEMENT, DATA_FLOW, CONTROL_FLOW, STANDARD
    H = int(sum(heads_distribution))
    hyperparameter_data_flow = 2.0
    hyperparameter_control_flow = 3.0

    key = jax.random.PRNGKey(0)
    k_x, k_t, k_s, k_d, k_c, k_p = jax.random.split(key, 6)

    x = jax.random.normal(k_x, (B, S, d_model), dtype=jnp.float32)
    token = jax.random.bernoulli(k_t, 0.3, (B, S, S)).astype(jnp.float32)
    statement = jax.random.bernoulli(k_s, 0.3, (B, S, S)).astype(jnp.float32)
    data_flow = jax.random.bernoulli(k_d, 0.2, (B, S, S)).astype(jnp.float32)
    control_flow = jax.random.bernoulli(k_c, 0.2, (B, S, S)).astype(jnp.float32)
    zero_matrix = jnp.zeros((B, S, S), dtype=jnp.float32)

    mask = jnp.ones((B, 1, 1, S), dtype=jnp.float32)
    mask = mask.at[1, 0, 0, -2:].set(0.0)   # pad-mask the last 2 positions of batch 1

    params = init_params(k_p, d_model, d_ff)

    @jax.jit
    def run(params, x, token, statement, data_flow, control_flow, zero_matrix, mask):
        return encoder_layer_forward(
            params, x, token, statement, data_flow, control_flow, zero_matrix,
            heads_distribution, hyperparameter_data_flow,
            hyperparameter_control_flow, mask)

    out, attn_probs = run(params, x, token, statement, data_flow, control_flow,
                          zero_matrix, mask)
    out = jax.block_until_ready(out)
    attn_probs = jax.block_until_ready(attn_probs)

    assert out.shape == (B, S, d_model), out.shape
    assert attn_probs.shape == (B, H, S, S), attn_probs.shape
    assert bool(jnp.all(jnp.isfinite(out)))
    assert bool(jnp.all(jnp.isfinite(attn_probs)))
    # softmax rows sum to 1 (exact normalization -> f32-tight tolerance)
    assert bool(jnp.allclose(jnp.sum(attn_probs, axis=-1), 1.0, atol=1e-4))
    # masked key positions of batch 1 receive ~zero attention
    assert bool(jnp.max(attn_probs[1, :, :, -2:]) < 1e-6)

    print("KERNEL_OK")
</pallas_src>

<mosaic_0001>
module attributes {stable_mosaic.version = 11 : i64} {
  func.func @kernel(%arg0: i32, %arg1: memref<1x8x32xf32, #tpu.memory_space<vmem>>, %arg2: memref<1x4x8x8xbf16, #tpu.memory_space<vmem>>, %arg3: memref<1x1x8xf32, #tpu.memory_space<vmem>>, %arg4: memref<32x32xbf16, #tpu.memory_space<vmem>>, %arg5: memref<1x32xf32, #tpu.memory_space<vmem>>, %arg6: memref<32x32xbf16, #tpu.memory_space<vmem>>, %arg7: memref<1x32xf32, #tpu.memory_space<vmem>>, %arg8: memref<32x32xbf16, #tpu.memory_space<vmem>>, %arg9: memref<1x32xf32, #tpu.memory_space<vmem>>, %arg10: memref<32x32xbf16, #tpu.memory_space<vmem>>, %arg11: memref<1x32xf32, #tpu.memory_space<vmem>>, %arg12: memref<32x64xbf16, #tpu.memory_space<vmem>>, %arg13: memref<1x64xf32, #tpu.memory_space<vmem>>, %arg14: memref<64x32xbf16, #tpu.memory_space<vmem>>, %arg15: memref<1x32xf32, #tpu.memory_space<vmem>>, %arg16: memref<1x32xf32, #tpu.memory_space<vmem>>, %arg17: memref<1x32xf32, #tpu.memory_space<vmem>>, %arg18: memref<1x32xf32, #tpu.memory_space<vmem>>, %arg19: memref<1x32xf32, #tpu.memory_space<vmem>>, %arg20: memref<1x8x32xf32, #tpu.memory_space<vmem>>, %arg21: memref<1x8x8x8xf32, #tpu.memory_space<vmem>>, %arg22: memref<8x32xbf16, #tpu.memory_space<vmem>>) attributes {dimension_semantics = [#tpu.dimension_semantics<parallel>], iteration_bounds = array<i64: 2>, scalar_prefetch = 0 : i64, scratch_operands = 1 : i64, tpu.core_type = #tpu.core_type<tc>, window_params = [{transform_indices = @transform_0, window_bounds = array<i64: 1, 8, 32>}, {transform_indices = @transform_1, window_bounds = array<i64: 1, 4, 8, 8>}, {transform_indices = @transform_2, window_bounds = array<i64: 1, 1, 8>}, {pipeline_mode = #tpu.pipeline_mode<synchronous>, transform_indices = @transform_3, window_bounds = array<i64: 32, 32>}, {pipeline_mode = #tpu.pipeline_mode<synchronous>, transform_indices = @transform_4, window_bounds = array<i64: 1, 32>}, {pipeline_mode = #tpu.pipeline_mode<synchronous>, transform_indices = @transform_5, window_bounds = array<i64: 32, 32>}, {pipeline_mode = #tpu.pipeline_mode<synchronous>, transform_indices = @transform_6, window_bounds = array<i64: 1, 32>}, {pipeline_mode = #tpu.pipeline_mode<synchronous>, transform_indices = @transform_7, window_bounds = array<i64: 32, 32>}, {pipeline_mode = #tpu.pipeline_mode<synchronous>, transform_indices = @transform_8, window_bounds = array<i64: 1, 32>}, {pipeline_mode = #tpu.pipeline_mode<synchronous>, transform_indices = @transform_9, window_bounds = array<i64: 32, 32>}, {pipeline_mode = #tpu.pipeline_mode<synchronous>, transform_indices = @transform_10, window_bounds = array<i64: 1, 32>}, {pipeline_mode = #tpu.pipeline_mode<synchronous>, transform_indices = @transform_11, window_bounds = array<i64: 32, 64>}, {pipeline_mode = #tpu.pipeline_mode<synchronous>, transform_indices = @transform_12, window_bounds = array<i64: 1, 64>}, {pipeline_mode = #tpu.pipeline_mode<synchronous>, transform_indices = @transform_13, window_bounds = array<i64: 64, 32>}, {pipeline_mode = #tpu.pipeline_mode<synchronous>, transform_indices = @transform_14, window_bounds = array<i64: 1, 32>}, {pipeline_mode = #tpu.pipeline_mode<synchronous>, transform_indices = @transform_15, window_bounds = array<i64: 1, 32>}, {pipeline_mode = #tpu.pipeline_mode<synchronous>, transform_indices = @transform_16, window_bounds = array<i64: 1, 32>}, {pipeline_mode = #tpu.pipeline_mode<synchronous>, transform_indices = @transform_17, window_bounds = array<i64: 1, 32>}, {pipeline_mode = #tpu.pipeline_mode<synchronous>, transform_indices = @transform_18, window_bounds = array<i64: 1, 32>}, {transform_indices = @transform_19, window_bounds = array<i64: 1, 8, 32>}, {transform_indices = @transform_20, window_bounds = array<i64: 1, 8, 8, 8>}]} {
    %c0 = arith.constant 0 : index
    %c0_0 = arith.constant 0 : index
    %c0_1 = arith.constant 0 : index
    %0 = vector.load %arg1[%c0, %c0_0, %c0_1] : memref<1x8x32xf32, #tpu.memory_space<vmem>>, vector<1x8x32xf32>
    %1 = vector.shape_cast %0 : vector<1x8x32xf32> to vector<8x32xf32>
    %c0_2 = arith.constant 0 : index
    %c0_3 = arith.constant 0 : index
    %2 = vector.load %arg16[%c0_2, %c0_3] : memref<1x32xf32, #tpu.memory_space<vmem>>, vector<1x32xf32>
    %c0_4 = arith.constant 0 : index
    %c0_5 = arith.constant 0 : index
    %3 = vector.load %arg17[%c0_4, %c0_5] : memref<1x32xf32, #tpu.memory_space<vmem>>, vector<1x32xf32>
    %cst = arith.constant dense<0.000000e+00> : vector<8xf32>
    %4 = vector.multi_reduction <add>, %1, %cst [1] : vector<8x32xf32> to vector<8xf32>
    %5 = vector.shape_cast %4 : vector<8xf32> to vector<8x1xf32>
    %cst_6 = arith.constant 3.200000e+01 : f32
    %6 = vector.broadcast %cst_6 : f32 to vector<8x1xf32>
    %7 = arith.divf %5, %6 : vector<8x1xf32>
    %8 = vector.broadcast %7 : vector<8x1xf32> to vector<8x32xf32>
    %9 = arith.subf %1, %8 : vector<8x32xf32>
    %10 = arith.mulf %9, %9 : vector<8x32xf32>
    %cst_7 = arith.constant dense<0.000000e+00> : vector<8xf32>
    %11 = vector.multi_reduction <add>, %10, %cst_7 [1] : vector<8x32xf32> to vector<8xf32>
    %12 = vector.shape_cast %11 : vector<8xf32> to vector<8x1xf32>
    %cst_8 = arith.constant 3.200000e+01 : f32
    %13 = vector.broadcast %cst_8 : f32 to vector<8x1xf32>
    %14 = arith.divf %12, %13 : vector<8x1xf32>
    %15 = vector.broadcast %7 : vector<8x1xf32> to vector<8x32xf32>
    %16 = arith.subf %1, %15 : vector<8x32xf32>
    %cst_9 = arith.constant 9.99999997E-7 : f32
    %17 = vector.broadcast %cst_9 : f32 to vector<8x1xf32>
    %18 = arith.addf %14, %17 : vector<8x1xf32>
    %19 = math.rsqrt %18 : vector<8x1xf32>
    %20 = vector.broadcast %19 : vector<8x1xf32> to vector<8x32xf32>
    %21 = arith.mulf %16, %20 : vector<8x32xf32>
    %22 = vector.broadcast %2 : vector<1x32xf32> to vector<8x32xf32>
    %23 = arith.mulf %21, %22 : vector<8x32xf32>
    %24 = vector.broadcast %3 : vector<1x32xf32> to vector<8x32xf32>
    %25 = arith.addf %23, %24 : vector<8x32xf32>
    %26 = arith.truncf %25 : vector<8x32xf32> to vector<8x32xbf16>
    %c0_10 = arith.constant 0 : index
    %c0_11 = arith.constant 0 : index
    %27 = vector.load %arg4[%c0_10, %c0_11] : memref<32x32xbf16, #tpu.memory_space<vmem>>, vector<32x32xbf16>
    %cst_12 = arith.constant dense<0.000000e+00> : vector<8x32xf32>
    %28 = tpu.matmul %26, %27, %cst_12 {dimension_numbers = #tpu.dot_dimension_numbers<[1], [0], [0], [1], [0, 0, 1, 1], [], []>} : vector<8x32xbf16>, vector<32x32xbf16>, vector<8x32xf32> -> vector<8x32xf32>
    %c0_13 = arith.constant 0 : index
    %c0_14 = arith.constant 0 : index
    %29 = vector.load %arg5[%c0_13, %c0_14] : memref<1x32xf32, #tpu.memory_space<vmem>>, vector<1x32xf32>
    %30 = vector.broadcast %29 : vector<1x32xf32> to vector<8x32xf32>
    %31 = arith.addf %28, %30 : vector<8x32xf32>
    %cst_15 = arith.constant 5.000000e-01 : f32
    %32 = vector.broadcast %cst_15 : f32 to vector<8x32xf32>
    %33 = arith.mulf %31, %32 : vector<8x32xf32>
    %34 = arith.truncf %33 : vector<8x32xf32> to vector<8x32xbf16>
    %c0_16 = arith.constant 0 : index
    %c0_17 = arith.constant 0 : index
    %35 = vector.load %arg6[%c0_16, %c0_17] : memref<32x32xbf16, #tpu.memory_space<vmem>>, vector<32x32xbf16>
    %cst_18 = arith.constant dense<0.000000e+00> : vector<8x32xf32>
    %36 = tpu.matmul %26, %35, %cst_18 {dimension_numbers = #tpu.dot_dimension_numbers<[1], [0], [0], [1], [0, 0, 1, 1], [], []>} : vector<8x32xbf16>, vector<32x32xbf16>, vector<8x32xf32> -> vector<8x32xf32>
    %c0_19 = arith.constant 0 : index
    %c0_20 = arith.constant 0 : index
    %37 = vector.load %arg7[%c0_19, %c0_20] : memref<1x32xf32, #tpu.memory_space<vmem>>, vector<1x32xf32>
    %38 = vector.broadcast %37 : vector<1x32xf32> to vector<8x32xf32>
    %39 = arith.addf %36, %38 : vector<8x32xf32>
    %40 = arith.truncf %39 : vector<8x32xf32> to vector<8x32xbf16>
    %c0_21 = arith.constant 0 : index
    %c0_22 = arith.constant 0 : index
    %41 = vector.load %arg8[%c0_21, %c0_22] : memref<32x32xbf16, #tpu.memory_space<vmem>>, vector<32x32xbf16>
    %cst_23 = arith.constant dense<0.000000e+00> : vector<8x32xf32>
    %42 = tpu.matmul %26, %41, %cst_23 {dimension_numbers = #tpu.dot_dimension_numbers<[1], [0], [0], [1], [0, 0, 1, 1], [], []>} : vector<8x32xbf16>, vector<32x32xbf16>, vector<8x32xf32> -> vector<8x32xf32>
    %c0_24 = arith.constant 0 : index
    %c0_25 = arith.constant 0 : index
    %43 = vector.load %arg9[%c0_24, %c0_25] : memref<1x32xf32, #tpu.memory_space<vmem>>, vector<1x32xf32>
    %44 = vector.broadcast %43 : vector<1x32xf32> to vector<8x32xf32>
    %45 = arith.addf %42, %44 : vector<8x32xf32>
    %46 = arith.truncf %45 : vector<8x32xf32> to vector<8x32xbf16>
    %c0_26 = arith.constant 0 : index
    %c0_27 = arith.constant 0 : index
    %c0_28 = arith.constant 0 : index
    %47 = vector.load %arg3[%c0_26, %c0_27, %c0_28] : memref<1x1x8xf32, #tpu.memory_space<vmem>>, vector<1x1x8xf32>
    %48 = vector.shape_cast %47 : vector<1x1x8xf32> to vector<1x8xf32>
    %cst_29 = arith.constant 0.000000e+00 : f32
    %49 = vector.broadcast %cst_29 : f32 to vector<1x8xf32>
    %50 = arith.cmpf oeq, %48, %49 : vector<1x8xf32>
    %cst_30 = arith.constant -1.000000e+09 : f32
    %cst_31 = arith.constant 0.000000e+00 : f32
    %51 = vector.broadcast %cst_30 : f32 to vector<1x8xf32>
    %52 = vector.broadcast %cst_31 : f32 to vector<1x8xf32>
    %53 = arith.select %50, %51, %52 : vector<1x8xi1>, vector<1x8xf32>
    %c0_32 = arith.constant 0 : index
    %c0_33 = arith.constant 0 : index
    %c0_34 = arith.constant 0 : index
    %c0_35 = arith.constant 0 : index
    %54 = vector.load %arg2[%c0_32, %c0_33, %c0_34, %c0_35] : memref<1x4x8x8xbf16, #tpu.memory_space<vmem>>, vector<1x1x8x8xbf16>
    %55 = vector.shape_cast %54 : vector<1x1x8x8xbf16> to vector<8x8xbf16>
    %56 = arith.extf %55 : vector<8x8xbf16> to vector<8x8xf32>
    %57 = vector.broadcast %53 : vector<1x8xf32> to vector<8x8xf32>
    %58 = arith.addf %56, %57 : vector<8x8xf32>
    %c0_36 = arith.constant 0 : index
    %c1 = arith.constant 1 : index
    %c0_37 = arith.constant 0 : index
    %c0_38 = arith.constant 0 : index
    %59 = vector.load %arg2[%c0_36, %c1, %c0_37, %c0_38] : memref<1x4x8x8xbf16, #tpu.memory_space<vmem>>, vector<1x1x8x8xbf16>
    %60 = vector.shape_cast %59 : vector<1x1x8x8xbf16> to vector<8x8xbf16>
    %61 = arith.extf %60 : vector<8x8xbf16> to vector<8x8xf32>
    %62 = vector.broadcast %53 : vector<1x8xf32> to vector<8x8xf32>
    %63 = arith.addf %61, %62 : vector<8x8xf32>
    %c0_39 = arith.constant 0 : index
    %c2 = arith.constant 2 : index
    %c0_40 = arith.constant 0 : index
    %c0_41 = arith.constant 0 : index
    %64 = vector.load %arg2[%c0_39, %c2, %c0_40, %c0_41] : memref<1x4x8x8xbf16, #tpu.memory_space<vmem>>, vector<1x1x8x8xbf16>
    %65 = vector.shape_cast %64 : vector<1x1x8x8xbf16> to vector<8x8xbf16>
    %66 = arith.extf %65 : vector<8x8xbf16> to vector<8x8xf32>
    %67 = vector.broadcast %53 : vector<1x8xf32> to vector<8x8xf32>
    %68 = arith.addf %66, %67 : vector<8x8xf32>
    %c0_42 = arith.constant 0 : index
    %c3 = arith.constant 3 : index
    %c0_43 = arith.constant 0 : index
    %c0_44 = arith.constant 0 : index
    %69 = vector.load %arg2[%c0_42, %c3, %c0_43, %c0_44] : memref<1x4x8x8xbf16, #tpu.memory_space<vmem>>, vector<1x1x8x8xbf16>
    %70 = vector.shape_cast %69 : vector<1x1x8x8xbf16> to vector<8x8xbf16>
    %71 = arith.extf %70 : vector<8x8xbf16> to vector<8x8xf32>
    %72 = vector.broadcast %53 : vector<1x8xf32> to vector<8x8xf32>
    %73 = arith.addf %71, %72 : vector<8x8xf32>
    %74 = vector.extract_strided_slice %34 {offsets = [0, 0], sizes = [8, 4], strides = [1, 1]} : vector<8x32xbf16> to vector<8x4xbf16>
    %75 = vector.extract_strided_slice %40 {offsets = [0, 0], sizes = [8, 4], strides = [1, 1]} : vector<8x32xbf16> to vector<8x4xbf16>
    %76 = vector.extract_strided_slice %46 {offsets = [0, 0], sizes = [8, 4], strides = [1, 1]} : vector<8x32xbf16> to vector<8x4xbf16>
    %cst_45 = arith.constant dense<0.000000e+00> : vector<8x8xf32>
    %77 = tpu.matmul %74, %75, %cst_45 {dimension_numbers = #tpu.dot_dimension_numbers<[1], [1], [0], [0], [0, 0, 1, 0], [], []>} : vector<8x4xbf16>, vector<8x4xbf16>, vector<8x8xf32> -> vector<8x8xf32>
    %78 = arith.addf %77, %58 : vector<8x8xf32>
    %cst_46 = arith.constant dense<0xFF800000> : vector<8xf32>
    %79 = vector.multi_reduction <maximumf>, %78, %cst_46 [1] : vector<8x8xf32> to vector<8xf32>
    %80 = vector.shape_cast %79 : vector<8xf32> to vector<8x1xf32>
    %81 = vector.broadcast %80 : vector<8x1xf32> to vector<8x8xf32>
    %82 = arith.subf %78, %81 : vector<8x8xf32>
    %83 = math.exp %82 : vector<8x8xf32>
    %cst_47 = arith.constant dense<0.000000e+00> : vector<8xf32>
    %84 = vector.multi_reduction <add>, %83, %cst_47 [1] : vector<8x8xf32> to vector<8xf32>
    %85 = vector.shape_cast %84 : vector<8xf32> to vector<8x1xf32>
    %cst_48 = arith.constant 1.000000e+00 : f32
    %86 = vector.broadcast %cst_48 : f32 to vector<8x1xf32>
    %87 = arith.divf %86, %85 : vector<8x1xf32>
    %88 = vector.broadcast %87 : vector<8x1xf32> to vector<8x8xf32>
    %89 = arith.mulf %83, %88 : vector<8x8xf32>
    %c0_49 = arith.constant 0 : index
    %c0_50 = arith.constant 0 : index
    %c0_51 = arith.constant 0 : index
    %c0_52 = arith.constant 0 : index
    %90 = vector.load %arg21[%c0_49, %c0_50, %c0_51, %c0_52] : memref<1x8x8x8xf32, #tpu.memory_space<vmem>>, vector<1x1x8x8xf32>
    %91 = vector.shape_cast %90 : vector<1x1x8x8xf32> to vector<8x8xf32>
    %92 = vector.shape_cast %89 : vector<8x8xf32> to vector<1x1x8x8xf32>
    tpu.vector_store %arg21[%c0_49, %c0_50, %c0_51, %c0_52], %92 {strides = array<i32>} : memref<1x8x8x8xf32, #tpu.memory_space<vmem>>, vector<1x1x8x8xf32>,
    %93 = arith.truncf %89 : vector<8x8xf32> to vector<8x8xbf16>
    %cst_53 = arith.constant dense<0.000000e+00> : vector<8x4xf32>
    %94 = tpu.matmul %93, %76, %cst_53 {dimension_numbers = #tpu.dot_dimension_numbers<[1], [0], [0], [1], [0, 0, 1, 1], [], []>} : vector<8x8xbf16>, vector<8x4xbf16>, vector<8x4xf32> -> vector<8x4xf32>
    %95 = arith.truncf %94 : vector<8x4xf32> to vector<8x4xbf16>
    %c0_54 = arith.constant 0 : index
    %c0_55 = arith.constant 0 : index
    %96 = vector.load %arg22[%c0_54, %c0_55] : memref<8x32xbf16, #tpu.memory_space<vmem>>, vector<8x4xbf16>
    tpu.vector_store %arg22[%c0_54, %c0_55], %95 {strides = array<i32>} : memref<8x32xbf16, #tpu.memory_space<vmem>>, vector<8x4xbf16>,
    %97 = vector.extract_strided_slice %34 {offsets = [0, 4], sizes = [8, 4], strides = [1, 1]} : vector<8x32xbf16> to vector<8x4xbf16>
    %98 = vector.extract_strided_slice %40 {offsets = [0, 4], sizes = [8, 4], strides = [1, 1]} : vector<8x32xbf16> to vector<8x4xbf16>
    %99 = vector.extract_strided_slice %46 {offsets = [0, 4], sizes = [8, 4], strides = [1, 1]} : vector<8x32xbf16> to vector<8x4xbf16>
    %cst_56 = arith.constant dense<0.000000e+00> : vector<8x8xf32>
    %100 = tpu.matmul %97, %98, %cst_56 {dimension_numbers = #tpu.dot_dimension_numbers<[1], [1], [0], [0], [0, 0, 1, 0], [], []>} : vector<8x4xbf16>, vector<8x4xbf16>, vector<8x8xf32> -> vector<8x8xf32>
    %101 = arith.addf %100, %58 : vector<8x8xf32>
    %cst_57 = arith.constant dense<0xFF800000> : vector<8xf32>
    %102 = vector.multi_reduction <maximumf>, %101, %cst_57 [1] : vector<8x8xf32> to vector<8xf32>
    %103 = vector.shape_cast %102 : vector<8xf32> to vector<8x1xf32>
    %104 = vector.broadcast %103 : vector<8x1xf32> to vector<8x8xf32>
    %105 = arith.subf %101, %104 : vector<8x8xf32>
    %106 = math.exp %105 : vector<8x8xf32>
    %cst_58 = arith.constant dense<0.000000e+00> : vector<8xf32>
    %107 = vector.multi_reduction <add>, %106, %cst_58 [1] : vector<8x8xf32> to vector<8xf32>
    %108 = vector.shape_cast %107 : vector<8xf32> to vector<8x1xf32>
    %cst_59 = arith.constant 1.000000e+00 : f32
    %109 = vector.broadcast %cst_59 : f32 to vector<8x1xf32>
    %110 = arith.divf %109, %108 : vector<8x1xf32>
    %111 = vector.broadcast %110 : vector<8x1xf32> to vector<8x8xf32>
    %112 = arith.mulf %106, %111 : vector<8x8xf32>
    %c0_60 = arith.constant 0 : index
    %c1_61 = arith.constant 1 : index
    %c0_62 = arith.constant 0 : index
    %c0_63 = arith.constant 0 : index
    %113 = vector.load %arg21[%c0_60, %c1_61, %c0_62, %c0_63] : memref<1x8x8x8xf32, #tpu.memory_space<vmem>>, vector<1x1x8x8xf32>
    %114 = vector.shape_cast %113 : vector<1x1x8x8xf32> to vector<8x8xf32>
    %115 = vector.shape_cast %112 : vector<8x8xf32> to vector<1x1x8x8xf32>
    tpu.vector_store %arg21[%c0_60, %c1_61, %c0_62, %c0_63], %115 {strides = array<i32>} : memref<1x8x8x8xf32, #tpu.memory_space<vmem>>, vector<1x1x8x8xf32>,
    %116 = arith.truncf %112 : vector<8x8xf32> to vector<8x8xbf16>
    %cst_64 = arith.constant dense<0.000000e+00> : vector<8x4xf32>
    %117 = tpu.matmul %116, %99, %cst_64 {dimension_numbers = #tpu.dot_dimension_numbers<[1], [0], [0], [1], [0, 0, 1, 1], [], []>} : vector<8x8xbf16>, vector<8x4xbf16>, vector<8x4xf32> -> vector<8x4xf32>
    %118 = arith.truncf %117 : vector<8x4xf32> to vector<8x4xbf16>
    %c0_65 = arith.constant 0 : index
    %c4 = arith.constant 4 : index
    %119 = vector.load %arg22[%c0_65, %c4] : memref<8x32xbf16, #tpu.memory_space<vmem>>, vector<8x4xbf16>
    tpu.vector_store %arg22[%c0_65, %c4], %118 {strides = array<i32>} : memref<8x32xbf16, #tpu.memory_space<vmem>>, vector<8x4xbf16>,
    %120 = vector.extract_strided_slice %34 {offsets = [0, 8], sizes = [8, 4], strides = [1, 1]} : vector<8x32xbf16> to vector<8x4xbf16>
    %121 = vector.extract_strided_slice %40 {offsets = [0, 8], sizes = [8, 4], strides = [1, 1]} : vector<8x32xbf16> to vector<8x4xbf16>
    %122 = vector.extract_strided_slice %46 {offsets = [0, 8], sizes = [8, 4], strides = [1, 1]} : vector<8x32xbf16> to vector<8x4xbf16>
    %cst_66 = arith.constant dense<0.000000e+00> : vector<8x8xf32>
    %123 = tpu.matmul %120, %121, %cst_66 {dimension_numbers = #tpu.dot_dimension_numbers<[1], [1], [0], [0], [0, 0, 1, 0], [], []>} : vector<8x4xbf16>, vector<8x4xbf16>, vector<8x8xf32> -> vector<8x8xf32>
    %124 = arith.addf %123, %63 : vector<8x8xf32>
    %cst_67 = arith.constant dense<0xFF800000> : vector<8xf32>
    %125 = vector.multi_reduction <maximumf>, %124, %cst_67 [1] : vector<8x8xf32> to vector<8xf32>
    %126 = vector.shape_cast %125 : vector<8xf32> to vector<8x1xf32>
    %127 = vector.broadcast %126 : vector<8x1xf32> to vector<8x8xf32>
    %128 = arith.subf %124, %127 : vector<8x8xf32>
    %129 = math.exp %128 : vector<8x8xf32>
    %cst_68 = arith.constant dense<0.000000e+00> : vector<8xf32>
    %130 = vector.multi_reduction <add>, %129, %cst_68 [1] : vector<8x8xf32> to vector<8xf32>
    %131 = vector.shape_cast %130 : vector<8xf32> to vector<8x1xf32>
    %cst_69 = arith.constant 1.000000e+00 : f32
    %132 = vector.broadcast %cst_69 : f32 to vector<8x1xf32>
    %133 = arith.divf %132, %131 : vector<8x1xf32>
    %134 = vector.broadcast %133 : vector<8x1xf32> to vector<8x8xf32>
    %135 = arith.mulf %129, %134 : vector<8x8xf32>
    %c0_70 = arith.constant 0 : index
    %c2_71 = arith.constant 2 : index
    %c0_72 = arith.constant 0 : index
    %c0_73 = arith.constant 0 : index
    %136 = vector.load %arg21[%c0_70, %c2_71, %c0_72, %c0_73] : memref<1x8x8x8xf32, #tpu.memory_space<vmem>>, vector<1x1x8x8xf32>
    %137 = vector.shape_cast %136 : vector<1x1x8x8xf32> to vector<8x8xf32>
    %138 = vector.shape_cast %135 : vector<8x8xf32> to vector<1x1x8x8xf32>
    tpu.vector_store %arg21[%c0_70, %c2_71, %c0_72, %c0_73], %138 {strides = array<i32>} : memref<1x8x8x8xf32, #tpu.memory_space<vmem>>, vector<1x1x8x8xf32>,
    %139 = arith.truncf %135 : vector<8x8xf32> to vector<8x8xbf16>
    %cst_74 = arith.constant dense<0.000000e+00> : vector<8x4xf32>
    %140 = tpu.matmul %139, %122, %cst_74 {dimension_numbers = #tpu.dot_dimension_numbers<[1], [0], [0], [1], [0, 0, 1, 1], [], []>} : vector<8x8xbf16>, vector<8x4xbf16>, vector<8x4xf32> -> vector<8x4xf32>
    %141 = arith.truncf %140 : vector<8x4xf32> to vector<8x4xbf16>
    %c0_75 = arith.constant 0 : index
    %c8 = arith.constant 8 : index
    %142 = vector.load %arg22[%c0_75, %c8] : memref<8x32xbf16, #tpu.memory_space<vmem>>, vector<8x4xbf16>
    tpu.vector_store %arg22[%c0_75, %c8], %141 {strides = array<i32>} : memref<8x32xbf16, #tpu.memory_space<vmem>>, vector<8x4xbf16>,
    %143 = vector.extract_strided_slice %34 {offsets = [0, 12], sizes = [8, 4], strides = [1, 1]} : vector<8x32xbf16> to vector<8x4xbf16>
    %144 = vector.extract_strided_slice %40 {offsets = [0, 12], sizes = [8, 4], strides = [1, 1]} : vector<8x32xbf16> to vector<8x4xbf16>
    %145 = vector.extract_strided_slice %46 {offsets = [0, 12], sizes = [8, 4], strides = [1, 1]} : vector<8x32xbf16> to vector<8x4xbf16>
    %cst_76 = arith.constant dense<0.000000e+00> : vector<8x8xf32>
    %146 = tpu.matmul %143, %144, %cst_76 {dimension_numbers = #tpu.dot_dimension_numbers<[1], [1], [0], [0], [0, 0, 1, 0], [], []>} : vector<8x4xbf16>, vector<8x4xbf16>, vector<8x8xf32> -> vector<8x8xf32>
    %147 = arith.addf %146, %63 : vector<8x8xf32>
    %cst_77 = arith.constant dense<0xFF800000> : vector<8xf32>
    %148 = vector.multi_reduction <maximumf>, %147, %cst_77 [1] : vector<8x8xf32> to vector<8xf32>
    %149 = vector.shape_cast %148 : vector<8xf32> to vector<8x1xf32>
    %150 = vector.broadcast %149 : vector<8x1xf32> to vector<8x8xf32>
    %151 = arith.subf %147, %150 : vector<8x8xf32>
    %152 = math.exp %151 : vector<8x8xf32>
    %cst_78 = arith.constant dense<0.000000e+00> : vector<8xf32>
    %153 = vector.multi_reduction <add>, %152, %cst_78 [1] : vector<8x8xf32> to vector<8xf32>
    %154 = vector.shape_cast %153 : vector<8xf32> to vector<8x1xf32>
    %cst_79 = arith.constant 1.000000e+00 : f32
    %155 = vector.broadcast %cst_79 : f32 to vector<8x1xf32>
    %156 = arith.divf %155, %154 : vector<8x1xf32>
    %157 = vector.broadcast %156 : vector<8x1xf32> to vector<8x8xf32>
    %158 = arith.mulf %152, %157 : vector<8x8xf32>
    %c0_80 = arith.constant 0 : index
    %c3_81 = arith.constant 3 : index
    %c0_82 = arith.constant 0 : index
    %c0_83 = arith.constant 0 : index
    %159 = vector.load %arg21[%c0_80, %c3_81, %c0_82, %c0_83] : memref<1x8x8x8xf32, #tpu.memory_space<vmem>>, vector<1x1x8x8xf32>
    %160 = vector.shape_cast %159 : vector<1x1x8x8xf32> to vector<8x8xf32>
    %161 = vector.shape_cast %158 : vector<8x8xf32> to vector<1x1x8x8xf32>
    tpu.vector_store %arg21[%c0_80, %c3_81, %c0_82, %c0_83], %161 {strides = array<i32>} : memref<1x8x8x8xf32, #tpu.memory_space<vmem>>, vector<1x1x8x8xf32>,
    %162 = arith.truncf %158 : vector<8x8xf32> to vector<8x8xbf16>
    %cst_84 = arith.constant dense<0.000000e+00> : vector<8x4xf32>
    %163 = tpu.matmul %162, %145, %cst_84 {dimension_numbers = #tpu.dot_dimension_numbers<[1], [0], [0], [1], [0, 0, 1, 1], [], []>} : vector<8x8xbf16>, vector<8x4xbf16>, vector<8x4xf32> -> vector<8x4xf32>
    %164 = arith.truncf %163 : vector<8x4xf32> to vector<8x4xbf16>
    %c0_85 = arith.constant 0 : index
    %c12 = arith.constant 12 : index
    %165 = vector.load %arg22[%c0_85, %c12] : memref<8x32xbf16, #tpu.memory_space<vmem>>, vector<8x4xbf16>
    tpu.vector_store %arg22[%c0_85, %c12], %164 {strides = array<i32>} : memref<8x32xbf16, #tpu.memory_space<vmem>>, vector<8x4xbf16>,
    %166 = vector.extract_strided_slice %34 {offsets = [0, 16], sizes = [8, 4], strides = [1, 1]} : vector<8x32xbf16> to vector<8x4xbf16>
    %167 = vector.extract_strided_slice %40 {offsets = [0, 16], sizes = [8, 4], strides = [1, 1]} : vector<8x32xbf16> to vector<8x4xbf16>
    %168 = vector.extract_strided_slice %46 {offsets = [0, 16], sizes = [8, 4], strides = [1, 1]} : vector<8x32xbf16> to vector<8x4xbf16>
    %cst_86 = arith.constant dense<0.000000e+00> : vector<8x8xf32>
    %169 = tpu.matmul %166, %167, %cst_86 {dimension_numbers = #tpu.dot_dimension_numbers<[1], [1], [0], [0], [0, 0, 1, 0], [], []>} : vector<8x4xbf16>, vector<8x4xbf16>, vector<8x8xf32> -> vector<8x8xf32>
    %170 = arith.addf %169, %68 : vector<8x8xf32>
    %cst_87 = arith.constant dense<0xFF800000> : vector<8xf32>
    %171 = vector.multi_reduction <maximumf>, %170, %cst_87 [1] : vector<8x8xf32> to vector<8xf32>
    %172 = vector.shape_cast %171 : vector<8xf32> to vector<8x1xf32>
    %173 = vector.broadcast %172 : vector<8x1xf32> to vector<8x8xf32>
    %174 = arith.subf %170, %173 : vector<8x8xf32>
    %175 = math.exp %174 : vector<8x8xf32>
    %cst_88 = arith.constant dense<0.000000e+00> : vector<8xf32>
    %176 = vector.multi_reduction <add>, %175, %cst_88 [1] : vector<8x8xf32> to vector<8xf32>
    %177 = vector.shape_cast %176 : vector<8xf32> to vector<8x1xf32>
    %cst_89 = arith.constant 1.000000e+00 : f32
    %178 = vector.broadcast %cst_89 : f32 to vector<8x1xf32>
    %179 = arith.divf %178, %177 : vector<8x1xf32>
    %180 = vector.broadcast %179 : vector<8x1xf32> to vector<8x8xf32>
    %181 = arith.mulf %175, %180 : vector<8x8xf32>
    %c0_90 = arith.constant 0 : index
    %c4_91 = arith.constant 4 : index
    %c0_92 = arith.constant 0 : index
    %c0_93 = arith.constant 0 : index
    %182 = vector.load %arg21[%c0_90, %c4_91, %c0_92, %c0_93] : memref<1x8x8x8xf32, #tpu.memory_space<vmem>>, vector<1x1x8x8xf32>
    %183 = vector.shape_cast %182 : vector<1x1x8x8xf32> to vector<8x8xf32>
    %184 = vector.shape_cast %181 : vector<8x8xf32> to vector<1x1x8x8xf32>
    tpu.vector_store %arg21[%c0_90, %c4_91, %c0_92, %c0_93], %184 {strides = array<i32>} : memref<1x8x8x8xf32, #tpu.memory_space<vmem>>, vector<1x1x8x8xf32>,
    %185 = arith.truncf %181 : vector<8x8xf32> to vector<8x8xbf16>
    %cst_94 = arith.constant dense<0.000000e+00> : vector<8x4xf32>
    %186 = tpu.matmul %185, %168, %cst_94 {dimension_numbers = #tpu.dot_dimension_numbers<[1], [0], [0], [1], [0, 0, 1, 1], [], []>} : vector<8x8xbf16>, vector<8x4xbf16>, vector<8x4xf32> -> vector<8x4xf32>
    %187 = arith.truncf %186 : vector<8x4xf32> to vector<8x4xbf16>
    %c0_95 = arith.constant 0 : index
    %c16 = arith.constant 16 : index
    %188 = vector.load %arg22[%c0_95, %c16] : memref<8x32xbf16, #tpu.memory_space<vmem>>, vector<8x4xbf16>
    tpu.vector_store %arg22[%c0_95, %c16], %187 {strides = array<i32>} : memref<8x32xbf16, #tpu.memory_space<vmem>>, vector<8x4xbf16>,
    %189 = vector.extract_strided_slice %34 {offsets = [0, 20], sizes = [8, 4], strides = [1, 1]} : vector<8x32xbf16> to vector<8x4xbf16>
    %190 = vector.extract_strided_slice %40 {offsets = [0, 20], sizes = [8, 4], strides = [1, 1]} : vector<8x32xbf16> to vector<8x4xbf16>
    %191 = vector.extract_strided_slice %46 {offsets = [0, 20], sizes = [8, 4], strides = [1, 1]} : vector<8x32xbf16> to vector<8x4xbf16>
    %cst_96 = arith.constant dense<0.000000e+00> : vector<8x8xf32>
    %192 = tpu.matmul %189, %190, %cst_96 {dimension_numbers = #tpu.dot_dimension_numbers<[1], [1], [0], [0], [0, 0, 1, 0], [], []>} : vector<8x4xbf16>, vector<8x4xbf16>, vector<8x8xf32> -> vector<8x8xf32>
    %193 = arith.addf %192, %73 : vector<8x8xf32>
    %cst_97 = arith.constant dense<0xFF800000> : vector<8xf32>
    %194 = vector.multi_reduction <maximumf>, %193, %cst_97 [1] : vector<8x8xf32> to vector<8xf32>
    %195 = vector.shape_cast %194 : vector<8xf32> to vector<8x1xf32>
    %196 = vector.broadcast %195 : vector<8x1xf32> to vector<8x8xf32>
    %197 = arith.subf %193, %196 : vector<8x8xf32>
    %198 = math.exp %197 : vector<8x8xf32>
    %cst_98 = arith.constant dense<0.000000e+00> : vector<8xf32>
    %199 = vector.multi_reduction <add>, %198, %cst_98 [1] : vector<8x8xf32> to vector<8xf32>
    %200 = vector.shape_cast %199 : vector<8xf32> to vector<8x1xf32>
    %cst_99 = arith.constant 1.000000e+00 : f32
    %201 = vector.broadcast %cst_99 : f32 to vector<8x1xf32>
    %202 = arith.divf %201, %200 : vector<8x1xf32>
    %203 = vector.broadcast %202 : vector<8x1xf32> to vector<8x8xf32>
    %204 = arith.mulf %198, %203 : vector<8x8xf32>
    %c0_100 = arith.constant 0 : index
    %c5 = arith.constant 5 : index
    %c0_101 = arith.constant 0 : index
    %c0_102 = arith.constant 0 : index
    %205 = vector.load %arg21[%c0_100, %c5, %c0_101, %c0_102] : memref<1x8x8x8xf32, #tpu.memory_space<vmem>>, vector<1x1x8x8xf32>
    %206 = vector.shape_cast %205 : vector<1x1x8x8xf32> to vector<8x8xf32>
    %207 = vector.shape_cast %204 : vector<8x8xf32> to vector<1x1x8x8xf32>
    tpu.vector_store %arg21[%c0_100, %c5, %c0_101, %c0_102], %207 {strides = array<i32>} : memref<1x8x8x8xf32, #tpu.memory_space<vmem>>, vector<1x1x8x8xf32>,
    %208 = arith.truncf %204 : vector<8x8xf32> to vector<8x8xbf16>
    %cst_103 = arith.constant dense<0.000000e+00> : vector<8x4xf32>
    %209 = tpu.matmul %208, %191, %cst_103 {dimension_numbers = #tpu.dot_dimension_numbers<[1], [0], [0], [1], [0, 0, 1, 1], [], []>} : vector<8x8xbf16>, vector<8x4xbf16>, vector<8x4xf32> -> vector<8x4xf32>
    %210 = arith.truncf %209 : vector<8x4xf32> to vector<8x4xbf16>
    %c0_104 = arith.constant 0 : index
    %c20 = arith.constant 20 : index
    %211 = vector.load %arg22[%c0_104, %c20] : memref<8x32xbf16, #tpu.memory_space<vmem>>, vector<8x4xbf16>
    tpu.vector_store %arg22[%c0_104, %c20], %210 {strides = array<i32>} : memref<8x32xbf16, #tpu.memory_space<vmem>>, vector<8x4xbf16>,
    %212 = vector.extract_strided_slice %34 {offsets = [0, 24], sizes = [8, 4], strides = [1, 1]} : vector<8x32xbf16> to vector<8x4xbf16>
    %213 = vector.extract_strided_slice %40 {offsets = [0, 24], sizes = [8, 4], strides = [1, 1]} : vector<8x32xbf16> to vector<8x4xbf16>
    %214 = vector.extract_strided_slice %46 {offsets = [0, 24], sizes = [8, 4], strides = [1, 1]} : vector<8x32xbf16> to vector<8x4xbf16>
    %cst_105 = arith.constant dense<0.000000e+00> : vector<8x8xf32>
    %215 = tpu.matmul %212, %213, %cst_105 {dimension_numbers = #tpu.dot_dimension_numbers<[1], [1], [0], [0], [0, 0, 1, 0], [], []>} : vector<8x4xbf16>, vector<8x4xbf16>, vector<8x8xf32> -> vector<8x8xf32>
    %216 = vector.broadcast %53 : vector<1x8xf32> to vector<8x8xf32>
    %217 = arith.addf %215, %216 : vector<8x8xf32>
    %cst_106 = arith.constant dense<0xFF800000> : vector<8xf32>
    %218 = vector.multi_reduction <maximumf>, %217, %cst_106 [1] : vector<8x8xf32> to vector<8xf32>
    %219 = vector.shape_cast %218 : vector<8xf32> to vector<8x1xf32>
    %220 = vector.broadcast %219 : vector<8x1xf32> to vector<8x8xf32>
    %221 = arith.subf %217, %220 : vector<8x8xf32>
    %222 = math.exp %221 : vector<8x8xf32>
    %cst_107 = arith.constant dense<0.000000e+00> : vector<8xf32>
    %223 = vector.multi_reduction <add>, %222, %cst_107 [1] : vector<8x8xf32> to vector<8xf32>
    %224 = vector.shape_cast %223 : vector<8xf32> to vector<8x1xf32>
    %cst_108 = arith.constant 1.000000e+00 : f32
    %225 = vector.broadcast %cst_108 : f32 to vector<8x1xf32>
    %226 = arith.divf %225, %224 : vector<8x1xf32>
    %227 = vector.broadcast %226 : vector<8x1xf32> to vector<8x8xf32>
    %228 = arith.mulf %222, %227 : vector<8x8xf32>
    %c0_109 = arith.constant 0 : index
    %c6 = arith.constant 6 : index
    %c0_110 = arith.constant 0 : index
    %c0_111 = arith.constant 0 : index
    %229 = vector.load %arg21[%c0_109, %c6, %c0_110, %c0_111] : memref<1x8x8x8xf32, #tpu.memory_space<vmem>>, vector<1x1x8x8xf32>
    %230 = vector.shape_cast %229 : vector<1x1x8x8xf32> to vector<8x8xf32>
    %231 = vector.shape_cast %228 : vector<8x8xf32> to vector<1x1x8x8xf32>
    tpu.vector_store %arg21[%c0_109, %c6, %c0_110, %c0_111], %231 {strides = array<i32>} : memref<1x8x8x8xf32, #tpu.memory_space<vmem>>, vector<1x1x8x8xf32>,
    %232 = arith.truncf %228 : vector<8x8xf32> to vector<8x8xbf16>
    %cst_112 = arith.constant dense<0.000000e+00> : vector<8x4xf32>
    %233 = tpu.matmul %232, %214, %cst_112 {dimension_numbers = #tpu.dot_dimension_numbers<[1], [0], [0], [1], [0, 0, 1, 1], [], []>} : vector<8x8xbf16>, vector<8x4xbf16>, vector<8x4xf32> -> vector<8x4xf32>
    %234 = arith.truncf %233 : vector<8x4xf32> to vector<8x4xbf16>
    %c0_113 = arith.constant 0 : index
    %c24 = arith.constant 24 : index
    %235 = vector.load %arg22[%c0_113, %c24] : memref<8x32xbf16, #tpu.memory_space<vmem>>, vector<8x4xbf16>
    tpu.vector_store %arg22[%c0_113, %c24], %234 {strides = array<i32>} : memref<8x32xbf16, #tpu.memory_space<vmem>>, vector<8x4xbf16>,
    %236 = vector.extract_strided_slice %34 {offsets = [0, 28], sizes = [8, 4], strides = [1, 1]} : vector<8x32xbf16> to vector<8x4xbf16>
    %237 = vector.extract_strided_slice %40 {offsets = [0, 28], sizes = [8, 4], strides = [1, 1]} : vector<8x32xbf16> to vector<8x4xbf16>
    %238 = vector.extract_strided_slice %46 {offsets = [0, 28], sizes = [8, 4], strides = [1, 1]} : vector<8x32xbf16> to vector<8x4xbf16>
    %cst_114 = arith.constant dense<0.000000e+00> : vector<8x8xf32>
    %239 = tpu.matmul %236, %237, %cst_114 {dimension_numbers = #tpu.dot_dimension_numbers<[1], [1], [0], [0], [0, 0, 1, 0], [], []>} : vector<8x4xbf16>, vector<8x4xbf16>, vector<8x8xf32> -> vector<8x8xf32>
    %240 = vector.broadcast %53 : vector<1x8xf32> to vector<8x8xf32>
    %241 = arith.addf %239, %240 : vector<8x8xf32>
    %cst_115 = arith.constant dense<0xFF800000> : vector<8xf32>
    %242 = vector.multi_reduction <maximumf>, %241, %cst_115 [1] : vector<8x8xf32> to vector<8xf32>
    %243 = vector.shape_cast %242 : vector<8xf32> to vector<8x1xf32>
    %244 = vector.broadcast %243 : vector<8x1xf32> to vector<8x8xf32>
    %245 = arith.subf %241, %244 : vector<8x8xf32>
    %246 = math.exp %245 : vector<8x8xf32>
    %cst_116 = arith.constant dense<0.000000e+00> : vector<8xf32>
    %247 = vector.multi_reduction <add>, %246, %cst_116 [1] : vector<8x8xf32> to vector<8xf32>
    %248 = vector.shape_cast %247 : vector<8xf32> to vector<8x1xf32>
    %cst_117 = arith.constant 1.000000e+00 : f32
    %249 = vector.broadcast %cst_117 : f32 to vector<8x1xf32>
    %250 = arith.divf %249, %248 : vector<8x1xf32>
    %251 = vector.broadcast %250 : vector<8x1xf32> to vector<8x8xf32>
    %252 = arith.mulf %246, %251 : vector<8x8xf32>
    %c0_118 = arith.constant 0 : index
    %c7 = arith.constant 7 : index
    %c0_119 = arith.constant 0 : index
    %c0_120 = arith.constant 0 : index
    %253 = vector.load %arg21[%c0_118, %c7, %c0_119, %c0_120] : memref<1x8x8x8xf32, #tpu.memory_space<vmem>>, vector<1x1x8x8xf32>
    %254 = vector.shape_cast %253 : vector<1x1x8x8xf32> to vector<8x8xf32>
    %255 = vector.shape_cast %252 : vector<8x8xf32> to vector<1x1x8x8xf32>
    tpu.vector_store %arg21[%c0_118, %c7, %c0_119, %c0_120], %255 {strides = array<i32>} : memref<1x8x8x8xf32, #tpu.memory_space<vmem>>, vector<1x1x8x8xf32>,
    %256 = arith.truncf %252 : vector<8x8xf32> to vector<8x8xbf16>
    %cst_121 = arith.constant dense<0.000000e+00> : vector<8x4xf32>
    %257 = tpu.matmul %256, %238, %cst_121 {dimension_numbers = #tpu.dot_dimension_numbers<[1], [0], [0], [1], [0, 0, 1, 1], [], []>} : vector<8x8xbf16>, vector<8x4xbf16>, vector<8x4xf32> -> vector<8x4xf32>
    %258 = arith.truncf %257 : vector<8x4xf32> to vector<8x4xbf16>
    %c0_122 = arith.constant 0 : index
    %c28 = arith.constant 28 : index
    %259 = vector.load %arg22[%c0_122, %c28] : memref<8x32xbf16, #tpu.memory_space<vmem>>, vector<8x4xbf16>
    tpu.vector_store %arg22[%c0_122, %c28], %258 {strides = array<i32>} : memref<8x32xbf16, #tpu.memory_space<vmem>>, vector<8x4xbf16>,
    %c0_123 = arith.constant 0 : index
    %c0_124 = arith.constant 0 : index
    %260 = vector.load %arg22[%c0_123, %c0_124] : memref<8x32xbf16, #tpu.memory_space<vmem>>, vector<8x32xbf16>
    %c0_125 = arith.constant 0 : index
    %c0_126 = arith.constant 0 : index
    %261 = vector.load %arg10[%c0_125, %c0_126] : memref<32x32xbf16, #tpu.memory_space<vmem>>, vector<32x32xbf16>
    %cst_127 = arith.constant dense<0.000000e+00> : vector<8x32xf32>
    %262 = tpu.matmul %260, %261, %cst_127 {dimension_numbers = #tpu.dot_dimension_numbers<[1], [0], [0], [1], [0, 0, 1, 1], [], []>} : vector<8x32xbf16>, vector<32x32xbf16>, vector<8x32xf32> -> vector<8x32xf32>
    %263 = arith.addf %1, %262 : vector<8x32xf32>
    %c0_128 = arith.constant 0 : index
    %c0_129 = arith.constant 0 : index
    %264 = vector.load %arg11[%c0_128, %c0_129] : memref<1x32xf32, #tpu.memory_space<vmem>>, vector<1x32xf32>
    %265 = vector.broadcast %264 : vector<1x32xf32> to vector<8x32xf32>
    %266 = arith.addf %263, %265 : vector<8x32xf32>
    %c0_130 = arith.constant 0 : index
    %c0_131 = arith.constant 0 : index
    %267 = vector.load %arg18[%c0_130, %c0_131] : memref<1x32xf32, #tpu.memory_space<vmem>>, vector<1x32xf32>
    %c0_132 = arith.constant 0 : index
    %c0_133 = arith.constant 0 : index
    %268 = vector.load %arg19[%c0_132, %c0_133] : memref<1x32xf32, #tpu.memory_space<vmem>>, vector<1x32xf32>
    %cst_134 = arith.constant dense<0.000000e+00> : vector<8xf32>
    %269 = vector.multi_reduction <add>, %266, %cst_134 [1] : vector<8x32xf32> to vector<8xf32>
    %270 = vector.shape_cast %269 : vector<8xf32> to vector<8x1xf32>
    %cst_135 = arith.constant 3.200000e+01 : f32
    %271 = vector.broadcast %cst_135 : f32 to vector<8x1xf32>
    %272 = arith.divf %270, %271 : vector<8x1xf32>
    %273 = vector.broadcast %272 : vector<8x1xf32> to vector<8x32xf32>
    %274 = arith.subf %266, %273 : vector<8x32xf32>
    %275 = arith.mulf %274, %274 : vector<8x32xf32>
    %cst_136 = arith.constant dense<0.000000e+00> : vector<8xf32>
    %276 = vector.multi_reduction <add>, %275, %cst_136 [1] : vector<8x32xf32> to vector<8xf32>
    %277 = vector.shape_cast %276 : vector<8xf32> to vector<8x1xf32>
    %cst_137 = arith.constant 3.200000e+01 : f32
    %278 = vector.broadcast %cst_137 : f32 to vector<8x1xf32>
    %279 = arith.divf %277, %278 : vector<8x1xf32>
    %280 = vector.broadcast %272 : vector<8x1xf32> to vector<8x32xf32>
    %281 = arith.subf %266, %280 : vector<8x32xf32>
    %cst_138 = arith.constant 9.99999997E-7 : f32
    %282 = vector.broadcast %cst_138 : f32 to vector<8x1xf32>
    %283 = arith.addf %279, %282 : vector<8x1xf32>
    %284 = math.rsqrt %283 : vector<8x1xf32>
    %285 = vector.broadcast %284 : vector<8x1xf32> to vector<8x32xf32>
    %286 = arith.mulf %281, %285 : vector<8x32xf32>
    %287 = vector.broadcast %267 : vector<1x32xf32> to vector<8x32xf32>
    %288 = arith.mulf %286, %287 : vector<8x32xf32>
    %289 = vector.broadcast %268 : vector<1x32xf32> to vector<8x32xf32>
    %290 = arith.addf %288, %289 : vector<8x32xf32>
    %291 = arith.truncf %290 : vector<8x32xf32> to vector<8x32xbf16>
    %c0_139 = arith.constant 0 : index
    %c0_140 = arith.constant 0 : index
    %292 = vector.load %arg12[%c0_139, %c0_140] : memref<32x64xbf16, #tpu.memory_space<vmem>>, vector<32x64xbf16>
    %cst_141 = arith.constant dense<0.000000e+00> : vector<8x64xf32>
    %293 = tpu.matmul %291, %292, %cst_141 {dimension_numbers = #tpu.dot_dimension_numbers<[1], [0], [0], [1], [0, 0, 1, 1], [], []>} : vector<8x32xbf16>, vector<32x64xbf16>, vector<8x64xf32> -> vector<8x64xf32>
    %c0_142 = arith.constant 0 : index
    %c0_143 = arith.constant 0 : index
    %294 = vector.load %arg13[%c0_142, %c0_143] : memref<1x64xf32, #tpu.memory_space<vmem>>, vector<1x64xf32>
    %295 = vector.broadcast %294 : vector<1x64xf32> to vector<8x64xf32>
    %296 = arith.addf %293, %295 : vector<8x64xf32>
    %cst_144 = arith.constant 0.000000e+00 : f32
    %297 = vector.broadcast %cst_144 : f32 to vector<8x64xf32>
    %298 = arith.maximumf %296, %297 : vector<8x64xf32>
    %299 = arith.truncf %298 : vector<8x64xf32> to vector<8x64xbf16>
    %c0_145 = arith.constant 0 : index
    %c0_146 = arith.constant 0 : index
    %300 = vector.load %arg14[%c0_145, %c0_146] : memref<64x32xbf16, #tpu.memory_space<vmem>>, vector<64x32xbf16>
    %cst_147 = arith.constant dense<0.000000e+00> : vector<8x32xf32>
    %301 = tpu.matmul %299, %300, %cst_147 {dimension_numbers = #tpu.dot_dimension_numbers<[1], [0], [0], [1], [0, 0, 1, 1], [], []>} : vector<8x64xbf16>, vector<64x32xbf16>, vector<8x32xf32> -> vector<8x32xf32>
    %c0_148 = arith.constant 0 : index
    %c0_149 = arith.constant 0 : index
    %302 = vector.load %arg15[%c0_148, %c0_149] : memref<1x32xf32, #tpu.memory_space<vmem>>, vector<1x32xf32>
    %303 = vector.broadcast %302 : vector<1x32xf32> to vector<8x32xf32>
    %304 = arith.addf %301, %303 : vector<8x32xf32>
    %305 = arith.addf %266, %304 : vector<8x32xf32>
    %c0_150 = arith.constant 0 : index
    %c0_151 = arith.constant 0 : index
    %c0_152 = arith.constant 0 : index
    %306 = vector.load %arg20[%c0_150, %c0_151, %c0_152] : memref<1x8x32xf32, #tpu.memory_space<vmem>>, vector<1x8x32xf32>
    %307 = vector.shape_cast %306 : vector<1x8x32xf32> to vector<8x32xf32>
    %308 = vector.shape_cast %305 : vector<8x32xf32> to vector<1x8x32xf32>
    tpu.vector_store %arg20[%c0_150, %c0_151, %c0_152], %308 {strides = array<i32>} : memref<1x8x32xf32, #tpu.memory_space<vmem>>, vector<1x8x32xf32>,
    return
  }
  func.func @transform_0(%arg0: i32) -> (i32, i32, i32) {
    %c0_i32 = arith.constant 0 : i32
    %c0_i32_0 = arith.constant 0 : i32
    %c0_i32_1 = arith.constant 0 : i32
    return %arg0, %c0_i32, %c0_i32_0 : i32, i32, i32
  }
  func.func @transform_1(%arg0: i32) -> (i32, i32, i32, i32) {
    %c0_i32 = arith.constant 0 : i32
    %c0_i32_0 = arith.constant 0 : i32
    %c0_i32_1 = arith.constant 0 : i32
    %c0_i32_2 = arith.constant 0 : i32
    return %arg0, %c0_i32, %c0_i32_0, %c0_i32_1 : i32, i32, i32, i32
  }
  func.func @transform_2(%arg0: i32) -> (i32, i32, i32) {
    %c0_i32 = arith.constant 0 : i32
    %c0_i32_0 = arith.constant 0 : i32
    %c0_i32_1 = arith.constant 0 : i32
    return %arg0, %c0_i32, %c0_i32_0 : i32, i32, i32
  }
  func.func @transform_3(%arg0: i32) -> (i32, i32) {
    %c0_i32 = arith.constant 0 : i32
    %c0_i32_0 = arith.constant 0 : i32
    %c0_i32_1 = arith.constant 0 : i32
    return %c0_i32, %c0_i32_0 : i32, i32
  }
  func.func @transform_4(%arg0: i32) -> (i32, i32) {
    %c0_i32 = arith.constant 0 : i32
    %c0_i32_0 = arith.constant 0 : i32
    %c0_i32_1 = arith.constant 0 : i32
    return %c0_i32, %c0_i32_0 : i32, i32
  }
  func.func @transform_5(%arg0: i32) -> (i32, i32) {
    %c0_i32 = arith.constant 0 : i32
    %c0_i32_0 = arith.constant 0 : i32
    %c0_i32_1 = arith.constant 0 : i32
    return %c0_i32, %c0_i32_0 : i32, i32
  }
  func.func @transform_6(%arg0: i32) -> (i32, i32) {
    %c0_i32 = arith.constant 0 : i32
    %c0_i32_0 = arith.constant 0 : i32
    %c0_i32_1 = arith.constant 0 : i32
    return %c0_i32, %c0_i32_0 : i32, i32
  }
  func.func @transform_7(%arg0: i32) -> (i32, i32) {
    %c0_i32 = arith.constant 0 : i32
    %c0_i32_0 = arith.constant 0 : i32
    %c0_i32_1 = arith.constant 0 : i32
    return %c0_i32, %c0_i32_0 : i32, i32
  }
  func.func @transform_8(%arg0: i32) -> (i32, i32) {
    %c0_i32 = arith.constant 0 : i32
    %c0_i32_0 = arith.constant 0 : i32
    %c0_i32_1 = arith.constant 0 : i32
    return %c0_i32, %c0_i32_0 : i32, i32
  }
  func.func @transform_9(%arg0: i32) -> (i32, i32) {
    %c0_i32 = arith.constant 0 : i32
    %c0_i32_0 = arith.constant 0 : i32
    %c0_i32_1 = arith.constant 0 : i32
    return %c0_i32, %c0_i32_0 : i32, i32
  }
  func.func @transform_10(%arg0: i32) -> (i32, i32) {
    %c0_i32 = arith.constant 0 : i32
    %c0_i32_0 = arith.constant 0 : i32
    %c0_i32_1 = arith.constant 0 : i32
    return %c0_i32, %c0_i32_0 : i32, i32
  }
  func.func @transform_11(%arg0: i32) -> (i32, i32) {
    %c0_i32 = arith.constant 0 : i32
    %c0_i32_0 = arith.constant 0 : i32
    %c0_i32_1 = arith.constant 0 : i32
    return %c0_i32, %c0_i32_0 : i32, i32
  }
  func.func @transform_12(%arg0: i32) -> (i32, i32) {
    %c0_i32 = arith.constant 0 : i32
    %c0_i32_0 = arith.constant 0 : i32
    %c0_i32_1 = arith.constant 0 : i32
    return %c0_i32, %c0_i32_0 : i32, i32
  }
  func.func @transform_13(%arg0: i32) -> (i32, i32) {
    %c0_i32 = arith.constant 0 : i32
    %c0_i32_0 = arith.constant 0 : i32
    %c0_i32_1 = arith.constant 0 : i32
    return %c0_i32, %c0_i32_0 : i32, i32
  }
  func.func @transform_14(%arg0: i32) -> (i32, i32) {
    %c0_i32 = arith.constant 0 : i32
    %c0_i32_0 = arith.constant 0 : i32
    %c0_i32_1 = arith.constant 0 : i32
    return %c0_i32, %c0_i32_0 : i32, i32
  }
  func.func @transform_15(%arg0: i32) -> (i32, i32) {
    %c0_i32 = arith.constant 0 : i32
    %c0_i32_0 = arith.constant 0 : i32
    %c0_i32_1 = arith.constant 0 : i32
    return %c0_i32, %c0_i32_0 : i32, i32
  }
  func.func @transform_16(%arg0: i32) -> (i32, i32) {
    %c0_i32 = arith.constant 0 : i32
    %c0_i32_0 = arith.constant 0 : i32
    %c0_i32_1 = arith.constant 0 : i32
    return %c0_i32, %c0_i32_0 : i32, i32
  }
  func.func @transform_17(%arg0: i32) -> (i32, i32) {
    %c0_i32 = arith.constant 0 : i32
    %c0_i32_0 = arith.constant 0 : i32
    %c0_i32_1 = arith.constant 0 : i32
    return %c0_i32, %c0_i32_0 : i32, i32
  }
  func.func @transform_18(%arg0: i32) -> (i32, i32) {
    %c0_i32 = arith.constant 0 : i32
    %c0_i32_0 = arith.constant 0 : i32
    %c0_i32_1 = arith.constant 0 : i32
    return %c0_i32, %c0_i32_0 : i32, i32
  }
  func.func @transform_19(%arg0: i32) -> (i32, i32, i32) {
    %c0_i32 = arith.constant 0 : i32
    %c0_i32_0 = arith.constant 0 : i32
    %c0_i32_1 = arith.constant 0 : i32
    return %arg0, %c0_i32, %c0_i32_0 : i32, i32, i32
  }
  func.func @transform_20(%arg0: i32) -> (i32, i32, i32, i32) {
    %c0_i32 = arith.constant 0 : i32
    %c0_i32_0 = arith.constant 0 : i32
    %c0_i32_1 = arith.constant 0 : i32
    %c0_i32_2 = arith.constant 0 : i32
    return %arg0, %c0_i32, %c0_i32_0, %c0_i32_1 : i32, i32, i32, i32
  }
}

</mosaic_0001>

<llo_original>
// kernel: run.1
$region0: #{run.1}
  #allocation0 [shape = 'u32[]', space=smem, size = 0x4, offset = 0x4, fixed_abs, tag = 'smem constant byte address 0x4 - core index']
  #allocation1 [shape = 'u32[144,128]{1,0:T(1,128)}', space=vmem, size = 0x12000, scoped, tag = 'internal scratch']
  #allocation2 [shape = 'bf16[8,32]{1,0:T(8,128)(2,1)}', space=vmem, size = 0x800, scoped, tag = 'scratch operand']
  %s0 = inlined_call_operand.vmem [shape: f32[2,8,32], index: 0, kind: input, shape index: {}]
  %s1 = inlined_call_operand.vmem [shape: bf16[2,4,8,8], index: 1, kind: input, shape index: {}]
  %s2 = inlined_call_operand.vmem [shape: f32[2,1,8], index: 2, kind: input, shape index: {}]
  %s3 = inlined_call_operand.vmem [shape: bf16[32,32], index: 3, kind: input, shape index: {}]
  %s4 = inlined_call_operand.vmem [shape: f32[1,32], index: 4, kind: input, shape index: {}]
  %s5 = inlined_call_operand.vmem [shape: bf16[32,32], index: 5, kind: input, shape index: {}]
  %s6 = inlined_call_operand.vmem [shape: f32[1,32], index: 6, kind: input, shape index: {}]
  %s7 = inlined_call_operand.vmem [shape: bf16[32,32], index: 7, kind: input, shape index: {}]
  %s8 = inlined_call_operand.vmem [shape: f32[1,32], index: 8, kind: input, shape index: {}]
  %s9 = inlined_call_operand.vmem [shape: bf16[32,32], index: 9, kind: input, shape index: {}]
  %s10 = inlined_call_operand.vmem [shape: f32[1,32], index: 10, kind: input, shape index: {}]
  %s11 = inlined_call_operand.vmem [shape: bf16[32,64], index: 11, kind: input, shape index: {}]
  %s12 = inlined_call_operand.vmem [shape: f32[1,64], index: 12, kind: input, shape index: {}]
  %s13 = inlined_call_operand.vmem [shape: bf16[64,32], index: 13, kind: input, shape index: {}]
  %s14 = inlined_call_operand.vmem [shape: f32[1,32], index: 14, kind: input, shape index: {}]
  %s15 = inlined_call_operand.vmem [shape: f32[1,32], index: 15, kind: input, shape index: {}]
  %s16 = inlined_call_operand.vmem [shape: f32[1,32], index: 16, kind: input, shape index: {}]
  %s17 = inlined_call_operand.vmem [shape: f32[1,32], index: 17, kind: input, shape index: {}]
  %s18 = inlined_call_operand.vmem [shape: f32[1,32], index: 18, kind: input, shape index: {}]
  %s19 = inlined_call_operand.hbm [shape: f32[2,8,32], index: 19, kind: output, shape index: {0}]
  %s20 = inlined_call_operand.hbm [shape: f32[2,8,8,8], index: 20, kind: output, shape index: {1}]
  %21 = xla_tuple %s19, %s20
  %s22 = sld [smem:[#allocation0]]
  $region117: #{run.1} parent=0
    _
  %s24 = ssub.s32 1, %s22
  %s25 = scalar_select 0, %s24, %s22
  $region1: #{run.1} parent=0
    #allocation3 [shape = 'u8[8192]{0}', space=vmem, size = 0x2000, scoped, tag = 'output window, operand 0']
    #allocation4 [shape = 's32[2]{0}', space=sflag, size = 0x8, scoped, tag = 'scoped memory for run.1']
    #allocation5 [shape = 'u8[65536]{0}', space=vmem, size = 0x10000, scoped, tag = 'output window, operand 1']
    #allocation6 [shape = 's32[2]{0}', space=sflag, size = 0x8, scoped, tag = 'scoped memory for run.1']
    %26 = vsyncpa [#allocation4], 0
    %s27 = scalar_lea.sflag [#allocation4], 1
    %28 = vsyncpa %s27, 0
    %29 = vsyncpa [#allocation6], 0
    %s30 = scalar_lea.sflag [#allocation6], 1
    %31 = vsyncpa %s30, 0
    loop: start=0, step=1, limit=4
    $region2: #{run.1} parent=1 // loop_pre_header
      _
    $region3: #{run.1} parent=1 // loop_header
      %s33 = sphi 0, %s37
      %p34 = scmp.ge.s32.totalorder %s33, 4
      %s43 = sphi 0, %s45
      %s46 = sphi 0, %s43
      %s47 = sphi 0, %s46
      %s63 = sphi 0, %s47
      %s69 = sphi 0, %s71
      %s72 = sphi 0, %s69
      %s73 = sphi 0, %s72
      %s89 = sphi 0, %s73
      %s95 = sphi 0, %s97
      %s98 = sphi 0, %s95
      %s99 = sphi 0, %s98
      %s115 = sphi 0, %s99
      %s119 = sphi 0, %s119
      %s121 = sphi 0, %s119
      %s122 = sphi 0, %s121
      %s136 = sphi 0, %s122
      %s140 = sphi 0, %s140
      %s142 = sphi 0, %s140
      %s143 = sphi 0, %s142
      %s157 = sphi 0, %s143
      %s161 = sphi 0, %s161
      %s163 = sphi 0, %s161
      %s164 = sphi 0, %s163
      %s178 = sphi 0, %s164
      %s182 = sphi 0, %s182
      %s184 = sphi 0, %s182
      %s185 = sphi 0, %s184
      %s199 = sphi 0, %s185
      %s203 = sphi 0, %s203
      %s205 = sphi 0, %s203
      %s206 = sphi 0, %s205
      %s220 = sphi 0, %s206
      %s224 = sphi 0, %s224
      %s226 = sphi 0, %s224
      %s227 = sphi 0, %s226
      %s241 = sphi 0, %s227
      %s245 = sphi 0, %s245
      %s247 = sphi 0, %s245
      %s248 = sphi 0, %s247
      %s262 = sphi 0, %s248
      %s266 = sphi 0, %s266
      %s268 = sphi 0, %s266
      %s269 = sphi 0, %s268
      %s283 = sphi 0, %s269
      %s287 = sphi 0, %s287
      %s289 = sphi 0, %s287
      %s290 = sphi 0, %s289
      %s304 = sphi 0, %s290
      %s308 = sphi 0, %s308
      %s310 = sphi 0, %s308
      %s311 = sphi 0, %s310
      %s325 = sphi 0, %s311
      %s329 = sphi 0, %s329
      %s331 = sphi 0, %s329
      %s332 = sphi 0, %s331
      %s346 = sphi 0, %s332
      %s350 = sphi 0, %s350
      %s352 = sphi 0, %s350
      %s353 = sphi 0, %s352
      %s367 = sphi 0, %s353
      %s371 = sphi 0, %s371
      %s373 = sphi 0, %s371
      %s374 = sphi 0, %s373
      %s388 = sphi 0, %s374
      %s392 = sphi 0, %s392
      %s394 = sphi 0, %s392
      %s395 = sphi 0, %s394
      %s409 = sphi 0, %s395
      %s413 = sphi 0, %s413
      %s415 = sphi 0, %s413
      %s416 = sphi 0, %s415
      %s430 = sphi 0, %s416
      %s434 = sphi 0, %s434
      %s436 = sphi 0, %s434
      %s437 = sphi 0, %s436
      %s451 = sphi 0, %s437
      %s457 = sphi 0, %s459
      %s460 = sphi 0, %s457
      %s461 = sphi 0, %s460
      %s477 = sphi 0, %s461
      %s483 = sphi 0, %s485
      %s486 = sphi 0, %s483
      %s487 = sphi 0, %s486
      %s503 = sphi 0, %s487
    $region4: #{run.1} parent=1 // loop_header_branch
      %36 = sbr.rel (%p34) target = $region8
    $region5: #{run.1} parent=1 // loop_body
      %s38 = ssub.s32 %s33, 1
      %s39 = ssub.s32 %s33, 2
      %s40 = sadd.s32 %s33, 1
      %s41 = ssub.s32 %s33, %s40
      %p42 = scmp.eq.s32.totalorder %s41, 0
      %s44 = sadd.s32 %s43, 1
      %s45 = scalar_select %p42, %s43, %s44
      %p48 = pneg %p42
      %p49 = scmp.eq.s32.totalorder %s33, 1
      %p50 = por %p48, %p49
      %p51 = scmp.ne.s32.totalorder %s43, %s46
      %p52 = scmp.eq.s32.totalorder %s33, 0
      %p53 = por %p51, %p52
      %p54 = scmp.ne.s32.totalorder %s43, %s46
      %p55 = scmp.eq.s32.totalorder %s38, 1
      %p56 = por %p54, %p55
      %p57 = scmp.ne.s32.totalorder %s46, %s47
      %p58 = scmp.eq.s32.totalorder %s38, 0
      %p59 = por %p57, %p58
      %p60 = scmp.ne.s32.totalorder %s46, %s47
      %p61 = scmp.eq.s32.totalorder %s39, 1
      %p62 = por %p60, %p61
      %p64 = scmp.ne.s32.totalorder %s47, %s63
      %p65 = scmp.eq.s32.totalorder %s39, 0
      %p66 = por %p64, %p65
      %s67 = ssub.s32 %s33, %s40
      %p68 = scmp.eq.s32.totalorder %s67, 0
      %s70 = sadd.s32 %s69, 1
      %s71 = scalar_select %p68, %s69, %s70
      %p74 = pneg %p68
      %p75 = scmp.eq.s32.totalorder %s33, 1
      %p76 = por %p74, %p75
      %p77 = scmp.ne.s32.totalorder %s69, %s72
      %p78 = scmp.eq.s32.totalorder %s33, 0
      %p79 = por %p77, %p78
      %p80 = scmp.ne.s32.totalorder %s69, %s72
      %p81 = scmp.eq.s32.totalorder %s38, 1
      %p82 = por %p80, %p81
      %p83 = scmp.ne.s32.totalorder %s72, %s73
      %p84 = scmp.eq.s32.totalorder %s38, 0
      %p85 = por %p83, %p84
      %p86 = scmp.ne.s32.totalorder %s72, %s73
      %p87 = scmp.eq.s32.totalorder %s39, 1
      %p88 = por %p86, %p87
      %p90 = scmp.ne.s32.totalorder %s73, %s89
      %p91 = scmp.eq.s32.totalorder %s39, 0
      %p92 = por %p90, %p91
      %s93 = ssub.s32 %s33, %s40
      %p94 = scmp.eq.s32.totalorder %s93, 0
      %s96 = sadd.s32 %s95, 1
      %s97 = scalar_select %p94, %s95, %s96
      %p100 = pneg %p94
      %p101 = scmp.eq.s32.totalorder %s33, 1
      %p102 = por %p100, %p101
      %p103 = scmp.ne.s32.totalorder %s95, %s98
      %p104 = scmp.eq.s32.totalorder %s33, 0
      %p105 = por %p103, %p104
      %p106 = scmp.ne.s32.totalorder %s95, %s98
      %p107 = scmp.eq.s32.totalorder %s38, 1
      %p108 = por %p106, %p107
      %p109 = scmp.ne.s32.totalorder %s98, %s99
      %p110 = scmp.eq.s32.totalorder %s38, 0
      %p111 = por %p109, %p110
      %p112 = scmp.ne.s32.totalorder %s98, %s99
      %p113 = scmp.eq.s32.totalorder %s39, 1
      %p114 = por %p112, %p113
      %p116 = scmp.ne.s32.totalorder %s99, %s115
      %p117 = scmp.eq.s32.totalorder %s39, 0
      %p118 = por %p116, %p117
      %s120 = sadd.s32 %s119, 1
      %p123 = scmp.eq.s32.totalorder %s33, 1
      %p124 = scmp.ne.s32.totalorder %s119, %s121
      %p125 = scmp.eq.s32.totalorder %s33, 0
      %p126 = por %p124, %p125
      %p127 = scmp.ne.s32.totalorder %s119, %s121
      %p128 = scmp.eq.s32.totalorder %s38, 1
      %p129 = por %p127, %p128
      %p130 = scmp.ne.s32.totalorder %s121, %s122
      %p131 = scmp.eq.s32.totalorder %s38, 0
      %p132 = por %p130, %p131
      %p133 = scmp.ne.s32.totalorder %s121, %s122
      %p134 = scmp.eq.s32.totalorder %s39, 1
      %p135 = por %p133, %p134
      %p137 = scmp.ne.s32.totalorder %s122, %s136
      %p138 = scmp.eq.s32.totalorder %s39, 0
      %p139 = por %p137, %p138
      %s141 = sadd.s32 %s140, 1
      %p144 = scmp.eq.s32.totalorder %s33, 1
      %p145 = scmp.ne.s32.totalorder %s140, %s142
      %p146 = scmp.eq.s32.totalorder %s33, 0
      %p147 = por %p145, %p146
      %p148 = scmp.ne.s32.totalorder %s140, %s142
      %p149 = scmp.eq.s32.totalorder %s38, 1
      %p150 = por %p148, %p149
      %p151 = scmp.ne.s32.totalorder %s142, %s143
      %p152 = scmp.eq.s32.totalorder %s38, 0
      %p153 = por %p151, %p152
      %p154 = scmp.ne.s32.totalorder %s142, %s143
      %p155 = scmp.eq.s32.totalorder %s39, 1
      %p156 = por %p154, %p155
      %p158 = scmp.ne.s32.totalorder %s143, %s157
      %p159 = scmp.eq.s32.totalorder %s39, 0
      %p160 = por %p158, %p159
      %s162 = sadd.s32 %s161, 1
      %p165 = scmp.eq.s32.totalorder %s33, 1
      %p166 = scmp.ne.s32.totalorder %s161, %s163
      %p167 = scmp.eq.s32.totalorder %s33, 0
      %p168 = por %p166, %p167
      %p169 = scmp.ne.s32.totalorder %s161, %s163
      %p170 = scmp.eq.s32.totalorder %s38, 1
      %p171 = por %p169, %p170
      %p172 = scmp.ne.s32.totalorder %s163, %s164
      %p173 = scmp.eq.s32.totalorder %s38, 0
      %p174 = por %p172, %p173
      %p175 = scmp.ne.s32.totalorder %s163, %s164
      %p176 = scmp.eq.s32.totalorder %s39, 1
      %p177 = por %p175, %p176
      %p179 = scmp.ne.s32.totalorder %s164, %s178
      %p180 = scmp.eq.s32.totalorder %s39, 0
      %p181 = por %p179, %p180
      %s183 = sadd.s32 %s182, 1
      %p186 = scmp.eq.s32.totalorder %s33, 1
      %p187 = scmp.ne.s32.totalorder %s182, %s184
      %p188 = scmp.eq.s32.totalorder %s33, 0
      %p189 = por %p187, %p188
      %p190 = scmp.ne.s32.totalorder %s182, %s184
      %p191 = scmp.eq.s32.totalorder %s38, 1
      %p192 = por %p190, %p191
      %p193 = scmp.ne.s32.totalorder %s184, %s185
      %p194 = scmp.eq.s32.totalorder %s38, 0
      %p195 = por %p193, %p194
      %p196 = scmp.ne.s32.totalorder %s184, %s185
      %p197 = scmp.eq.s32.totalorder %s39, 1
      %p198 = por %p196, %p197
      %p200 = scmp.ne.s32.totalorder %s185, %s199
      %p201 = scmp.eq.s32.totalorder %s39, 0
      %p202 = por %p200, %p201
      %s204 = sadd.s32 %s203, 1
      %p207 = scmp.eq.s32.totalorder %s33, 1
      %p208 = scmp.ne.s32.totalorder %s203, %s205
      %p209 = scmp.eq.s32.totalorder %s33, 0
      %p210 = por %p208, %p209
      %p211 = scmp.ne.s32.totalorder %s203, %s205
      %p212 = scmp.eq.s32.totalorder %s38, 1
      %p213 = por %p211, %p212
      %p214 = scmp.ne.s32.totalorder %s205, %s206
      %p215 = scmp.eq.s32.totalorder %s38, 0
      %p216 = por %p214, %p215
      %p217 = scmp.ne.s32.totalorder %s205, %s206
      %p218 = scmp.eq.s32.totalorder %s39, 1
      %p219 = por %p217, %p218
      %p221 = scmp.ne.s32.totalorder %s206, %s220
      %p222 = scmp.eq.s32.totalorder %s39, 0
      %p223 = por %p221, %p222
      %s225 = sadd.s32 %s224, 1
      %p228 = scmp.eq.s32.totalorder %s33, 1
      %p229 = scmp.ne.s32.totalorder %s224, %s226
      %p230 = scmp.eq.s32.totalorder %s33, 0
      %p231 = por %p229, %p230
      %p232 = scmp.ne.s32.totalorder %s224, %s226
      %p233 = scmp.eq.s32.totalorder %s38, 1
      %p234 = por %p232, %p233
      %p235 = scmp.ne.s32.totalorder %s226, %s227
      %p236 = scmp.eq.s32.totalorder %s38, 0
      %p237 = por %p235, %p236
      %p238 = scmp.ne.s32.totalorder %s226, %s227
      %p239 = scmp.eq.s32.totalorder %s39, 1
      %p240 = por %p238, %p239
      %p242 = scmp.ne.s32.totalorder %s227, %s241
      %p243 = scmp.eq.s32.totalorder %s39, 0
      %p244 = por %p242, %p243
      %s246 = sadd.s32 %s245, 1
      %p249 = scmp.eq.s32.totalorder %s33, 1
      %p250 = scmp.ne.s32.totalorder %s245, %s247
      %p251 = scmp.eq.s32.totalorder %s33, 0
      %p252 = por %p250, %p251
      %p253 = scmp.ne.s32.totalorder %s245, %s247
      %p254 = scmp.eq.s32.totalorder %s38, 1
      %p255 = por %p253, %p254
      %p256 = scmp.ne.s32.totalorder %s247, %s248
      %p257 = scmp.eq.s32.totalorder %s38, 0
      %p258 = por %p256, %p257
      %p259 = scmp.ne.s32.totalorder %s247, %s248
      %p260 = scmp.eq.s32.totalorder %s39, 1
      %p261 = por %p259, %p260
      %p263 = scmp.ne.s32.totalorder %s248, %s262
      %p264 = scmp.eq.s32.totalorder %s39, 0
      %p265 = por %p263, %p264
      %s267 = sadd.s32 %s266, 1
      %p270 = scmp.eq.s32.totalorder %s33, 1
      %p271 = scmp.ne.s32.totalorder %s266, %s268
      %p272 = scmp.eq.s32.totalorder %s33, 0
      %p273 = por %p271, %p272
      %p274 = scmp.ne.s32.totalorder %s266, %s268
      %p275 = scmp.eq.s32.totalorder %s38, 1
      %p276 = por %p274, %p275
      %p277 = scmp.ne.s32.totalorder %s268, %s269
      %p278 = scmp.eq.s32.totalorder %s38, 0
      %p279 = por %p277, %p278
      %p280 = scmp.ne.s32.totalorder %s268, %s269
      %p281 = scmp.eq.s32.totalorder %s39, 1
      %p282 = por %p280, %p281
      %p284 = scmp.ne.s32.totalorder %s269, %s283
      %p285 = scmp.eq.s32.totalorder %s39, 0
      %p286 = por %p284, %p285
      %s288 = sadd.s32 %s287, 1
      %p291 = scmp.eq.s32.totalorder %s33, 1
      %p292 = scmp.ne.s32.totalorder %s287, %s289
      %p293 = scmp.eq.s32.totalorder %s33, 0
      %p294 = por %p292, %p293
      %p295 = scmp.ne.s32.totalorder %s287, %s289
      %p296 = scmp.eq.s32.totalorder %s38, 1
      %p297 = por %p295, %p296
      %p298 = scmp.ne.s32.totalorder %s289, %s290
      %p299 = scmp.eq.s32.totalorder %s38, 0
      %p300 = por %p298, %p299
      %p301 = scmp.ne.s32.totalorder %s289, %s290
      %p302 = scmp.eq.s32.totalorder %s39, 1
      %p303 = por %p301, %p302
      %p305 = scmp.ne.s32.totalorder %s290, %s304
      %p306 = scmp.eq.s32.totalorder %s39, 0
      %p307 = por %p305, %p306
      %s309 = sadd.s32 %s308, 1
      %p312 = scmp.eq.s32.totalorder %s33, 1
      %p313 = scmp.ne.s32.totalorder %s308, %s310
      %p314 = scmp.eq.s32.totalorder %s33, 0
      %p315 = por %p313, %p314
      %p316 = scmp.ne.s32.totalorder %s308, %s310
      %p317 = scmp.eq.s32.totalorder %s38, 1
      %p318 = por %p316, %p317
      %p319 = scmp.ne.s32.totalorder %s310, %s311
      %p320 = scmp.eq.s32.totalorder %s38, 0
      %p321 = por %p319, %p320
      %p322 = scmp.ne.s32.totalorder %s310, %s311
      %p323 = scmp.eq.s32.totalorder %s39, 1
      %p324 = por %p322, %p323
      %p326 = scmp.ne.s32.totalorder %s311, %s325
      %p327 = scmp.eq.s32.totalorder %s39, 0
      %p328 = por %p326, %p327
      %s330 = sadd.s32 %s329, 1
      %p333 = scmp.eq.s32.totalorder %s33, 1
      %p334 = scmp.ne.s32.totalorder %s329, %s331
      %p335 = scmp.eq.s32.totalorder %s33, 0
      %p336 = por %p334, %p335
      %p337 = scmp.ne.s32.totalorder %s329, %s331
      %p338 = scmp.eq.s32.totalorder %s38, 1
      %p339 = por %p337, %p338
      %p340 = scmp.ne.s32.totalorder %s331, %s332
      %p341 = scmp.eq.s32.totalorder %s38, 0
      %p342 = por %p340, %p341
      %p343 = scmp.ne.s32.totalorder %s331, %s332
      %p344 = scmp.eq.s32.totalorder %s39, 1
      %p345 = por %p343, %p344
      %p347 = scmp.ne.s32.totalorder %s332, %s346
      %p348 = scmp.eq.s32.totalorder %s39, 0
      %p349 = por %p347, %p348
      %s351 = sadd.s32 %s350, 1
      %p354 = scmp.eq.s32.totalorder %s33, 1
      %p355 = scmp.ne.s32.totalorder %s350, %s352
      %p356 = scmp.eq.s32.totalorder %s33, 0
      %p357 = por %p355, %p356
      %p358 = scmp.ne.s32.totalorder %s350, %s352
      %p359 = scmp.eq.s32.totalorder %s38, 1
      %p360 = por %p358, %p359
      %p361 = scmp.ne.s32.totalorder %s352, %s353
      %p362 = scmp.eq.s32.totalorder %s38, 0
      %p363 = por %p361, %p362
      %p364 = scmp.ne.s32.totalorder %s352, %s353
      %p365 = scmp.eq.s32.totalorder %s39, 1
      %p366 = por %p364, %p365
      %p368 = scmp.ne.s32.totalorder %s353, %s367
      %p369 = scmp.eq.s32.totalorder %s39, 0
      %p370 = por %p368, %p369
      %s372 = sadd.s32 %s371, 1
      %p375 = scmp.eq.s32.totalorder %s33, 1
      %p376 = scmp.ne.s32.totalorder %s371, %s373
      %p377 = scmp.eq.s32.totalorder %s33, 0
      %p378 = por %p376, %p377
      %p379 = scmp.ne.s32.totalorder %s371, %s373
      %p380 = scmp.eq.s32.totalorder %s38, 1
      %p381 = por %p379, %p380
      %p382 = scmp.ne.s32.totalorder %s373, %s374
      %p383 = scmp.eq.s32.totalorder %s38, 0
      %p384 = por %p382, %p383
      %p385 = scmp.ne.s32.totalorder %s373, %s374
      %p386 = scmp.eq.s32.totalorder %s39, 1
      %p387 = por %p385, %p386
      %p389 = scmp.ne.s32.totalorder %s374, %s388
      %p390 = scmp.eq.s32.totalorder %s39, 0
      %p391 = por %p389, %p390
      %s393 = sadd.s32 %s392, 1
      %p396 = scmp.eq.s32.totalorder %s33, 1
      %p397 = scmp.ne.s32.totalorder %s392, %s394
      %p398 = scmp.eq.s32.totalorder %s33, 0
      %p399 = por %p397, %p398
      %p400 = scmp.ne.s32.totalorder %s392, %s394
      %p401 = scmp.eq.s32.totalorder %s38, 1
      %p402 = por %p400, %p401
      %p403 = scmp.ne.s32.totalorder %s394, %s395
      %p404 = scmp.eq.s32.totalorder %s38, 0
      %p405 = por %p403, %p404
      %p406 = scmp.ne.s32.totalorder %s394, %s395
      %p407 = scmp.eq.s32.totalorder %s39, 1
      %p408 = por %p406, %p407
      %p410 = scmp.ne.s32.totalorder %s395, %s409
      %p411 = scmp.eq.s32.totalorder %s39, 0
      %p412 = por %p410, %p411
      %s414 = sadd.s32 %s413, 1
      %p417 = scmp.eq.s32.totalorder %s33, 1
      %p418 = scmp.ne.s32.totalorder %s413, %s415
      %p419 = scmp.eq.s32.totalorder %s33, 0
      %p420 = por %p418, %p419
      %p421 = scmp.ne.s32.totalorder %s413, %s415
      %p422 = scmp.eq.s32.totalorder %s38, 1
      %p423 = por %p421, %p422
      %p424 = scmp.ne.s32.totalorder %s415, %s416
      %p425 = scmp.eq.s32.totalorder %s38, 0
      %p426 = por %p424, %p425
      %p427 = scmp.ne.s32.totalorder %s415, %s416
      %p428 = scmp.eq.s32.totalorder %s39, 1
      %p429 = por %p427, %p428
      %p431 = scmp.ne.s32.totalorder %s416, %s430
      %p432 = scmp.eq.s32.totalorder %s39, 0
      %p433 = por %p431, %p432
      %s435 = sadd.s32 %s434, 1
      %p438 = scmp.eq.s32.totalorder %s33, 1
      %p439 = scmp.ne.s32.totalorder %s434, %s436
      %p440 = scmp.eq.s32.totalorder %s33, 0
      %p441 = por %p439, %p440
      %p442 = scmp.ne.s32.totalorder %s434, %s436
      %p443 = scmp.eq.s32.totalorder %s38, 1
      %p444 = por %p442, %p443
      %p445 = scmp.ne.s32.totalorder %s436, %s437
      %p446 = scmp.eq.s32.totalorder %s38, 0
      %p447 = por %p445, %p446
      %p448 = scmp.ne.s32.totalorder %s436, %s437
      %p449 = scmp.eq.s32.totalorder %s39, 1
      %p450 = por %p448, %p449
      %p452 = scmp.ne.s32.totalorder %s437, %s451
      %p453 = scmp.eq.s32.totalorder %s39, 0
      %p454 = por %p452, %p453
      %s455 = ssub.s32 %s33, %s40
      %p456 = scmp.eq.s32.totalorder %s455, 0
      %s458 = sadd.s32 %s457, 1
      %s459 = scalar_select %p456, %s457, %s458
      %p462 = pneg %p456
      %p463 = scmp.eq.s32.totalorder %s33, 1
      %p464 = por %p462, %p463
      %p465 = scmp.ne.s32.totalorder %s457, %s460
      %p466 = scmp.eq.s32.totalorder %s33, 0
      %p467 = por %p465, %p466
      %p468 = scmp.ne.s32.totalorder %s457, %s460
      %p469 = scmp.eq.s32.totalorder %s38, 1
      %p470 = por %p468, %p469
      %p471 = scmp.ne.s32.totalorder %s460, %s461
      %p472 = scmp.eq.s32.totalorder %s38, 0
      %p473 = por %p471, %p472
      %p474 = scmp.ne.s32.totalorder %s460, %s461
      %p475 = scmp.eq.s32.totalorder %s39, 1
      %p476 = por %p474, %p475
      %p478 = scmp.ne.s32.totalorder %s461, %s477
      %p479 = scmp.eq.s32.totalorder %s39, 0
      %p480 = por %p478, %p479
      %s481 = ssub.s32 %s33, %s40
      %p482 = scmp.eq.s32.totalorder %s481, 0
      %s484 = sadd.s32 %s483, 1
      %s485 = scalar_select %p482, %s483, %s484
      %p488 = pneg %p482
      %p489 = scmp.eq.s32.totalorder %s33, 1
      %p490 = por %p488, %p489
      %p491 = scmp.ne.s32.totalorder %s483, %s486
      %p492 = scmp.eq.s32.totalorder %s33, 0
      %p493 = por %p491, %p492
      %p494 = scmp.ne.s32.totalorder %s483, %s486
      %p495 = scmp.eq.s32.totalorder %s38, 1
      %p496 = por %p494, %p495
      %p497 = scmp.ne.s32.totalorder %s486, %s487
      %p498 = scmp.eq.s32.totalorder %s38, 0
      %p499 = por %p497, %p498
      %p500 = scmp.ne.s32.totalorder %s486, %s487
      %p501 = scmp.eq.s32.totalorder %s39, 1
      %p502 = por %p500, %p501
      %p504 = scmp.ne.s32.totalorder %s487, %s503
      %p505 = scmp.eq.s32.totalorder %s39, 0
      %p506 = por %p504, %p505
      %p507 = scmp.le.s32.totalorder 1, %s33
      %p508 = scmp.lt.s32.totalorder %s33, 3
      %p509 = pnand %p507, %p508
      %p510 = pneg %p509
      // Predicated region
      $region9: #{run.1} parent=5 // pred_check
        _
      $region10: #{run.1} parent=5 // pred_check_branch
        %512 = sbr.rel (%p509) target = $region12
      $region11: #{run.1} parent=5 // pred_region
        %s513 = ssub.s32 %s33, 1
        // Predicated region
        $region13: #{run.1} parent=11 // pred_check
          %p514 = pneg %p132
        $region14: #{run.1} parent=11 // pred_check_branch
          %516 = sbr.rel (%p514) target = $region16
        $region15: #{run.1} parent=11 // pred_region
          _
        $region16: #{run.1} parent=11 // pred_fallthru
          _
        // Predicated region
        $region17: #{run.1} parent=11 // pred_check
          %p517 = pneg %p153
        $region18: #{run.1} parent=11 // pred_check_branch
          %519 = sbr.rel (%p517) target = $region20
        $region19: #{run.1} parent=11 // pred_region
          _
        $region20: #{run.1} parent=11 // pred_fallthru
          _
        // Predicated region
        $region21: #{run.1} parent=11 // pred_check
          %p520 = pneg %p174
        $region22: #{run.1} parent=11 // pred_check_branch
          %522 = sbr.rel (%p520) target = $region24
        $region23: #{run.1} parent=11 // pred_region
          _
        $region24: #{run.1} parent=11 // pred_fallthru
          _
        // Predicated region
        $region25: #{run.1} parent=11 // pred_check
          %p523 = pneg %p195
        $region26: #{run.1} parent=11 // pred_check_branch
          %525 = sbr.rel (%p523) target = $region28
        $region27: #{run.1} parent=11 // pred_region
          _
        $region28: #{run.1} parent=11 // pred_fallthru
          _
        // Predicated region
        $region29: #{run.1} parent=11 // pred_check
          %p526 = pneg %p216
        $region30: #{run.1} parent=11 // pred_check_branch
          %528 = sbr.rel (%p526) target = $region32
        $region31: #{run.1} parent=11 // pred_region
          _
        $region32: #{run.1} parent=11 // pred_fallthru
          _
        // Predicated region
        $region33: #{run.1} parent=11 // pred_check
          %p529 = pneg %p237
        $region34: #{run.1} parent=11 // pred_check_branch
          %531 = sbr.rel (%p529) target = $region36
        $region35: #{run.1} parent=11 // pred_region
          _
        $region36: #{run.1} parent=11 // pred_fallthru
          _
        // Predicated region
        $region37: #{run.1} parent=11 // pred_check
          %p532 = pneg %p258
        $region38: #{run.1} parent=11 // pred_check_branch
          %534 = sbr.rel (%p532) target = $region40
        $region39: #{run.1} parent=11 // pred_region
          _
        $region40: #{run.1} parent=11 // pred_fallthru
          _
        // Predicated region
        $region41: #{run.1} parent=11 // pred_check
          %p535 = pneg %p279
        $region42: #{run.1} parent=11 // pred_check_branch
          %537 = sbr.rel (%p535) target = $region44
        $region43: #{run.1} parent=11 // pred_region
          _
        $region44: #{run.1} parent=11 // pred_fallthru
          _
        // Predicated region
        $region45: #{run.1} parent=11 // pred_check
          %p538 = pneg %p300
        $region46: #{run.1} parent=11 // pred_check_branch
          %540 = sbr.rel (%p538) target = $region48
        $region47: #{run.1} parent=11 // pred_region
          _
        $region48: #{run.1} parent=11 // pred_fallthru
          _
        // Predicated region
        $region49: #{run.1} parent=11 // pred_check
          %p541 = pneg %p321
        $region50: #{run.1} parent=11 // pred_check_branch
          %543 = sbr.rel (%p541) target = $region52
        $region51: #{run.1} parent=11 // pred_region
          _
        $region52: #{run.1} parent=11 // pred_fallthru
          _
        // Predicated region
        $region53: #{run.1} parent=11 // pred_check
          %p544 = pneg %p342
        $region54: #{run.1} parent=11 // pred_check_branch
          %546 = sbr.rel (%p544) target = $region56
        $region55: #{run.1} parent=11 // pred_region
          _
        $region56: #{run.1} parent=11 // pred_fallthru
          _
        // Predicated region
        $region57: #{run.1} parent=11 // pred_check
          %p547 = pneg %p363
        $region58: #{run.1} parent=11 // pred_check_branch
          %549 = sbr.rel (%p547) target = $region60
        $region59: #{run.1} parent=11 // pred_region
          _
        $region60: #{run.1} parent=11 // pred_fallthru
          _
        // Predicated region
        $region61: #{run.1} parent=11 // pred_check
          %p550 = pneg %p384
        $region62: #{run.1} parent=11 // pred_check_branch
          %552 = sbr.rel (%p550) target = $region64
        $region63: #{run.1} parent=11 // pred_region
          _
        $region64: #{run.1} parent=11 // pred_fallthru
          _
        // Predicated region
        $region65: #{run.1} parent=11 // pred_check
          %p553 = pneg %p405
        $region66: #{run.1} parent=11 // pred_check_branch
          %555 = sbr.rel (%p553) target = $region68
        $region67: #{run.1} parent=11 // pred_region
          _
        $region68: #{run.1} parent=11 // pred_fallthru
          _
        // Predicated region
        $region69: #{run.1} parent=11 // pred_check
          %p556 = pneg %p426
        $region70: #{run.1} parent=11 // pred_check_branch
          %558 = sbr.rel (%p556) target = $region72
        $region71: #{run.1} parent=11 // pred_region
          _
        $region72: #{run.1} parent=11 // pred_fallthru
          _
        // Predicated region
        $region73: #{run.1} parent=11 // pred_check
          %p559 = pneg %p447
        $region74: #{run.1} parent=11 // pred_check_branch
          %561 = sbr.rel (%p559) target = $region76
        $region75: #{run.1} parent=11 // pred_region
          _
        $region76: #{run.1} parent=11 // pred_fallthru
          _
      $region12: #{run.1} parent=5 // pred_fallthru
        _
      %p562 = scmp.lt.s32.totalorder %s33, 2
      // Predicated region
      $region77: #{run.1} parent=5 // pred_check
        %p563 = pneg %p562
      $region78: #{run.1} parent=5 // pred_check_branch
        %565 = sbr.rel (%p563) target = $region80
      $region79: #{run.1} parent=5 // pred_region
        // Predicated region
        $region81: #{run.1} parent=79 // pred_check
          %p566 = pneg %p53
        $region82: #{run.1} parent=79 // pred_check_branch
          %568 = sbr.rel (%p566) target = $region84
        $region83: #{run.1} parent=79 // pred_region
          %p569 = scmp.lt.s32.totalorder %s33, 1
          %s570 = scalar_select %p569, %s33, 1
          %s571 = smul.addr %s570, 8
          %s572 = scalar_lea.vmem %s0, %s571
        $region84: #{run.1} parent=79 // pred_fallthru
          _
        // Predicated region
        $region85: #{run.1} parent=79 // pred_check
          %p573 = pneg %p79
        $region86: #{run.1} parent=79 // pred_check_branch
          %575 = sbr.rel (%p573) target = $region88
        $region87: #{run.1} parent=79 // pred_region
          %p576 = scmp.lt.s32.totalorder %s33, 1
          %s577 = scalar_select %p576, %s33, 1
          %s578 = smul.addr %s577, 4
          %s579 = smul.addr %s578, 4
          %s580 = scalar_lea.vmem %s1, %s579
        $region88: #{run.1} parent=79 // pred_fallthru
          _
        // Predicated region
        $region89: #{run.1} parent=79 // pred_check
          %p581 = pneg %p105
        $region90: #{run.1} parent=79 // pred_check_branch
          %583 = sbr.rel (%p581) target = $region92
        $region91: #{run.1} parent=79 // pred_region
          %p584 = scmp.lt.s32.totalorder %s33, 1
          %s585 = scalar_select %p584, %s33, 1
          %s586 = scalar_lea.vmem %s2, %s585
        $region92: #{run.1} parent=79 // pred_fallthru
          _
      $region80: #{run.1} parent=5 // pred_fallthru
        _
      %p587 = scmp.le.s32.totalorder 1, %s33
      %p588 = scmp.lt.s32.totalorder %s33, 3
      %p589 = pnand %p587, %p588
      %p590 = pneg %p589
      // Predicated region
      $region93: #{run.1} parent=5 // pred_check
        _
      $region94: #{run.1} parent=5 // pred_check_branch
        %592 = sbr.rel (%p589) target = $region96
      $region95: #{run.1} parent=5 // pred_region
        %s593 = ssub.s32 %s33, 1
        %p594 = scmp.lt.s32.totalorder %s38, 1
        %s595 = scalar_select %p594, %s38, 1
        %s596 = smul.addr %s595, 8
        %s597 = scalar_lea.vmem %s0, %s596
        %p598 = pneg %p59
        %p599 = pneg %p56
        %p600 = scmp.lt.s32.totalorder %s38, 1
        %s601 = scalar_select %p600, %s38, 1
        %s602 = smul.addr %s601, 4
        %s603 = smul.addr %s602, 4
        %s604 = scalar_lea.vmem %s1, %s603
        %p605 = pneg %p85
        %p606 = pneg %p82
        %p607 = scmp.lt.s32.totalorder %s38, 1
        %s608 = scalar_select %p607, %s38, 1
        %s609 = scalar_lea.vmem %s2, %s608
        %p610 = pneg %p111
        %p611 = pneg %p108
        %p612 = pneg %p132
        %p613 = pneg %p129
        %p614 = pneg %p153
        %p615 = pneg %p150
        %p616 = pneg %p174
        %p617 = pneg %p171
        %p618 = pneg %p195
        %p619 = pneg %p192
        %p620 = pneg %p216
        %p621 = pneg %p213
        %p622 = pneg %p237
        %p623 = pneg %p234
        %p624 = pneg %p258
        %p625 = pneg %p255
        %p626 = pneg %p279
        %p627 = pneg %p276
        %p628 = pneg %p300
        %p629 = pneg %p297
        %p630 = pneg %p321
        %p631 = pneg %p318
        %p632 = pneg %p342
        %p633 = pneg %p339
        %p634 = pneg %p363
        %p635 = pneg %p360
        %p636 = pneg %p384
        %p637 = pneg %p381
        %p638 = pneg %p405
        %p639 = pneg %p402
        %p640 = pneg %p426
        %p641 = pneg %p423
        %p642 = pneg %p447
        %p643 = pneg %p444
        %p644 = pneg %p473
        %p645 = pneg %p470
        %s646 = sand.u32 %s460, 1
        %s647 = scalar_lea.sflag [#allocation4], %s646
        %s648 = sand.u32 %s460, 1
        %s649 = smul.addr %s648, 8
        %s650 = scalar_lea.vmem [#allocation3], %s649
        %p651 = pneg %p499
        %p652 = pneg %p496
        %s653 = sand.u32 %s486, 1
        %s654 = scalar_lea.sflag [#allocation6], %s653
        %s655 = sand.u32 %s486, 1
        %s656 = smul.addr %s655, 64
        %s657 = scalar_lea.vmem [#allocation5], %s656
        %p658 = scmp.lt.s32.totalorder %s38, 1
        %s659 = scalar_select %p658, %s38, 1
        %s660 = smul.addr %s659, 8
        %s661 = scalar_lea.vmem %s0, %s660
        %p662 = scmp.lt.s32.totalorder %s38, 1
        %s663 = scalar_select %p662, %s38, 1
        %s664 = smul.addr %s663, 4
        %s665 = smul.addr %s664, 4
        %s666 = scalar_lea.vmem %s1, %s665
        %p667 = scmp.lt.s32.totalorder %s38, 1
        %s668 = scalar_select %p667, %s38, 1
        %s669 = scalar_lea.vmem %s2, %s668
        %v671 = vld [vmem:[%s661] sm:$0xff]
        %v672 = vld [vmem:[%s15] sm:$0x1]
        %v673 = vld [vmem:[%s16] sm:$0x1]
        %vm674 = vcmask 261120
        %v675 = vsel %vm674, %v671, 0.0
        %676 = vadd.xlane.f32.xlu0 %v675
        %v677 = vpop.xlane.xlu0 %676
        %v678 = vrcp.pop 32.0
        %v679 = vmul.f32 %v677, %v678
        %v680 = vsub.f32 %v671, %v679
        %v681 = vmul.f32 %v680, %v680
        %v682 = vsel %vm674, %v681, 0.0
        %683 = vadd.xlane.f32.xlu0 %v682
        %v684 = vpop.xlane.xlu0 %683
        %v685 = vmul.f32 %v684, %v678
        %v686 = vadd.f32 %v685, 1e-06
        %v687 = vrsqrt.pop %v686
        %v688 = vmul.f32 %v680, %v687
        %v690 = vlaneseq
        %v691 = vshrl.u32 %v690, 7
        %v692 = vsub.s32 0, %v691
        %v693 = vrot.slane %v672, %v692
        %v695 = vmul.f32 %v688, %v693
        %v697 = vlaneseq
        %v698 = vshrl.u32 %v697, 7
        %v699 = vsub.s32 0, %v698
        %v700 = vrot.slane %v673, %v699
        %v702 = vadd.f32 %v695, %v700
        %v703 = vpack.c.bf16 %v702, %v702
        %v704 = vld [vmem:[%s3] sm:$0xf]
        %v705 = vld [vmem:[%s3 + $0x4] sm:$0xf]
        %v706 = vld [vmem:[%s3 + $0x8] sm:$0xf]
        %v707 = vld [vmem:[%s3 + $0xc] sm:$0xf]
        %v708 = vld [vmem:[%s4] sm:$0x1]
        %v710 = vlaneseq
        %v711 = vshrl.u32 %v710, 7
        %v712 = vsub.s32 0, %v711
        %v713 = vrot.slane %v708, %v712
        %v719 = vunpack.c.l.b16 %v704
        %v720 = vunpack.c.l.b16 %v705
        %v721 = vunpack.c.l.b16 %v706
        %v722 = vunpack.c.l.b16 %v707
        %v723 = vpack.c.b16 %v720, %v719
        %v724 = vpack.c.b16 %v722, %v721
        %v728 = vsel %vm674, %v703, 0
        %730 = vmatprep.subr.bf16.mxu0 0
        %731 = vmatpush1.bf16.msra.mxu0 %v723
        %732 = vmatprep.subr.bf16.mxu0 0
        %733 = vmatpush1.bf16.msra.mxu0 %v724
        %734 = vmatprep.subr.bf16.mxu0 0
        %735 = vmatpush1.bf16.msra.mxu0 0
        %736 = vmatprep.subr.bf16.mxu0 0
        %737 = vmatpush1.bf16.msra.mxu0 0
        %738 = vmatprep.subr.bf16.mxu0 0
        %739 = vmatpush1.bf16.msra.mxu0 0
        %740 = vmatprep.subr.bf16.mxu0 0
        %741 = vmatpush1.bf16.msra.mxu0 0
        %742 = vmatprep.subr.bf16.mxu0 0
        %743 = vmatpush1.bf16.msra.mxu0 0
        %744 = vmatprep.subr.bf16.mxu0 0
        %745 = vmatpush1.bf16.msra.mxu0 0
        %746 = vmatprep.subr.bf16.mxu0 0
        %747 = vmatpush1.bf16.msra.mxu0 0
        %748 = vmatprep.subr.bf16.mxu0 0
        %749 = vmatpush1.bf16.msra.mxu0 0
        %750 = vmatprep.subr.bf16.mxu0 0
        %751 = vmatpush1.bf16.msra.mxu0 0
        %752 = vmatprep.subr.bf16.mxu0 0
        %753 = vmatpush1.bf16.msra.mxu0 0
        %754 = vmatprep.subr.bf16.mxu0 0
        %755 = vmatpush1.bf16.msra.mxu0 0
        %756 = vmatprep.subr.bf16.mxu0 0
        %757 = vmatpush1.bf16.msra.mxu0 0
        %758 = vmatprep.subr.bf16.mxu0 0
        %759 = vmatpush1.bf16.msra.mxu0 0
        %760 = vmatprep.subr.bf16.mxu0 0
        %761 = vmatpush1.bf16.msra.mxu0 0
        %762 = vmatprep.mubr.bf16.mxu0 0
        %763 = vmatmul.mubr.bf16.gmra.mrb[0].mxu0 %v728
        %v764 = vpop.f32.mrb[0].mxu0
        %v765 = vadd.f32 %v713, %v764
        %v766 = vpop.f32.mrb[0].mxu0
        %v767 = vpop.f32.mrb[0].mxu0
        %v768 = vpop.f32.mrb[0].mxu0
        %769 = vdwg.mxu0
        %v770 = vmul.f32 %v765, 0.5
        %v771 = vpack.c.bf16 %v770, %v770
        %v772 = vld [vmem:[%s5] sm:$0xf]
        %v773 = vld [vmem:[%s5 + $0x4] sm:$0xf]
        %v774 = vld [vmem:[%s5 + $0x8] sm:$0xf]
        %v775 = vld [vmem:[%s5 + $0xc] sm:$0xf]
        %v776 = vld [vmem:[%s6] sm:$0x1]
        %v778 = vlaneseq
        %v779 = vshrl.u32 %v778, 7
        %v780 = vsub.s32 0, %v779
        %v781 = vrot.slane %v776, %v780
        %v787 = vunpack.c.l.b16 %v772
        %v788 = vunpack.c.l.b16 %v773
        %v789 = vunpack.c.l.b16 %v774
        %v790 = vunpack.c.l.b16 %v775
        %v791 = vpack.c.b16 %v788, %v787
        %v792 = vpack.c.b16 %v790, %v789
        %795 = vmatprep.subr.bf16.mxu0 0
        %796 = vmatpush1.bf16.msra.mxu0 %v791
        %797 = vmatprep.subr.bf16.mxu0 0
        %798 = vmatpush1.bf16.msra.mxu0 %v792
        %799 = vmatprep.subr.bf16.mxu0 0
        %800 = vmatpush1.bf16.msra.mxu0 0
        %801 = vmatprep.subr.bf16.mxu0 0
        %802 = vmatpush1.bf16.msra.mxu0 0
        %803 = vmatprep.subr.bf16.mxu0 0
        %804 = vmatpush1.bf16.msra.mxu0 0
        %805 = vmatprep.subr.bf16.mxu0 0
        %806 = vmatpush1.bf16.msra.mxu0 0
        %807 = vmatprep.subr.bf16.mxu0 0
        %808 = vmatpush1.bf16.msra.mxu0 0
        %809 = vmatprep.subr.bf16.mxu0 0
        %810 = vmatpush1.bf16.msra.mxu0 0
        %811 = vmatprep.subr.bf16.mxu0 0
        %812 = vmatpush1.bf16.msra.mxu0 0
        %813 = vmatprep.subr.bf16.mxu0 0
        %814 = vmatpush1.bf16.msra.mxu0 0
        %815 = vmatprep.subr.bf16.mxu0 0
        %816 = vmatpush1.bf16.msra.mxu0 0
        %817 = vmatprep.subr.bf16.mxu0 0
        %818 = vmatpush1.bf16.msra.mxu0 0
        %819 = vmatprep.subr.bf16.mxu0 0
        %820 = vmatpush1.bf16.msra.mxu0 0
        %821 = vmatprep.subr.bf16.mxu0 0
        %822 = vmatpush1.bf16.msra.mxu0 0
        %823 = vmatprep.subr.bf16.mxu0 0
        %824 = vmatpush1.bf16.msra.mxu0 0
        %825 = vmatprep.subr.bf16.mxu0 0
        %826 = vmatpush1.bf16.msra.mxu0 0
        %827 = vmatprep.mubr.bf16.mxu0 0
        %828 = vmatmul.mubr.bf16.gmra.mrb[0].mxu0 %v728
        %v829 = vpop.f32.mrb[0].mxu0
        %v830 = vadd.f32 %v781, %v829
        %v831 = vpop.f32.mrb[0].mxu0
        %v832 = vpop.f32.mrb[0].mxu0
        %v833 = vpop.f32.mrb[0].mxu0
        %834 = vdwg.mxu0
        %v835 = vpack.c.bf16 %v830, %v830
        %v836 = vld [vmem:[%s7] sm:$0xf]
        %v837 = vld [vmem:[%s7 + $0x4] sm:$0xf]
        %v838 = vld [vmem:[%s7 + $0x8] sm:$0xf]
        %v839 = vld [vmem:[%s7 + $0xc] sm:$0xf]
        %v840 = vld [vmem:[%s8] sm:$0x1]
        %v842 = vlaneseq
        %v843 = vshrl.u32 %v842, 7
        %v844 = vsub.s32 0, %v843
        %v845 = vrot.slane %v840, %v844
        %v851 = vunpack.c.l.b16 %v836
        %v852 = vunpack.c.l.b16 %v837
        %v853 = vunpack.c.l.b16 %v838
        %v854 = vunpack.c.l.b16 %v839
        %v855 = vpack.c.b16 %v852, %v851
        %v856 = vpack.c.b16 %v854, %v853
        %859 = vmatprep.subr.bf16.mxu0 0
        %860 = vmatpush1.bf16.msra.mxu0 %v855
        %861 = vmatprep.subr.bf16.mxu0 0
        %862 = vmatpush1.bf16.msra.mxu0 %v856
        %863 = vmatprep.subr.bf16.mxu0 0
        %864 = vmatpush1.bf16.msra.mxu0 0
        %865 = vmatprep.subr.bf16.mxu0 0
        %866 = vmatpush1.bf16.msra.mxu0 0
        %867 = vmatprep.subr.bf16.mxu0 0
        %868 = vmatpush1.bf16.msra.mxu0 0
        %869 = vmatprep.subr.bf16.mxu0 0
        %870 = vmatpush1.bf16.msra.mxu0 0
        %871 = vmatprep.subr.bf16.mxu0 0
        %872 = vmatpush1.bf16.msra.mxu0 0
        %873 = vmatprep.subr.bf16.mxu0 0
        %874 = vmatpush1.bf16.msra.mxu0 0
        %875 = vmatprep.subr.bf16.mxu0 0
        %876 = vmatpush1.bf16.msra.mxu0 0
        %877 = vmatprep.subr.bf16.mxu0 0
        %878 = vmatpush1.bf16.msra.mxu0 0
        %879 = vmatprep.subr.bf16.mxu0 0
        %880 = vmatpush1.bf16.msra.mxu0 0
        %881 = vmatprep.subr.bf16.mxu0 0
        %882 = vmatpush1.bf16.msra.mxu0 0
        %883 = vmatprep.subr.bf16.mxu0 0
        %884 = vmatpush1.bf16.msra.mxu0 0
        %885 = vmatprep.subr.bf16.mxu0 0
        %886 = vmatpush1.bf16.msra.mxu0 0
        %887 = vmatprep.subr.bf16.mxu0 0
        %888 = vmatpush1.bf16.msra.mxu0 0
        %889 = vmatprep.subr.bf16.mxu0 0
        %890 = vmatpush1.bf16.msra.mxu0 0
        %891 = vmatprep.mubr.bf16.mxu0 0
        %892 = vmatmul.mubr.bf16.gmra.mrb[0].mxu0 %v728
        %v893 = vpop.f32.mrb[0].mxu0
        %v894 = vadd.f32 %v845, %v893
        %v895 = vpop.f32.mrb[0].mxu0
        %v896 = vpop.f32.mrb[0].mxu0
        %v897 = vpop.f32.mrb[0].mxu0
        %898 = vdwg.mxu0
        %v899 = vpack.c.bf16 %v894, %v894
        %v900 = vld [vmem:[%s669] sm:$0x1]
        %vm901 = vcmp.eq.f32.partialorder %v900, 0.0
        %v902 = vsel %vm901, -1e+09, 0.0
        %v903 = vld [vmem:[%s666] sm:$0xf]
        %v904 = vunpack.c.l.bf16 %v903
        %v906 = vlaneseq
        %v907 = vshrl.u32 %v906, 7
        %v908 = vsub.s32 0, %v907
        %v909 = vrot.slane %v902, %v908
        %v911 = vadd.f32 %v904, %v909
        %s912 = scalar_lea.vmem %s666, 4
        %v913 = vld [vmem:[%s912] sm:$0xf]
        %v914 = vunpack.c.l.bf16 %v913
        %v915 = vadd.f32 %v914, %v909
        %s916 = scalar_lea.vmem %s666, 8
        %v917 = vld [vmem:[%s916] sm:$0xf]
        %v918 = vunpack.c.l.bf16 %v917
        %v919 = vadd.f32 %v918, %v909
        %s920 = scalar_lea.vmem %s666, 12
        %v921 = vld [vmem:[%s920] sm:$0xf]
        %v922 = vunpack.c.l.bf16 %v921
        %v923 = vadd.f32 %v922, %v909
        %vm924 = vcmask 31744
        %v926 = vsel %vm924, %v771, 0
        %v929 = vsel %vm924, %v835, 0
        %931 = vmatprep.subr.bf16.mxu0 0
        %932 = vmatpush1.bf16.xpose.msra.mxu0 %v929
        %933 = vmatprep.subr.bf16.mxu0 0
        %934 = vmatpush1.bf16.xpose.msra.mxu0 0
        %935 = vmatprep.subr.bf16.mxu0 0
        %936 = vmatpush1.bf16.xpose.msra.mxu0 0
        %937 = vmatprep.subr.bf16.mxu0 0
        %938 = vmatpush1.bf16.xpose.msra.mxu0 0
        %939 = vmatprep.subr.bf16.mxu0 0
        %940 = vmatpush1.bf16.xpose.msra.mxu0 0
        %941 = vmatprep.subr.bf16.mxu0 0
        %942 = vmatpush1.bf16.xpose.msra.mxu0 0
        %943 = vmatprep.subr.bf16.mxu0 0
        %944 = vmatpush1.bf16.xpose.msra.mxu0 0
        %945 = vmatprep.subr.bf16.mxu0 0
        %946 = vmatpush1.bf16.xpose.msra.mxu0 0
        %947 = vmatprep.subr.bf16.mxu0 0
        %948 = vmatpush1.bf16.xpose.msra.mxu0 0
        %949 = vmatprep.subr.bf16.mxu0 0
        %950 = vmatpush1.bf16.xpose.msra.mxu0 0
        %951 = vmatprep.subr.bf16.mxu0 0
        %952 = vmatpush1.bf16.xpose.msra.mxu0 0
        %953 = vmatprep.subr.bf16.mxu0 0
        %954 = vmatpush1.bf16.xpose.msra.mxu0 0
        %955 = vmatprep.subr.bf16.mxu0 0
        %956 = vmatpush1.bf16.xpose.msra.mxu0 0
        %957 = vmatprep.subr.bf16.mxu0 0
        %958 = vmatpush1.bf16.xpose.msra.mxu0 0
        %959 = vmatprep.subr.bf16.mxu0 0
        %960 = vmatpush1.bf16.xpose.msra.mxu0 0
        %961 = vmatprep.subr.bf16.mxu0 0
        %962 = vmatpush1.bf16.xpose.msra.mxu0 0
        %963 = vmatprep.mubr.bf16.mxu0 0
        %964 = vmatmul.mubr.bf16.gmra.mrb[0].mxu0 %v926
        %v965 = vpop.f32.mrb[0].mxu0
        %v966 = vadd.f32 %v911, %v965
        %v967 = vpop.f32.mrb[0].mxu0
        %v968 = vpop.f32.mrb[0].mxu0
        %v969 = vpop.f32.mrb[0].mxu0
        %970 = vdwg.mxu0
        %vm971 = vcmask 64512
        %v972 = vsel %vm971, %v966, -inf
        %973 = vmax.xlane.f32.xlu0 %v972
        %v974 = vpop.xlane.xlu0 %973
        %v975 = vsub.f32 %v966, %v974
        %v976 = vmul.f32 %v975, 1.442695
        %v977 = vpow.pop %v976
        %v978 = vsel %vm971, %v977, 0.0
        %979 = vadd.xlane.f32.xlu0 %v978
        %v980 = vpop.xlane.xlu0 %979
        %v981 = vrcp.pop %v980
        %v982 = vmul.f32 1.0, %v981
        %v983 = vmul.f32 %v977, %v982
        %984 = vst.msk [vmem:[%s657] sm:$0xff] %vm971, %v983
        %v985 = vpack.c.bf16 %v983, %v983
        %v987 = vsel %vm971, %v985, 0
        %vm989 = vcmask 1043456
        %v991 = vsel %vm989, %v899, 0
        %993 = vmatprep.subr.bf16.mxu0 0
        %994 = vmatpush1.bf16.msra.mxu0 %v991
        %995 = vmatprep.subr.bf16.mxu0 0
        %996 = vmatpush1.bf16.msra.mxu0 0
        %997 = vmatprep.subr.bf16.mxu0 0
        %998 = vmatpush1.bf16.msra.mxu0 0
        %999 = vmatprep.subr.bf16.mxu0 0
        %1000 = vmatpush1.bf16.msra.mxu0 0
        %1001 = vmatprep.subr.bf16.mxu0 0
        %1002 = vmatpush1.bf16.msra.mxu0 0
        %1003 = vmatprep.subr.bf16.mxu0 0
        %1004 = vmatpush1.bf16.msra.mxu0 0
        %1005 = vmatprep.subr.bf16.mxu0 0
        %1006 = vmatpush1.bf16.msra.mxu0 0
        %1007 = vmatprep.subr.bf16.mxu0 0
        %1008 = vmatpush1.bf16.msra.mxu0 0
        %1009 = vmatprep.subr.bf16.mxu0 0
        %1010 = vmatpush1.bf16.msra.mxu0 0
        %1011 = vmatprep.subr.bf16.mxu0 0
        %1012 = vmatpush1.bf16.msra.mxu0 0
        %1013 = vmatprep.subr.bf16.mxu0 0
        %1014 = vmatpush1.bf16.msra.mxu0 0
        %1015 = vmatprep.subr.bf16.mxu0 0
        %1016 = vmatpush1.bf16.msra.mxu0 0
        %1017 = vmatprep.subr.bf16.mxu0 0
        %1018 = vmatpush1.bf16.msra.mxu0 0
        %1019 = vmatprep.subr.bf16.mxu0 0
        %1020 = vmatpush1.bf16.msra.mxu0 0
        %1021 = vmatprep.subr.bf16.mxu0 0
        %1022 = vmatpush1.bf16.msra.mxu0 0
        %1023 = vmatprep.subr.bf16.mxu0 0
        %1024 = vmatpush1.bf16.msra.mxu0 0
        %1025 = vmatprep.mubr.bf16.mxu0 0
        %1026 = vmatmul.mubr.bf16.gmra.mrb[0].mxu0 %v987
        %v1027 = vpop.f32.mrb[0].mxu0
        %v1028 = vadd.f32 0.0, %v1027
        %v1029 = vpop.f32.mrb[0].mxu0
        %v1030 = vpop.f32.mrb[0].mxu0
        %v1031 = vpop.f32.mrb[0].mxu0
        %1032 = vdwg.mxu0
        %v1033 = vpack.c.bf16 %v1028, %v1028
        %vm1034 = vcmask 27648
        %1035 = vst.msk [vmem:[#allocation2] sm:$0xf] %vm1034, %v1033
        %1037 = vrot.lane.b32.xlu0 %v771, 124
        %v1038 = vpop.permute.xlu0 %1037
        %1040 = vrot.lane.b32.xlu0 %v835, 124
        %v1041 = vpop.permute.xlu0 %1040
        %v1043 = vsel %vm924, %v1038, 0
        %v1046 = vsel %vm924, %v1041, 0
        %1048 = vmatprep.subr.bf16.mxu0 0
        %1049 = vmatpush1.bf16.xpose.msra.mxu0 %v1046
        %1050 = vmatprep.subr.bf16.mxu0 0
        %1051 = vmatpush1.bf16.xpose.msra.mxu0 0
        %1052 = vmatprep.subr.bf16.mxu0 0
        %1053 = vmatpush1.bf16.xpose.msra.mxu0 0
        %1054 = vmatprep.subr.bf16.mxu0 0
        %1055 = vmatpush1.bf16.xpose.msra.mxu0 0
        %1056 = vmatprep.subr.bf16.mxu0 0
        %1057 = vmatpush1.bf16.xpose.msra.mxu0 0
        %1058 = vmatprep.subr.bf16.mxu0 0
        %1059 = vmatpush1.bf16.xpose.msra.mxu0 0
        %1060 = vmatprep.subr.bf16.mxu0 0
        %1061 = vmatpush1.bf16.xpose.msra.mxu0 0
        %1062 = vmatprep.subr.bf16.mxu0 0
        %1063 = vmatpush1.bf16.xpose.msra.mxu0 0
        %1064 = vmatprep.subr.bf16.mxu0 0
        %1065 = vmatpush1.bf16.xpose.msra.mxu0 0
        %1066 = vmatprep.subr.bf16.mxu0 0
        %1067 = vmatpush1.bf16.xpose.msra.mxu0 0
        %1068 = vmatprep.subr.bf16.mxu0 0
        %1069 = vmatpush1.bf16.xpose.msra.mxu0 0
        %1070 = vmatprep.subr.bf16.mxu0 0
        %1071 = vmatpush1.bf16.xpose.msra.mxu0 0
        %1072 = vmatprep.subr.bf16.mxu0 0
        %1073 = vmatpush1.bf16.xpose.msra.mxu0 0
        %1074 = vmatprep.subr.bf16.mxu0 0
        %1075 = vmatpush1.bf16.xpose.msra.mxu0 0
        %1076 = vmatprep.subr.bf16.mxu0 0
        %1077 = vmatpush1.bf16.xpose.msra.mxu0 0
        %1078 = vmatprep.subr.bf16.mxu0 0
        %1079 = vmatpush1.bf16.xpose.msra.mxu0 0
        %1080 = vmatprep.mubr.bf16.mxu0 0
        %1081 = vmatmul.mubr.bf16.gmra.mrb[0].mxu0 %v1043
        %v1082 = vpop.f32.mrb[0].mxu0
        %v1083 = vadd.f32 %v911, %v1082
        %v1084 = vpop.f32.mrb[0].mxu0
        %v1085 = vpop.f32.mrb[0].mxu0
        %v1086 = vpop.f32.mrb[0].mxu0
        %1087 = vdwg.mxu0
        %v1088 = vsel %vm971, %v1083, -inf
        %1089 = vmax.xlane.f32.xlu0 %v1088
        %v1090 = vpop.xlane.xlu0 %1089
        %v1091 = vsub.f32 %v1083, %v1090
        %v1092 = vmul.f32 %v1091, 1.442695
        %v1093 = vpow.pop %v1092
        %v1094 = vsel %vm971, %v1093, 0.0
        %1095 = vadd.xlane.f32.xlu0 %v1094
        %v1096 = vpop.xlane.xlu0 %1095
        %v1097 = vrcp.pop %v1096
        %v1098 = vmul.f32 1.0, %v1097
        %v1099 = vmul.f32 %v1093, %v1098
        %s1100 = scalar_lea.vmem %s657, 8 [#allocation5]
        %1101 = vst.msk [vmem:[%s1100] sm:$0xff] %vm971, %v1099
        %v1102 = vpack.c.bf16 %v1099, %v1099
        %1104 = vrot.lane.b32.xlu0 %v899, 124
        %v1105 = vpop.permute.xlu0 %1104
        %v1107 = vsel %vm971, %v1102, 0
        %v1110 = vsel %vm989, %v1105, 0
        %1112 = vmatprep.subr.bf16.mxu0 0
        %1113 = vmatpush1.bf16.msra.mxu0 %v1110
        %1114 = vmatprep.subr.bf16.mxu0 0
        %1115 = vmatpush1.bf16.msra.mxu0 0
        %1116 = vmatprep.subr.bf16.mxu0 0
        %1117 = vmatpush1.bf16.msra.mxu0 0
        %1118 = vmatprep.subr.bf16.mxu0 0
        %1119 = vmatpush1.bf16.msra.mxu0 0
        %1120 = vmatprep.subr.bf16.mxu0 0
        %1121 = vmatpush1.bf16.msra.mxu0 0
        %1122 = vmatprep.subr.bf16.mxu0 0
        %1123 = vmatpush1.bf16.msra.mxu0 0
        %1124 = vmatprep.subr.bf16.mxu0 0
        %1125 = vmatpush1.bf16.msra.mxu0 0
        %1126 = vmatprep.subr.bf16.mxu0 0
        %1127 = vmatpush1.bf16.msra.mxu0 0
        %1128 = vmatprep.subr.bf16.mxu0 0
        %1129 = vmatpush1.bf16.msra.mxu0 0
        %1130 = vmatprep.subr.bf16.mxu0 0
        %1131 = vmatpush1.bf16.msra.mxu0 0
        %1132 = vmatprep.subr.bf16.mxu0 0
        %1133 = vmatpush1.bf16.msra.mxu0 0
        %1134 = vmatprep.subr.bf16.mxu0 0
        %1135 = vmatpush1.bf16.msra.mxu0 0
        %1136 = vmatprep.subr.bf16.mxu0 0
        %1137 = vmatpush1.bf16.msra.mxu0 0
        %1138 = vmatprep.subr.bf16.mxu0 0
        %1139 = vmatpush1.bf16.msra.mxu0 0
        %1140 = vmatprep.subr.bf16.mxu0 0
        %1141 = vmatpush1.bf16.msra.mxu0 0
        %1142 = vmatprep.subr.bf16.mxu0 0
        %1143 = vmatpush1.bf16.msra.mxu0 0
        %1144 = vmatprep.mubr.bf16.mxu0 0
        %1145 = vmatmul.mubr.bf16.gmra.mrb[0].mxu0 %v1107
        %v1146 = vpop.f32.mrb[0].mxu0
        %v1147 = vadd.f32 0.0, %v1146
        %v1148 = vpop.f32.mrb[0].mxu0
        %v1149 = vpop.f32.mrb[0].mxu0
        %v1150 = vpop.f32.mrb[0].mxu0
        %1151 = vdwg.mxu0
        %v1152 = vpack.c.bf16 %v1147, %v1147
        %v1154 = vunpack.c.l.b16 %v1152
        %v1155 = vpack.c.b16 %v1154, %v1154
        %1156 = vrot.lane.b32.xlu0 %v1155, 4
        %v1157 = vpop.permute.xlu0 %1156
        %vm1159 = vcmask 60448
        %1160 = vst.msk [vmem:[#allocation2] sm:$0xf] %vm1159, %v1157
        %1161 = vrot.lane.b32.xlu0 %v771, 120
        %v1162 = vpop.permute.xlu0 %1161
        %1163 = vrot.lane.b32.xlu0 %v835, 120
        %v1164 = vpop.permute.xlu0 %1163
        %v1166 = vsel %vm924, %v1162, 0
        %v1169 = vsel %vm924, %v1164, 0
        %1171 = vmatprep.subr.bf16.mxu0 0
        %1172 = vmatpush1.bf16.xpose.msra.mxu0 %v1169
        %1173 = vmatprep.subr.bf16.mxu0 0
        %1174 = vmatpush1.bf16.xpose.msra.mxu0 0
        %1175 = vmatprep.subr.bf16.mxu0 0
        %1176 = vmatpush1.bf16.xpose.msra.mxu0 0
        %1177 = vmatprep.subr.bf16.mxu0 0
        %1178 = vmatpush1.bf16.xpose.msra.mxu0 0
        %1179 = vmatprep.subr.bf16.mxu0 0
        %1180 = vmatpush1.bf16.xpose.msra.mxu0 0
        %1181 = vmatprep.subr.bf16.mxu0 0
        %1182 = vmatpush1.bf16.xpose.msra.mxu0 0
        %1183 = vmatprep.subr.bf16.mxu0 0
        %1184 = vmatpush1.bf16.xpose.msra.mxu0 0
        %1185 = vmatprep.subr.bf16.mxu0 0
        %1186 = vmatpush1.bf16.xpose.msra.mxu0 0
        %1187 = vmatprep.subr.bf16.mxu0 0
        %1188 = vmatpush1.bf16.xpose.msra.mxu0 0
        %1189 = vmatprep.subr.bf16.mxu0 0
        %1190 = vmatpush1.bf16.xpose.msra.mxu0 0
        %1191 = vmatprep.subr.bf16.mxu0 0
        %1192 = vmatpush1.bf16.xpose.msra.mxu0 0
        %1193 = vmatprep.subr.bf16.mxu0 0
        %1194 = vmatpush1.bf16.xpose.msra.mxu0 0
        %1195 = vmatprep.subr.bf16.mxu0 0
        %1196 = vmatpush1.bf16.xpose.msra.mxu0 0
        %1197 = vmatprep.subr.bf16.mxu0 0
        %1198 = vmatpush1.bf16.xpose.msra.mxu0 0
        %1199 = vmatprep.subr.bf16.mxu0 0
        %1200 = vmatpush1.bf16.xpose.msra.mxu0 0
        %1201 = vmatprep.subr.bf16.mxu0 0
        %1202 = vmatpush1.bf16.xpose.msra.mxu0 0
        %1203 = vmatprep.mubr.bf16.mxu0 0
        %1204 = vmatmul.mubr.bf16.gmra.mrb[0].mxu0 %v1166
        %v1205 = vpop.f32.mrb[0].mxu0
        %v1206 = vadd.f32 %v915, %v1205
        %v1207 = vpop.f32.mrb[0].mxu0
        %v1208 = vpop.f32.mrb[0].mxu0
        %v1209 = vpop.f32.mrb[0].mxu0
        %1210 = vdwg.mxu0
        %v1211 = vsel %vm971, %v1206, -inf
        %1212 = vmax.xlane.f32.xlu0 %v1211
        %v1213 = vpop.xlane.xlu0 %1212
        %v1214 = vsub.f32 %v1206, %v1213
        %v1215 = vmul.f32 %v1214, 1.442695
        %v1216 = vpow.pop %v1215
        %v1217 = vsel %vm971, %v1216, 0.0
        %1218 = vadd.xlane.f32.xlu0 %v1217
        %v1219 = vpop.xlane.xlu0 %1218
        %v1220 = vrcp.pop %v1219
        %v1221 = vmul.f32 1.0, %v1220
        %v1222 = vmul.f32 %v1216, %v1221
        %s1223 = scalar_lea.vmem %s657, 16 [#allocation5]
        %1224 = vst.msk [vmem:[%s1223] sm:$0xff] %vm971, %v1222
        %v1225 = vpack.c.bf16 %v1222, %v1222
        %1226 = vrot.lane.b32.xlu0 %v899, 120
        %v1227 = vpop.permute.xlu0 %1226
        %v1229 = vsel %vm971, %v1225, 0
        %v1232 = vsel %vm989, %v1227, 0
        %1234 = vmatprep.subr.bf16.mxu0 0
        %1235 = vmatpush1.bf16.msra.mxu0 %v1232
        %1236 = vmatprep.subr.bf16.mxu0 0
        %1237 = vmatpush1.bf16.msra.mxu0 0
        %1238 = vmatprep.subr.bf16.mxu0 0
        %1239 = vmatpush1.bf16.msra.mxu0 0
        %1240 = vmatprep.subr.bf16.mxu0 0
        %1241 = vmatpush1.bf16.msra.mxu0 0
        %1242 = vmatprep.subr.bf16.mxu0 0
        %1243 = vmatpush1.bf16.msra.mxu0 0
        %1244 = vmatprep.subr.bf16.mxu0 0
        %1245 = vmatpush1.bf16.msra.mxu0 0
        %1246 = vmatprep.subr.bf16.mxu0 0
        %1247 = vmatpush1.bf16.msra.mxu0 0
        %1248 = vmatprep.subr.bf16.mxu0 0
        %1249 = vmatpush1.bf16.msra.mxu0 0
        %1250 = vmatprep.subr.bf16.mxu0 0
        %1251 = vmatpush1.bf16.msra.mxu0 0
        %1252 = vmatprep.subr.bf16.mxu0 0
        %1253 = vmatpush1.bf16.msra.mxu0 0
        %1254 = vmatprep.subr.bf16.mxu0 0
        %1255 = vmatpush1.bf16.msra.mxu0 0
        %1256 = vmatprep.subr.bf16.mxu0 0
        %1257 = vmatpush1.bf16.msra.mxu0 0
        %1258 = vmatprep.subr.bf16.mxu0 0
        %1259 = vmatpush1.bf16.msra.mxu0 0
        %1260 = vmatprep.subr.bf16.mxu0 0
        %1261 = vmatpush1.bf16.msra.mxu0 0
        %1262 = vmatprep.subr.bf16.mxu0 0
        %1263 = vmatpush1.bf16.msra.mxu0 0
        %1264 = vmatprep.subr.bf16.mxu0 0
        %1265 = vmatpush1.bf16.msra.mxu0 0
        %1266 = vmatprep.mubr.bf16.mxu0 0
        %1267 = vmatmul.mubr.bf16.gmra.mrb[0].mxu0 %v1229
        %v1268 = vpop.f32.mrb[0].mxu0
        %v1269 = vadd.f32 0.0, %v1268
        %v1270 = vpop.f32.mrb[0].mxu0
        %v1271 = vpop.f32.mrb[0].mxu0
        %v1272 = vpop.f32.mrb[0].mxu0
        %1273 = vdwg.mxu0
        %v1274 = vpack.c.bf16 %v1269, %v1269
        %v1276 = vunpack.c.l.b16 %v1274
        %v1277 = vpack.c.b16 %v1276, %v1276
        %1278 = vrot.lane.b32.xlu0 %v1277, 8
        %v1279 = vpop.permute.xlu0 %1278
        %vm1281 = vcmask 93248
        %1282 = vst.msk [vmem:[#allocation2] sm:$0xf] %vm1281, %v1279
        %1283 = vrot.lane.b32.xlu0 %v771, 116
        %v1284 = vpop.permute.xlu0 %1283
        %1285 = vrot.lane.b32.xlu0 %v835, 116
        %v1286 = vpop.permute.xlu0 %1285
        %v1288 = vsel %vm924, %v1284, 0
        %v1291 = vsel %vm924, %v1286, 0
        %1293 = vmatprep.subr.bf16.mxu0 0
        %1294 = vmatpush1.bf16.xpose.msra.mxu0 %v1291
        %1295 = vmatprep.subr.bf16.mxu0 0
        %1296 = vmatpush1.bf16.xpose.msra.mxu0 0
        %1297 = vmatprep.subr.bf16.mxu0 0
        %1298 = vmatpush1.bf16.xpose.msra.mxu0 0
        %1299 = vmatprep.subr.bf16.mxu0 0
        %1300 = vmatpush1.bf16.xpose.msra.mxu0 0
        %1301 = vmatprep.subr.bf16.mxu0 0
        %1302 = vmatpush1.bf16.xpose.msra.mxu0 0
        %1303 = vmatprep.subr.bf16.mxu0 0
        %1304 = vmatpush1.bf16.xpose.msra.mxu0 0
        %1305 = vmatprep.subr.bf16.mxu0 0
        %1306 = vmatpush1.bf16.xpose.msra.mxu0 0
        %1307 = vmatprep.subr.bf16.mxu0 0
        %1308 = vmatpush1.bf16.xpose.msra.mxu0 0
        %1309 = vmatprep.subr.bf16.mxu0 0
        %1310 = vmatpush1.bf16.xpose.msra.mxu0 0
        %1311 = vmatprep.subr.bf16.mxu0 0
        %1312 = vmatpush1.bf16.xpose.msra.mxu0 0
        %1313 = vmatprep.subr.bf16.mxu0 0
        %1314 = vmatpush1.bf16.xpose.msra.mxu0 0
        %1315 = vmatprep.subr.bf16.mxu0 0
        %1316 = vmatpush1.bf16.xpose.msra.mxu0 0
        %1317 = vmatprep.subr.bf16.mxu0 0
        %1318 = vmatpush1.bf16.xpose.msra.mxu0 0
        %1319 = vmatprep.subr.bf16.mxu0 0
        %1320 = vmatpush1.bf16.xpose.msra.mxu0 0
        %1321 = vmatprep.subr.bf16.mxu0 0
        %1322 = vmatpush1.bf16.xpose.msra.mxu0 0
        %1323 = vmatprep.subr.bf16.mxu0 0
        %1324 = vmatpush1.bf16.xpose.msra.mxu0 0
        %1325 = vmatprep.mubr.bf16.mxu0 0
        %1326 = vmatmul.mubr.bf16.gmra.mrb[0].mxu0 %v1288
        %v1327 = vpop.f32.mrb[0].mxu0
        %v1328 = vadd.f32 %v915, %v1327
        %v1329 = vpop.f32.mrb[0].mxu0
        %v1330 = vpop.f32.mrb[0].mxu0
        %v1331 = vpop.f32.mrb[0].mxu0
        %1332 = vdwg.mxu0
        %v1333 = vsel %vm971, %v1328, -inf
        %1334 = vmax.xlane.f32.xlu0 %v1333
        %v1335 = vpop.xlane.xlu0 %1334
        %v1336 = vsub.f32 %v1328, %v1335
        %v1337 = vmul.f32 %v1336, 1.442695
        %v1338 = vpow.pop %v1337
        %v1339 = vsel %vm971, %v1338, 0.0
        %1340 = vadd.xlane.f32.xlu0 %v1339
        %v1341 = vpop.xlane.xlu0 %1340
        %v1342 = vrcp.pop %v1341
        %v1343 = vmul.f32 1.0, %v1342
        %v1344 = vmul.f32 %v1338, %v1343
        %s1345 = scalar_lea.vmem %s657, 24 [#allocation5]
        %1346 = vst.msk [vmem:[%s1345] sm:$0xff] %vm971, %v1344
        %v1347 = vpack.c.bf16 %v1344, %v1344
        %1348 = vrot.lane.b32.xlu0 %v899, 116
        %v1349 = vpop.permute.xlu0 %1348
        %v1351 = vsel %vm971, %v1347, 0
        %v1354 = vsel %vm989, %v1349, 0
        %1356 = vmatprep.subr.bf16.mxu0 0
        %1357 = vmatpush1.bf16.msra.mxu0 %v1354
        %1358 = vmatprep.subr.bf16.mxu0 0
        %1359 = vmatpush1.bf16.msra.mxu0 0
        %1360 = vmatprep.subr.bf16.mxu0 0
        %1361 = vmatpush1.bf16.msra.mxu0 0
        %1362 = vmatprep.subr.bf16.mxu0 0
        %1363 = vmatpush1.bf16.msra.mxu0 0
        %1364 = vmatprep.subr.bf16.mxu0 0
        %1365 = vmatpush1.bf16.msra.mxu0 0
        %1366 = vmatprep.subr.bf16.mxu0 0
        %1367 = vmatpush1.bf16.msra.mxu0 0
        %1368 = vmatprep.subr.bf16.mxu0 0
        %1369 = vmatpush1.bf16.msra.mxu0 0
        %1370 = vmatprep.subr.bf16.mxu0 0
        %1371 = vmatpush1.bf16.msra.mxu0 0
        %1372 = vmatprep.subr.bf16.mxu0 0
        %1373 = vmatpush1.bf16.msra.mxu0 0
        %1374 = vmatprep.subr.bf16.mxu0 0
        %1375 = vmatpush1.bf16.msra.mxu0 0
        %1376 = vmatprep.subr.bf16.mxu0 0
        %1377 = vmatpush1.bf16.msra.mxu0 0
        %1378 = vmatprep.subr.bf16.mxu0 0
        %1379 = vmatpush1.bf16.msra.mxu0 0
        %1380 = vmatprep.subr.bf16.mxu0 0
        %1381 = vmatpush1.bf16.msra.mxu0 0
        %1382 = vmatprep.subr.bf16.mxu0 0
        %1383 = vmatpush1.bf16.msra.mxu0 0
        %1384 = vmatprep.subr.bf16.mxu0 0
        %1385 = vmatpush1.bf16.msra.mxu0 0
        %1386 = vmatprep.subr.bf16.mxu0 0
        %1387 = vmatpush1.bf16.msra.mxu0 0
        %1388 = vmatprep.mubr.bf16.mxu0 0
        %1389 = vmatmul.mubr.bf16.gmra.mrb[0].mxu0 %v1351
        %v1390 = vpop.f32.mrb[0].mxu0
        %v1391 = vadd.f32 0.0, %v1390
        %v1392 = vpop.f32.mrb[0].mxu0
        %v1393 = vpop.f32.mrb[0].mxu0
        %v1394 = vpop.f32.mrb[0].mxu0
        %1395 = vdwg.mxu0
        %v1396 = vpack.c.bf16 %v1391, %v1391
        %v1398 = vunpack.c.l.b16 %v1396
        %v1399 = vpack.c.b16 %v1398, %v1398
        %1400 = vrot.lane.b32.xlu0 %v1399, 12
        %v1401 = vpop.permute.xlu0 %1400
        %vm1403 = vcmask 126048
        %1404 = vst.msk [vmem:[#allocation2] sm:$0xf] %vm1403, %v1401
        %1405 = vrot.lane.b32.xlu0 %v771, 112
        %v1406 = vpop.permute.xlu0 %1405
        %1407 = vrot.lane.b32.xlu0 %v835, 112
        %v1408 = vpop.permute.xlu0 %1407
        %v1410 = vsel %vm924, %v1406, 0
        %v1413 = vsel %vm924, %v1408, 0
        %1415 = vmatprep.subr.bf16.mxu0 0
        %1416 = vmatpush1.bf16.xpose.msra.mxu0 %v1413
        %1417 = vmatprep.subr.bf16.mxu0 0
        %1418 = vmatpush1.bf16.xpose.msra.mxu0 0
        %1419 = vmatprep.subr.bf16.mxu0 0
        %1420 = vmatpush1.bf16.xpose.msra.mxu0 0
        %1421 = vmatprep.subr.bf16.mxu0 0
        %1422 = vmatpush1.bf16.xpose.msra.mxu0 0
        %1423 = vmatprep.subr.bf16.mxu0 0
        %1424 = vmatpush1.bf16.xpose.msra.mxu0 0
        %1425 = vmatprep.subr.bf16.mxu0 0
        %1426 = vmatpush1.bf16.xpose.msra.mxu0 0
        %1427 = vmatprep.subr.bf16.mxu0 0
        %1428 = vmatpush1.bf16.xpose.msra.mxu0 0
        %1429 = vmatprep.subr.bf16.mxu0 0
        %1430 = vmatpush1.bf16.xpose.msra.mxu0 0
        %1431 = vmatprep.subr.bf16.mxu0 0
        %1432 = vmatpush1.bf16.xpose.msra.mxu0 0
        %1433 = vmatprep.subr.bf16.mxu0 0
        %1434 = vmatpush1.bf16.xpose.msra.mxu0 0
        %1435 = vmatprep.subr.bf16.mxu0 0
        %1436 = vmatpush1.bf16.xpose.msra.mxu0 0
        %1437 = vmatprep.subr.bf16.mxu0 0
        %1438 = vmatpush1.bf16.xpose.msra.mxu0 0
        %1439 = vmatprep.subr.bf16.mxu0 0
        %1440 = vmatpush1.bf16.xpose.msra.mxu0 0
        %1441 = vmatprep.subr.bf16.mxu0 0
        %1442 = vmatpush1.bf16.xpose.msra.mxu0 0
        %1443 = vmatprep.subr.bf16.mxu0 0
        %1444 = vmatpush1.bf16.xpose.msra.mxu0 0
        %1445 = vmatprep.subr.bf16.mxu0 0
        %1446 = vmatpush1.bf16.xpose.msra.mxu0 0
        %1447 = vmatprep.mubr.bf16.mxu0 0
        %1448 = vmatmul.mubr.bf16.gmra.mrb[0].mxu0 %v1410
        %v1449 = vpop.f32.mrb[0].mxu0
        %v1450 = vadd.f32 %v919, %v1449
        %v1451 = vpop.f32.mrb[0].mxu0
        %v1452 = vpop.f32.mrb[0].mxu0
        %v1453 = vpop.f32.mrb[0].mxu0
        %1454 = vdwg.mxu0
        %v1455 = vsel %vm971, %v1450, -inf
        %1456 = vmax.xlane.f32.xlu0 %v1455
        %v1457 = vpop.xlane.xlu0 %1456
        %v1458 = vsub.f32 %v1450, %v1457
        %v1459 = vmul.f32 %v1458, 1.442695
        %v1460 = vpow.pop %v1459
        %v1461 = vsel %vm971, %v1460, 0.0
        %1462 = vadd.xlane.f32.xlu0 %v1461
        %v1463 = vpop.xlane.xlu0 %1462
        %v1464 = vrcp.pop %v1463
        %v1465 = vmul.f32 1.0, %v1464
        %v1466 = vmul.f32 %v1460, %v1465
        %s1467 = scalar_lea.vmem %s657, 32 [#allocation5]
        %1468 = vst.msk [vmem:[%s1467] sm:$0xff] %vm971, %v1466
        %v1469 = vpack.c.bf16 %v1466, %v1466
        %1470 = vrot.lane.b32.xlu0 %v899, 112
        %v1471 = vpop.permute.xlu0 %1470
        %v1473 = vsel %vm971, %v1469, 0
        %v1476 = vsel %vm989, %v1471, 0
        %1478 = vmatprep.subr.bf16.mxu0 0
        %1479 = vmatpush1.bf16.msra.mxu0 %v1476
        %1480 = vmatprep.subr.bf16.mxu0 0
        %1481 = vmatpush1.bf16.msra.mxu0 0
        %1482 = vmatprep.subr.bf16.mxu0 0
        %1483 = vmatpush1.bf16.msra.mxu0 0
        %1484 = vmatprep.subr.bf16.mxu0 0
        %1485 = vmatpush1.bf16.msra.mxu0 0
        %1486 = vmatprep.subr.bf16.mxu0 0
        %1487 = vmatpush1.bf16.msra.mxu0 0
        %1488 = vmatprep.subr.bf16.mxu0 0
        %1489 = vmatpush1.bf16.msra.mxu0 0
        %1490 = vmatprep.subr.bf16.mxu0 0
        %1491 = vmatpush1.bf16.msra.mxu0 0
        %1492 = vmatprep.subr.bf16.mxu0 0
        %1493 = vmatpush1.bf16.msra.mxu0 0
        %1494 = vmatprep.subr.bf16.mxu0 0
        %1495 = vmatpush1.bf16.msra.mxu0 0
        %1496 = vmatprep.subr.bf16.mxu0 0
        %1497 = vmatpush1.bf16.msra.mxu0 0
        %1498 = vmatprep.subr.bf16.mxu0 0
        %1499 = vmatpush1.bf16.msra.mxu0 0
        %1500 = vmatprep.subr.bf16.mxu0 0
        %1501 = vmatpush1.bf16.msra.mxu0 0
        %1502 = vmatprep.subr.bf16.mxu0 0
        %1503 = vmatpush1.bf16.msra.mxu0 0
        %1504 = vmatprep.subr.bf16.mxu0 0
        %1505 = vmatpush1.bf16.msra.mxu0 0
        %1506 = vmatprep.subr.bf16.mxu0 0
        %1507 = vmatpush1.bf16.msra.mxu0 0
        %1508 = vmatprep.subr.bf16.mxu0 0
        %1509 = vmatpush1.bf16.msra.mxu0 0
        %1510 = vmatprep.mubr.bf16.mxu0 0
        %1511 = vmatmul.mubr.bf16.gmra.mrb[0].mxu0 %v1473
        %v1512 = vpop.f32.mrb[0].mxu0
        %v1513 = vadd.f32 0.0, %v1512
        %v1514 = vpop.f32.mrb[0].mxu0
        %v1515 = vpop.f32.mrb[0].mxu0
        %v1516 = vpop.f32.mrb[0].mxu0
        %1517 = vdwg.mxu0
        %v1518 = vpack.c.bf16 %v1513, %v1513
        %v1520 = vunpack.c.l.b16 %v1518
        %v1521 = vpack.c.b16 %v1520, %v1520
        %1522 = vrot.lane.b32.xlu0 %v1521, 16
        %v1523 = vpop.permute.xlu0 %1522
        %vm1525 = vcmask 158848
        %1526 = vst.msk [vmem:[#allocation2] sm:$0xf] %vm1525, %v1523
        %1527 = vrot.lane.b32.xlu0 %v771, 108
        %v1528 = vpop.permute.xlu0 %1527
        %1529 = vrot.lane.b32.xlu0 %v835, 108
        %v1530 = vpop.permute.xlu0 %1529
        %v1532 = vsel %vm924, %v1528, 0
        %v1535 = vsel %vm924, %v1530, 0
        %1537 = vmatprep.subr.bf16.mxu0 0
        %1538 = vmatpush1.bf16.xpose.msra.mxu0 %v1535
        %1539 = vmatprep.subr.bf16.mxu0 0
        %1540 = vmatpush1.bf16.xpose.msra.mxu0 0
        %1541 = vmatprep.subr.bf16.mxu0 0
        %1542 = vmatpush1.bf16.xpose.msra.mxu0 0
        %1543 = vmatprep.subr.bf16.mxu0 0
        %1544 = vmatpush1.bf16.xpose.msra.mxu0 0
        %1545 = vmatprep.subr.bf16.mxu0 0
        %1546 = vmatpush1.bf16.xpose.msra.mxu0 0
        %1547 = vmatprep.subr.bf16.mxu0 0
        %1548 = vmatpush1.bf16.xpose.msra.mxu0 0
        %1549 = vmatprep.subr.bf16.mxu0 0
        %1550 = vmatpush1.bf16.xpose.msra.mxu0 0
        %1551 = vmatprep.subr.bf16.mxu0 0
        %1552 = vmatpush1.bf16.xpose.msra.mxu0 0
        %1553 = vmatprep.subr.bf16.mxu0 0
        %1554 = vmatpush1.bf16.xpose.msra.mxu0 0
        %1555 = vmatprep.subr.bf16.mxu0 0
        %1556 = vmatpush1.bf16.xpose.msra.mxu0 0
        %1557 = vmatprep.subr.bf16.mxu0 0
        %1558 = vmatpush1.bf16.xpose.msra.mxu0 0
        %1559 = vmatprep.subr.bf16.mxu0 0
        %1560 = vmatpush1.bf16.xpose.msra.mxu0 0
        %1561 = vmatprep.subr.bf16.mxu0 0
        %1562 = vmatpush1.bf16.xpose.msra.mxu0 0
        %1563 = vmatprep.subr.bf16.mxu0 0
        %1564 = vmatpush1.bf16.xpose.msra.mxu0 0
        %1565 = vmatprep.subr.bf16.mxu0 0
        %1566 = vmatpush1.bf16.xpose.msra.mxu0 0
        %1567 = vmatprep.subr.bf16.mxu0 0
        %1568 = vmatpush1.bf16.xpose.msra.mxu0 0
        %1569 = vmatprep.mubr.bf16.mxu0 0
        %1570 = vmatmul.mubr.bf16.gmra.mrb[0].mxu0 %v1532
        %v1571 = vpop.f32.mrb[0].mxu0
        %v1572 = vadd.f32 %v923, %v1571
        %v1573 = vpop.f32.mrb[0].mxu0
        %v1574 = vpop.f32.mrb[0].mxu0
        %v1575 = vpop.f32.mrb[0].mxu0
        %1576 = vdwg.mxu0
        %v1577 = vsel %vm971, %v1572, -inf
        %1578 = vmax.xlane.f32.xlu0 %v1577
        %v1579 = vpop.xlane.xlu0 %1578
        %v1580 = vsub.f32 %v1572, %v1579
        %v1581 = vmul.f32 %v1580, 1.442695
        %v1582 = vpow.pop %v1581
        %v1583 = vsel %vm971, %v1582, 0.0
        %1584 = vadd.xlane.f32.xlu0 %v1583
        %v1585 = vpop.xlane.xlu0 %1584
        %v1586 = vrcp.pop %v1585
        %v1587 = vmul.f32 1.0, %v1586
        %v1588 = vmul.f32 %v1582, %v1587
        %s1589 = scalar_lea.vmem %s657, 40 [#allocation5]
        %1590 = vst.msk [vmem:[%s1589] sm:$0xff] %vm971, %v1588
        %v1591 = vpack.c.bf16 %v1588, %v1588
        %1592 = vrot.lane.b32.xlu0 %v899, 108
        %v1593 = vpop.permute.xlu0 %1592
        %v1595 = vsel %vm971, %v1591, 0
        %v1598 = vsel %vm989, %v1593, 0
        %1600 = vmatprep.subr.bf16.mxu0 0
        %1601 = vmatpush1.bf16.msra.mxu0 %v1598
        %1602 = vmatprep.subr.bf16.mxu0 0
        %1603 = vmatpush1.bf16.msra.mxu0 0
        %1604 = vmatprep.subr.bf16.mxu0 0
        %1605 = vmatpush1.bf16.msra.mxu0 0
        %1606 = vmatprep.subr.bf16.mxu0 0
        %1607 = vmatpush1.bf16.msra.mxu0 0
        %1608 = vmatprep.subr.bf16.mxu0 0
        %1609 = vmatpush1.bf16.msra.mxu0 0
        %1610 = vmatprep.subr.bf16.mxu0 0
        %1611 = vmatpush1.bf16.msra.mxu0 0
        %1612 = vmatprep.subr.bf16.mxu0 0
        %1613 = vmatpush1.bf16.msra.mxu0 0
        %1614 = vmatprep.subr.bf16.mxu0 0
        %1615 = vmatpush1.bf16.msra.mxu0 0
        %1616 = vmatprep.subr.bf16.mxu0 0
        %1617 = vmatpush1.bf16.msra.mxu0 0
        %1618 = vmatprep.subr.bf16.mxu0 0
        %1619 = vmatpush1.bf16.msra.mxu0 0
        %1620 = vmatprep.subr.bf16.mxu0 0
        %1621 = vmatpush1.bf16.msra.mxu0 0
        %1622 = vmatprep.subr.bf16.mxu0 0
        %1623 = vmatpush1.bf16.msra.mxu0 0
        %1624 = vmatprep.subr.bf16.mxu0 0
        %1625 = vmatpush1.bf16.msra.mxu0 0
        %1626 = vmatprep.subr.bf16.mxu0 0
        %1627 = vmatpush1.bf16.msra.mxu0 0
        %1628 = vmatprep.subr.bf16.mxu0 0
        %1629 = vmatpush1.bf16.msra.mxu0 0
        %1630 = vmatprep.subr.bf16.mxu0 0
        %1631 = vmatpush1.bf16.msra.mxu0 0
        %1632 = vmatprep.mubr.bf16.mxu0 0
        %1633 = vmatmul.mubr.bf16.gmra.mrb[0].mxu0 %v1595
        %v1634 = vpop.f32.mrb[0].mxu0
        %v1635 = vadd.f32 0.0, %v1634
        %v1636 = vpop.f32.mrb[0].mxu0
        %v1637 = vpop.f32.mrb[0].mxu0
        %v1638 = vpop.f32.mrb[0].mxu0
        %1639 = vdwg.mxu0
        %v1640 = vpack.c.bf16 %v1635, %v1635
        %v1642 = vunpack.c.l.b16 %v1640
        %v1643 = vpack.c.b16 %v1642, %v1642
        %1644 = vrot.lane.b32.xlu0 %v1643, 20
        %v1645 = vpop.permute.xlu0 %1644
        %vm1647 = vcmask 191648
        %1648 = vst.msk [vmem:[#allocation2] sm:$0xf] %vm1647, %v1645
        %1649 = vrot.lane.b32.xlu0 %v771, 104
        %v1650 = vpop.permute.xlu0 %1649
        %1651 = vrot.lane.b32.xlu0 %v835, 104
        %v1652 = vpop.permute.xlu0 %1651
        %v1654 = vsel %vm924, %v1650, 0
        %v1657 = vsel %vm924, %v1652, 0
        %1659 = vmatprep.subr.bf16.mxu0 0
        %1660 = vmatpush1.bf16.xpose.msra.mxu0 %v1657
        %1661 = vmatprep.subr.bf16.mxu0 0
        %1662 = vmatpush1.bf16.xpose.msra.mxu0 0
        %1663 = vmatprep.subr.bf16.mxu0 0
        %1664 = vmatpush1.bf16.xpose.msra.mxu0 0
        %1665 = vmatprep.subr.bf16.mxu0 0
        %1666 = vmatpush1.bf16.xpose.msra.mxu0 0
        %1667 = vmatprep.subr.bf16.mxu0 0
        %1668 = vmatpush1.bf16.xpose.msra.mxu0 0
        %1669 = vmatprep.subr.bf16.mxu0 0
        %1670 = vmatpush1.bf16.xpose.msra.mxu0 0
        %1671 = vmatprep.subr.bf16.mxu0 0
        %1672 = vmatpush1.bf16.xpose.msra.mxu0 0
        %1673 = vmatprep.subr.bf16.mxu0 0
        %1674 = vmatpush1.bf16.xpose.msra.mxu0 0
        %1675 = vmatprep.subr.bf16.mxu0 0
        %1676 = vmatpush1.bf16.xpose.msra.mxu0 0
        %1677 = vmatprep.subr.bf16.mxu0 0
        %1678 = vmatpush1.bf16.xpose.msra.mxu0 0
        %1679 = vmatprep.subr.bf16.mxu0 0
        %1680 = vmatpush1.bf16.xpose.msra.mxu0 0
        %1681 = vmatprep.subr.bf16.mxu0 0
        %1682 = vmatpush1.bf16.xpose.msra.mxu0 0
        %1683 = vmatprep.subr.bf16.mxu0 0
        %1684 = vmatpush1.bf16.xpose.msra.mxu0 0
        %1685 = vmatprep.subr.bf16.mxu0 0
        %1686 = vmatpush1.bf16.xpose.msra.mxu0 0
        %1687 = vmatprep.subr.bf16.mxu0 0
        %1688 = vmatpush1.bf16.xpose.msra.mxu0 0
        %1689 = vmatprep.subr.bf16.mxu0 0
        %1690 = vmatpush1.bf16.xpose.msra.mxu0 0
        %1691 = vmatprep.mubr.bf16.mxu0 0
        %1692 = vmatmul.mubr.bf16.gmra.mrb[0].mxu0 %v1654
        %v1693 = vpop.f32.mrb[0].mxu0
        %v1694 = vadd.f32 %v909, %v1693
        %v1695 = vpop.f32.mrb[0].mxu0
        %v1696 = vpop.f32.mrb[0].mxu0
        %v1697 = vpop.f32.mrb[0].mxu0
        %1698 = vdwg.mxu0
        %v1699 = vsel %vm971, %v1694, -inf
        %1700 = vmax.xlane.f32.xlu0 %v1699
        %v1701 = vpop.xlane.xlu0 %1700
        %v1702 = vsub.f32 %v1694, %v1701
        %v1703 = vmul.f32 %v1702, 1.442695
        %v1704 = vpow.pop %v1703
        %v1705 = vsel %vm971, %v1704, 0.0
        %1706 = vadd.xlane.f32.xlu0 %v1705
        %v1707 = vpop.xlane.xlu0 %1706
        %v1708 = vrcp.pop %v1707
        %v1709 = vmul.f32 1.0, %v1708
        %v1710 = vmul.f32 %v1704, %v1709
        %s1711 = scalar_lea.vmem %s657, 48 [#allocation5]
        %1712 = vst.msk [vmem:[%s1711] sm:$0xff] %vm971, %v1710
        %v1713 = vpack.c.bf16 %v1710, %v1710
        %1714 = vrot.lane.b32.xlu0 %v899, 104
        %v1715 = vpop.permute.xlu0 %1714
        %v1717 = vsel %vm971, %v1713, 0
        %v1720 = vsel %vm989, %v1715, 0
        %1722 = vmatprep.subr.bf16.mxu0 0
        %1723 = vmatpush1.bf16.msra.mxu0 %v1720
        %1724 = vmatprep.subr.bf16.mxu0 0
        %1725 = vmatpush1.bf16.msra.mxu0 0
        %1726 = vmatprep.subr.bf16.mxu0 0
        %1727 = vmatpush1.bf16.msra.mxu0 0
        %1728 = vmatprep.subr.bf16.mxu0 0
        %1729 = vmatpush1.bf16.msra.mxu0 0
        %1730 = vmatprep.subr.bf16.mxu0 0
        %1731 = vmatpush1.bf16.msra.mxu0 0
        %1732 = vmatprep.subr.bf16.mxu0 0
        %1733 = vmatpush1.bf16.msra.mxu0 0
        %1734 = vmatprep.subr.bf16.mxu0 0
        %1735 = vmatpush1.bf16.msra.mxu0 0
        %1736 = vmatprep.subr.bf16.mxu0 0
        %1737 = vmatpush1.bf16.msra.mxu0 0
        %1738 = vmatprep.subr.bf16.mxu0 0
        %1739 = vmatpush1.bf16.msra.mxu0 0
        %1740 = vmatprep.subr.bf16.mxu0 0
        %1741 = vmatpush1.bf16.msra.mxu0 0
        %1742 = vmatprep.subr.bf16.mxu0 0
        %1743 = vmatpush1.bf16.msra.mxu0 0
        %1744 = vmatprep.subr.bf16.mxu0 0
        %1745 = vmatpush1.bf16.msra.mxu0 0
        %1746 = vmatprep.subr.bf16.mxu0 0
        %1747 = vmatpush1.bf16.msra.mxu0 0
        %1748 = vmatprep.subr.bf16.mxu0 0
        %1749 = vmatpush1.bf16.msra.mxu0 0
        %1750 = vmatprep.subr.bf16.mxu0 0
        %1751 = vmatpush1.bf16.msra.mxu0 0
        %1752 = vmatprep.subr.bf16.mxu0 0
        %1753 = vmatpush1.bf16.msra.mxu0 0
        %1754 = vmatprep.mubr.bf16.mxu0 0
        %1755 = vmatmul.mubr.bf16.gmra.mrb[0].mxu0 %v1717
        %v1756 = vpop.f32.mrb[0].mxu0
        %v1757 = vadd.f32 0.0, %v1756
        %v1758 = vpop.f32.mrb[0].mxu0
        %v1759 = vpop.f32.mrb[0].mxu0
        %v1760 = vpop.f32.mrb[0].mxu0
        %1761 = vdwg.mxu0
        %v1762 = vpack.c.bf16 %v1757, %v1757
        %v1764 = vunpack.c.l.b16 %v1762
        %v1765 = vpack.c.b16 %v1764, %v1764
        %1766 = vrot.lane.b32.xlu0 %v1765, 24
        %v1767 = vpop.permute.xlu0 %1766
        %vm1769 = vcmask 224448
        %1770 = vst.msk [vmem:[#allocation2] sm:$0xf] %vm1769, %v1767
        %1771 = vrot.lane.b32.xlu0 %v771, 100
        %v1772 = vpop.permute.xlu0 %1771
        %1773 = vrot.lane.b32.xlu0 %v835, 100
        %v1774 = vpop.permute.xlu0 %1773
        %v1776 = vsel %vm924, %v1772, 0
        %v1779 = vsel %vm924, %v1774, 0
        %1781 = vmatprep.subr.bf16.mxu0 0
        %1782 = vmatpush1.bf16.xpose.msra.mxu0 %v1779
        %1783 = vmatprep.subr.bf16.mxu0 0
        %1784 = vmatpush1.bf16.xpose.msra.mxu0 0
        %1785 = vmatprep.subr.bf16.mxu0 0
        %1786 = vmatpush1.bf16.xpose.msra.mxu0 0
        %1787 = vmatprep.subr.bf16.mxu0 0
        %1788 = vmatpush1.bf16.xpose.msra.mxu0 0
        %1789 = vmatprep.subr.bf16.mxu0 0
        %1790 = vmatpush1.bf16.xpose.msra.mxu0 0
        %1791 = vmatprep.subr.bf16.mxu0 0
        %1792 = vmatpush1.bf16.xpose.msra.mxu0 0
        %1793 = vmatprep.subr.bf16.mxu0 0
        %1794 = vmatpush1.bf16.xpose.msra.mxu0 0
        %1795 = vmatprep.subr.bf16.mxu0 0
        %1796 = vmatpush1.bf16.xpose.msra.mxu0 0
        %1797 = vmatprep.subr.bf16.mxu0 0
        %1798 = vmatpush1.bf16.xpose.msra.mxu0 0
        %1799 = vmatprep.subr.bf16.mxu0 0
        %1800 = vmatpush1.bf16.xpose.msra.mxu0 0
        %1801 = vmatprep.subr.bf16.mxu0 0
        %1802 = vmatpush1.bf16.xpose.msra.mxu0 0
        %1803 = vmatprep.subr.bf16.mxu0 0
        %1804 = vmatpush1.bf16.xpose.msra.mxu0 0
        %1805 = vmatprep.subr.bf16.mxu0 0
        %1806 = vmatpush1.bf16.xpose.msra.mxu0 0
        %1807 = vmatprep.subr.bf16.mxu0 0
        %1808 = vmatpush1.bf16.xpose.msra.mxu0 0
        %1809 = vmatprep.subr.bf16.mxu0 0
        %1810 = vmatpush1.bf16.xpose.msra.mxu0 0
        %1811 = vmatprep.subr.bf16.mxu0 0
        %1812 = vmatpush1.bf16.xpose.msra.mxu0 0
        %1813 = vmatprep.mubr.bf16.mxu0 0
        %1814 = vmatmul.mubr.bf16.gmra.mrb[0].mxu0 %v1776
        %v1815 = vpop.f32.mrb[0].mxu0
        %v1816 = vadd.f32 %v909, %v1815
        %v1817 = vpop.f32.mrb[0].mxu0
        %v1818 = vpop.f32.mrb[0].mxu0
        %v1819 = vpop.f32.mrb[0].mxu0
        %1820 = vdwg.mxu0
        %v1821 = vsel %vm971, %v1816, -inf
        %1822 = vmax.xlane.f32.xlu0 %v1821
        %v1823 = vpop.xlane.xlu0 %1822
        %v1824 = vsub.f32 %v1816, %v1823
        %v1825 = vmul.f32 %v1824, 1.442695
        %v1826 = vpow.pop %v1825
        %v1827 = vsel %vm971, %v1826, 0.0
        %1828 = vadd.xlane.f32.xlu0 %v1827
        %v1829 = vpop.xlane.xlu0 %1828
        %v1830 = vrcp.pop %v1829
        %v1831 = vmul.f32 1.0, %v1830
        %v1832 = vmul.f32 %v1826, %v1831
        %s1833 = scalar_lea.vmem %s657, 56 [#allocation5]
        %1834 = vst.msk [vmem:[%s1833] sm:$0xff] %vm971, %v1832
        %v1835 = vpack.c.bf16 %v1832, %v1832
        %1836 = vrot.lane.b32.xlu0 %v899, 100
        %v1837 = vpop.permute.xlu0 %1836
        %v1839 = vsel %vm971, %v1835, 0
        %v1842 = vsel %vm989, %v1837, 0
        %1844 = vmatprep.subr.bf16.mxu0 0
        %1845 = vmatpush1.bf16.msra.mxu0 %v1842
        %1846 = vmatprep.subr.bf16.mxu0 0
        %1847 = vmatpush1.bf16.msra.mxu0 0
        %1848 = vmatprep.subr.bf16.mxu0 0
        %1849 = vmatpush1.bf16.msra.mxu0 0
        %1850 = vmatprep.subr.bf16.mxu0 0
        %1851 = vmatpush1.bf16.msra.mxu0 0
        %1852 = vmatprep.subr.bf16.mxu0 0
        %1853 = vmatpush1.bf16.msra.mxu0 0
        %1854 = vmatprep.subr.bf16.mxu0 0
        %1855 = vmatpush1.bf16.msra.mxu0 0
        %1856 = vmatprep.subr.bf16.mxu0 0
        %1857 = vmatpush1.bf16.msra.mxu0 0
        %1858 = vmatprep.subr.bf16.mxu0 0
        %1859 = vmatpush1.bf16.msra.mxu0 0
        %1860 = vmatprep.subr.bf16.mxu0 0
        %1861 = vmatpush1.bf16.msra.mxu0 0
        %1862 = vmatprep.subr.bf16.mxu0 0
        %1863 = vmatpush1.bf16.msra.mxu0 0
        %1864 = vmatprep.subr.bf16.mxu0 0
        %1865 = vmatpush1.bf16.msra.mxu0 0
        %1866 = vmatprep.subr.bf16.mxu0 0
        %1867 = vmatpush1.bf16.msra.mxu0 0
        %1868 = vmatprep.subr.bf16.mxu0 0
        %1869 = vmatpush1.bf16.msra.mxu0 0
        %1870 = vmatprep.subr.bf16.mxu0 0
        %1871 = vmatpush1.bf16.msra.mxu0 0
        %1872 = vmatprep.subr.bf16.mxu0 0
        %1873 = vmatpush1.bf16.msra.mxu0 0
        %1874 = vmatprep.subr.bf16.mxu0 0
        %1875 = vmatpush1.bf16.msra.mxu0 0
        %1876 = vmatprep.mubr.bf16.mxu0 0
        %1877 = vmatmul.mubr.bf16.gmra.mrb[0].mxu0 %v1839
        %v1878 = vpop.f32.mrb[0].mxu0
        %v1879 = vadd.f32 0.0, %v1878
        %v1880 = vpop.f32.mrb[0].mxu0
        %v1881 = vpop.f32.mrb[0].mxu0
        %v1882 = vpop.f32.mrb[0].mxu0
        %1883 = vdwg.mxu0
        %v1884 = vpack.c.bf16 %v1879, %v1879
        %v1886 = vunpack.c.l.b16 %v1884
        %v1887 = vpack.c.b16 %v1886, %v1886
        %1888 = vrot.lane.b32.xlu0 %v1887, 28
        %v1889 = vpop.permute.xlu0 %1888
        %vm1891 = vcmask 257248
        %1892 = vst.msk [vmem:[#allocation2] sm:$0xf] %vm1891, %v1889
        %v1893 = vld [vmem:[#allocation2] sm:$0xf]
        %v1894 = vld [vmem:[%s9] sm:$0xf]
        %v1895 = vld [vmem:[%s9 + $0x4] sm:$0xf]
        %v1896 = vld [vmem:[%s9 + $0x8] sm:$0xf]
        %v1897 = vld [vmem:[%s9 + $0xc] sm:$0xf]
        %v1902 = vunpack.c.l.b16 %v1894
        %v1903 = vunpack.c.l.b16 %v1895
        %v1904 = vunpack.c.l.b16 %v1896
        %v1905 = vunpack.c.l.b16 %v1897
        %v1906 = vpack.c.b16 %v1903, %v1902
        %v1907 = vpack.c.b16 %v1905, %v1904
        %v1911 = vsel %vm674, %v1893, 0
        %1913 = vmatprep.subr.bf16.mxu0 0
        %1914 = vmatpush1.bf16.msra.mxu0 %v1906
        %1915 = vmatprep.subr.bf16.mxu0 0
        %1916 = vmatpush1.bf16.msra.mxu0 %v1907
        %1917 = vmatprep.subr.bf16.mxu0 0
        %1918 = vmatpush1.bf16.msra.mxu0 0
        %1919 = vmatprep.subr.bf16.mxu0 0
        %1920 = vmatpush1.bf16.msra.mxu0 0
        %1921 = vmatprep.subr.bf16.mxu0 0
        %1922 = vmatpush1.bf16.msra.mxu0 0
        %1923 = vmatprep.subr.bf16.mxu0 0
        %1924 = vmatpush1.bf16.msra.mxu0 0
        %1925 = vmatprep.subr.bf16.mxu0 0
        %1926 = vmatpush1.bf16.msra.mxu0 0
        %1927 = vmatprep.subr.bf16.mxu0 0
        %1928 = vmatpush1.bf16.msra.mxu0 0
        %1929 = vmatprep.subr.bf16.mxu0 0
        %1930 = vmatpush1.bf16.msra.mxu0 0
        %1931 = vmatprep.subr.bf16.mxu0 0
        %1932 = vmatpush1.bf16.msra.mxu0 0
        %1933 = vmatprep.subr.bf16.mxu0 0
        %1934 = vmatpush1.bf16.msra.mxu0 0
        %1935 = vmatprep.subr.bf16.mxu0 0
        %1936 = vmatpush1.bf16.msra.mxu0 0
        %1937 = vmatprep.subr.bf16.mxu0 0
        %1938 = vmatpush1.bf16.msra.mxu0 0
        %1939 = vmatprep.subr.bf16.mxu0 0
        %1940 = vmatpush1.bf16.msra.mxu0 0
        %1941 = vmatprep.subr.bf16.mxu0 0
        %1942 = vmatpush1.bf16.msra.mxu0 0
        %1943 = vmatprep.subr.bf16.mxu0 0
        %1944 = vmatpush1.bf16.msra.mxu0 0
        %1945 = vmatprep.mubr.bf16.mxu0 0
        %1946 = vmatmul.mubr.bf16.gmra.mrb[0].mxu0 %v1911
        %v1947 = vpop.f32.mrb[0].mxu0
        %v1948 = vadd.f32 0.0, %v1947
        %v1949 = vpop.f32.mrb[0].mxu0
        %v1950 = vpop.f32.mrb[0].mxu0
        %v1951 = vpop.f32.mrb[0].mxu0
        %1952 = vdwg.mxu0
        %v1953 = vadd.f32 %v671, %v1948
        %v1954 = vld [vmem:[%s10] sm:$0x1]
        %v1956 = vlaneseq
        %v1957 = vshrl.u32 %v1956, 7
        %v1958 = vsub.s32 0, %v1957
        %v1959 = vrot.slane %v1954, %v1958
        %v1961 = vadd.f32 %v1953, %v1959
        %v1962 = vld [vmem:[%s17] sm:$0x1]
        %v1963 = vld [vmem:[%s18] sm:$0x1]
        %v1964 = vsel %vm674, %v1961, 0.0
        %1965 = vadd.xlane.f32.xlu0 %v1964
        %v1966 = vpop.xlane.xlu0 %1965
        %v1967 = vmul.f32 %v1966, %v678
        %v1968 = vsub.f32 %v1961, %v1967
        %v1969 = vmul.f32 %v1968, %v1968
        %v1970 = vsel %vm674, %v1969, 0.0
        %1971 = vadd.xlane.f32.xlu0 %v1970
        %v1972 = vpop.xlane.xlu0 %1971
        %v1973 = vmul.f32 %v1972, %v678
        %v1974 = vadd.f32 %v1973, 1e-06
        %v1975 = vrsqrt.pop %v1974
        %v1976 = vmul.f32 %v1968, %v1975
        %v1978 = vlaneseq
        %v1979 = vshrl.u32 %v1978, 7
        %v1980 = vsub.s32 0, %v1979
        %v1981 = vrot.slane %v1962, %v1980
        %v1983 = vmul.f32 %v1976, %v1981
        %v1985 = vlaneseq
        %v1986 = vshrl.u32 %v1985, 7
        %v1987 = vsub.s32 0, %v1986
        %v1988 = vrot.slane %v1963, %v1987
        %v1990 = vadd.f32 %v1983, %v1988
        %v1991 = vpack.c.bf16 %v1990, %v1990
        %v1992 = vld [vmem:[%s11] sm:$0xf]
        %v1993 = vld [vmem:[%s11 + $0x4] sm:$0xf]
        %v1994 = vld [vmem:[%s11 + $0x8] sm:$0xf]
        %v1995 = vld [vmem:[%s11 + $0xc] sm:$0xf]
        %v1996 = vld [vmem:[%s12] sm:$0x1]
        %v1998 = vlaneseq
        %v1999 = vshrl.u32 %v1998, 7
        %v2000 = vsub.s32 0, %v1999
        %v2001 = vrot.slane %v1996, %v2000
        %v2007 = vunpack.c.l.b16 %v1992
        %v2008 = vunpack.c.l.b16 %v1993
        %v2009 = vunpack.c.l.b16 %v1994
        %v2010 = vunpack.c.l.b16 %v1995
        %v2011 = vpack.c.b16 %v2008, %v2007
        %v2012 = vpack.c.b16 %v2010, %v2009
        %v2016 = vsel %vm674, %v1991, 0
        %2018 = vmatprep.subr.bf16.mxu0 0
        %2019 = vmatpush1.bf16.msra.mxu0 %v2011
        %2020 = vmatprep.subr.bf16.mxu0 0
        %2021 = vmatpush1.bf16.msra.mxu0 %v2012
        %2022 = vmatprep.subr.bf16.mxu0 0
        %2023 = vmatpush1.bf16.msra.mxu0 0
        %2024 = vmatprep.subr.bf16.mxu0 0
        %2025 = vmatpush1.bf16.msra.mxu0 0
        %2026 = vmatprep.subr.bf16.mxu0 0
        %2027 = vmatpush1.bf16.msra.mxu0 0
        %2028 = vmatprep.subr.bf16.mxu0 0
        %2029 = vmatpush1.bf16.msra.mxu0 0
        %2030 = vmatprep.subr.bf16.mxu0 0
        %2031 = vmatpush1.bf16.msra.mxu0 0
        %2032 = vmatprep.subr.bf16.mxu0 0
        %2033 = vmatpush1.bf16.msra.mxu0 0
        %2034 = vmatprep.subr.bf16.mxu0 0
        %2035 = vmatpush1.bf16.msra.mxu0 0
        %2036 = vmatprep.subr.bf16.mxu0 0
        %2037 = vmatpush1.bf16.msra.mxu0 0
        %2038 = vmatprep.subr.bf16.mxu0 0
        %2039 = vmatpush1.bf16.msra.mxu0 0
        %2040 = vmatprep.subr.bf16.mxu0 0
        %2041 = vmatpush1.bf16.msra.mxu0 0
        %2042 = vmatprep.subr.bf16.mxu0 0
        %2043 = vmatpush1.bf16.msra.mxu0 0
        %2044 = vmatprep.subr.bf16.mxu0 0
        %2045 = vmatpush1.bf16.msra.mxu0 0
        %2046 = vmatprep.subr.bf16.mxu0 0
        %2047 = vmatpush1.bf16.msra.mxu0 0
        %2048 = vmatprep.subr.bf16.mxu0 0
        %2049 = vmatpush1.bf16.msra.mxu0 0
        %2050 = vmatprep.mubr.bf16.mxu0 0
        %2051 = vmatmul.mubr.bf16.gmra.mrb[0].mxu0 %v2016
        %v2052 = vpop.f32.mrb[0].mxu0
        %v2053 = vadd.f32 %v2001, %v2052
        %v2054 = vpop.f32.mrb[0].mxu0
        %v2055 = vpop.f32.mrb[0].mxu0
        %v2056 = vpop.f32.mrb[0].mxu0
        %2057 = vdwg.mxu0
        %v2058 = vmax.f32 %v2053, 0.0
        %v2059 = vpack.c.bf16 %v2058, %v2058
        %v2060 = vld [vmem:[%s13] sm:$0xf]
        %v2061 = vld [vmem:[%s13 + $0x4] sm:$0xf]
        %v2062 = vld [vmem:[%s13 + $0x8] sm:$0xf]
        %v2063 = vld [vmem:[%s13 + $0xc] sm:$0xf]
        %v2064 = vld [vmem:[%s13 + $0x10] sm:$0xf]
        %v2065 = vld [vmem:[%s13 + $0x14] sm:$0xf]
        %v2066 = vld [vmem:[%s13 + $0x18] sm:$0xf]
        %v2067 = vld [vmem:[%s13 + $0x1c] sm:$0xf]
        %v2068 = vld [vmem:[%s14] sm:$0x1]
        %v2070 = vlaneseq
        %v2071 = vshrl.u32 %v2070, 7
        %v2072 = vsub.s32 0, %v2071
        %v2073 = vrot.slane %v2068, %v2072
        %v2083 = vunpack.c.l.b16 %v2060
        %v2084 = vunpack.c.l.b16 %v2061
        %v2085 = vunpack.c.l.b16 %v2062
        %v2086 = vunpack.c.l.b16 %v2063
        %v2087 = vunpack.c.l.b16 %v2064
        %v2088 = vunpack.c.l.b16 %v2065
        %v2089 = vunpack.c.l.b16 %v2066
        %v2090 = vunpack.c.l.b16 %v2067
        %v2091 = vpack.c.b16 %v2084, %v2083
        %v2092 = vpack.c.b16 %v2086, %v2085
        %v2093 = vpack.c.b16 %v2088, %v2087
        %v2094 = vpack.c.b16 %v2090, %v2089
        %vm2099 = vcmask 523264
        %v2101 = vsel %vm2099, %v2059, 0
        %2103 = vmatprep.subr.bf16.mxu0 0
        %2104 = vmatpush1.bf16.msra.mxu0 %v2091
        %2105 = vmatprep.subr.bf16.mxu0 0
        %2106 = vmatpush1.bf16.msra.mxu0 %v2092
        %2107 = vmatprep.subr.bf16.mxu0 0
        %2108 = vmatpush1.bf16.msra.mxu0 %v2093
        %2109 = vmatprep.subr.bf16.mxu0 0
        %2110 = vmatpush1.bf16.msra.mxu0 %v2094
        %2111 = vmatprep.subr.bf16.mxu0 0
        %2112 = vmatpush1.bf16.msra.mxu0 0
        %2113 = vmatprep.subr.bf16.mxu0 0
        %2114 = vmatpush1.bf16.msra.mxu0 0
        %2115 = vmatprep.subr.bf16.mxu0 0
        %2116 = vmatpush1.bf16.msra.mxu0 0
        %2117 = vmatprep.subr.bf16.mxu0 0
        %2118 = vmatpush1.bf16.msra.mxu0 0
        %2119 = vmatprep.subr.bf16.mxu0 0
        %2120 = vmatpush1.bf16.msra.mxu0 0
        %2121 = vmatprep.subr.bf16.mxu0 0
        %2122 = vmatpush1.bf16.msra.mxu0 0
        %2123 = vmatprep.subr.bf16.mxu0 0
        %2124 = vmatpush1.bf16.msra.mxu0 0
        %2125 = vmatprep.subr.bf16.mxu0 0
        %2126 = vmatpush1.bf16.msra.mxu0 0
        %2127 = vmatprep.subr.bf16.mxu0 0
        %2128 = vmatpush1.bf16.msra.mxu0 0
        %2129 = vmatprep.subr.bf16.mxu0 0
        %2130 = vmatpush1.bf16.msra.mxu0 0
        %2131 = vmatprep.subr.bf16.mxu0 0
        %2132 = vmatpush1.bf16.msra.mxu0 0
        %2133 = vmatprep.subr.bf16.mxu0 0
        %2134 = vmatpush1.bf16.msra.mxu0 0
        %2135 = vmatprep.mubr.bf16.mxu0 0
        %2136 = vmatmul.mubr.bf16.gmra.mrb[0].mxu0 %v2101
        %v2137 = vpop.f32.mrb[0].mxu0
        %v2138 = vadd.f32 %v2073, %v2137
        %v2139 = vpop.f32.mrb[0].mxu0
        %v2140 = vpop.f32.mrb[0].mxu0
        %v2141 = vpop.f32.mrb[0].mxu0
        %2142 = vdwg.mxu0
        %v2143 = vadd.f32 %v1961, %v2138
        %2144 = vst.msk [vmem:[%s650] sm:$0xff] %vm674, %v2143
        %s2145 = sand.u32 %s460, 1
        %s2146 = scalar_lea.sflag [#allocation4], %s2145
        %s2147 = sand.u32 %s460, 1
        %s2148 = smul.addr %s2147, 8
        %s2149 = scalar_lea.vmem [#allocation3], %s2148
        %s2150 = sand.u32 %s486, 1
        %s2151 = scalar_lea.sflag [#allocation6], %s2150
        %s2152 = sand.u32 %s486, 1
        %s2153 = smul.addr %s2152, 64
        %s2154 = scalar_lea.vmem [#allocation5], %s2153
        // Predicated region
        $region97: #{run.1} parent=95 // pred_check
          %p2155 = pneg %p470
        $region98: #{run.1} parent=95 // pred_check_branch
          %2157 = sbr.rel (%p2155) target = $region100
        $region99: #{run.1} parent=95 // pred_region
          %s2159 = ssub.s32 128, 128
          %2160 = vsyncadd %s2146, %s2159
          %s2161 = smul.addr %s38, 128
          %s2162 = scalar_lea.hbm %s19, %s2161
          %s2164 = sshll.u32 %s2149, 4
          %s2165 = int_to_ptr.vmem [resolvable:$true] %s2164
          %2167 = dma.vmem_to_hbm [thread:$0]  %s2165, 128, %s2162, %s2146
        $region100: #{run.1} parent=95 // pred_fallthru
          _
        // Predicated region
        $region101: #{run.1} parent=95 // pred_check
          %p2168 = pneg %p496
        $region102: #{run.1} parent=95 // pred_check_branch
          %2170 = sbr.rel (%p2168) target = $region104
        $region103: #{run.1} parent=95 // pred_region
          %s2172 = ssub.s32 1024, 1024
          %2173 = vsyncadd %s2151, %s2172
          %s2174 = smul.addr %s38, 8
          %s2175 = smul.addr %s2174, 128
          %s2176 = scalar_lea.hbm %s20, %s2175
          %s2177 = sshll.u32 %s2154, 4
          %s2178 = int_to_ptr.vmem [resolvable:$true] %s2177
          %2183 = dma.vmem_to_hbm [thread:$0]  %s2178, 1024, %s2176, %s2151, 128, 128, 8
        $region104: #{run.1} parent=95 // pred_fallthru
          _
      $region96: #{run.1} parent=5 // pred_fallthru
        _
      %p2184 = scmp.le.s32.totalorder 2, %s33
      // Predicated region
      $region105: #{run.1} parent=5 // pred_check
        %p2185 = pneg %p2184
      $region106: #{run.1} parent=5 // pred_check_branch
        %2187 = sbr.rel (%p2185) target = $region108
      $region107: #{run.1} parent=5 // pred_region
        %s2188 = ssub.s32 %s33, 2
        // Predicated region
        $region109: #{run.1} parent=107 // pred_check
          %p2189 = pneg %p476
        $region110: #{run.1} parent=107 // pred_check_branch
          %2191 = sbr.rel (%p2189) target = $region112
        $region111: #{run.1} parent=107 // pred_region
          %s2192 = sand.u32 %s461, 1
          %s2193 = scalar_lea.sflag [#allocation4], %s2192
          %s2194 = sand.u32 %s461, 1
          %s2195 = smul.addr %s2194, 8
          %s2196 = scalar_lea.vmem [#allocation3], %s2195
          %2197 = dma.done %s2193, 128
        $region112: #{run.1} parent=107 // pred_fallthru
          _
        // Predicated region
        $region113: #{run.1} parent=107 // pred_check
          %p2198 = pneg %p502
        $region114: #{run.1} parent=107 // pred_check_branch
          %2200 = sbr.rel (%p2198) target = $region116
        $region115: #{run.1} parent=107 // pred_region
          %s2201 = sand.u32 %s487, 1
          %s2202 = scalar_lea.sflag [#allocation6], %s2201
          %s2203 = sand.u32 %s487, 1
          %s2204 = smul.addr %s2203, 64
          %s2205 = scalar_lea.vmem [#allocation5], %s2204
          %2206 = dma.done %s2202, 1024
        $region116: #{run.1} parent=107 // pred_fallthru
          _
      $region108: #{run.1} parent=5 // pred_fallthru
        _
    $region6: #{run.1} parent=1 // loop_footer
      %s37 = sadd.s32 1, %s33
    $region7: #{run.1} parent=1 // loop_footer_branch
      %32 = sbr.rel target = $region3
    $region8: #{run.1} parent=1 // loop_exit
      _
    %2207 = vsyncpa [#allocation4], 1
    %s2208 = scalar_lea.sflag [#allocation4], 1
    %2209 = vsyncpa %s2208, 1
    %2210 = vsyncpa [#allocation6], 1
    %s2211 = scalar_lea.sflag [#allocation6], 1
    %2212 = vsyncpa %s2211, 1

</llo_original>
